<compile_context>
chip_gen: v6e
topology: v6e:2x2x1
jax: 0.10.0
libtpu: 0.0.40
codegen_flags: <defaults>
</compile_context>

<pallas_src>
import functools
import math

import jax
import jax.numpy as jnp
import numpy as np
from jax.experimental import pallas as pl
from jax.experimental.pallas import tpu as pltpu


def _make_conv_kernel(KH, KW, sh, dh, OH, OW, cin_g, cout_g, has_bias):
    """Builds the fused direct-conv kernel for one (batch, group) program.

    x_ref: (KW*sh, Hph, OW, cin_g)  width-gathered, height-phased input
    w_ref: (KH*KW, cin_g, cout_g)
    b_ref: (1, cout_g)              (only when has_bias)
    o_ref: (OH, OW, cout_g)
    """

    def kernel(x_ref, w_ref, *rest):
        if has_bias:
            b_ref, o_ref = rest
        else:
            (o_ref,) = rest

        acc = jnp.zeros((OH, OW, cout_g), jnp.float32)
        for kh in range(KH):
            phase = (kh * dh) % sh          # which height-phase plane
            qh = (kh * dh) // sh            # row offset inside that plane
            for kw in range(KW):
                # Contiguous slices only: plane index and row offset are static,
                # trailing dims are full -> no relayout / masked loads.
                patch = x_ref[kw * sh + phase, qh:qh + OH, :, :]   # (OH, OW, cin_g)
                wk = w_ref[kh * KW + kw]                            # (cin_g, cout_g)
                wb = jnp.broadcast_to(wk, (OH, cin_g, cout_g))
                # Batched matmul over OH (same pattern as the reference flash kernel):
                # MXU contraction over cin_g, f32 accumulation.
                acc = acc + jnp.einsum(
                    "hwc,hcn->hwn", patch, wb,
                    preferred_element_type=jnp.float32)

        if has_bias:
            acc = acc + b_ref[...].astype(jnp.float32)   # (1, cout_g) broadcasts
        o_ref[...] = acc.astype(o_ref.dtype)

    return kernel


@functools.partial(
    jax.jit,
    static_argnames=("stride", "padding", "dilation", "groups", "compute_dtype"),
)
def conv2d_pallas_nhwc(x, weight, bias, *, stride, padding, dilation, groups,
                       compute_dtype=jnp.bfloat16):
    """Single torch.nn.Conv2d forward (padding_mode='zeros') on NHWC activations.

    x:      (N, H, W, Cin)               NHWC
    weight: (Cout, Cin//groups, KH, KW)  PyTorch OIHW
    bias:   (Cout,) or None
    returns (N, OH, OW, Cout)            NHWC, same dtype as x
    """
    N, H, W, Cin = x.shape
    Cout, Cin_g, KH, KW = weight.shape
    sh, sw = stride
    ph, pw = padding
    dh, dw = dilation
    G = groups
    Cout_g = Cout // G
    OH = (H + 2 * ph - dh * (KH - 1) - 1) // sh + 1
    OW = (W + 2 * pw - dw * (KW - 1) - 1) // sw + 1
    out_dtype = x.dtype

    # MXU operand dtype (f32 accumulation happens inside the kernel).
    xc = x.astype(compute_dtype)
    wc = weight.astype(compute_dtype)

    # Zero padding (padding_mode='zeros'); pad the bottom just far enough that the
    # height-phase reshape below is exact (extra rows are never read).
    Hph = OH + ((KH - 1) * dh) // sh                 # rows per height-phase plane
    pad_bottom = max(0, sh * Hph - H - ph)
    x_pad = jnp.pad(xc, ((0, 0), (ph, pad_bottom), (pw, pw), (0, 0)))
    x_pad = x_pad[:, :sh * Hph]

    # Width gather: for every kw keep only the OW columns the output needs
    # (~KW/sw x input bytes instead of KH*KW/(sh*sw) x for a full im2col).
    cols = [
        x_pad[:, :, kw * dw: kw * dw + (OW - 1) * sw + 1: sw, :]   # (N, sh*Hph, OW, Cin)
        for kw in range(KW)
    ]
    xg = jnp.stack(cols, axis=1)                                   # (N, KW, sh*Hph, OW, Cin)
    # Height phases: input row ih = r*sh + p  ->  split into (r, p).
    xg = xg.reshape(N, KW, Hph, sh, OW, G, Cin_g)
    xg = xg.transpose(0, 5, 1, 3, 2, 4, 6)                         # (N, G, KW, sh, Hph, OW, Cin_g)
    xg = xg.reshape(N, G, KW * sh, Hph, OW, Cin_g)

    # Weight -> (G, KH*KW, Cin_g, Cout_g); kh major, kw minor to match the kernel.
    wg = wc.reshape(G, Cout_g, Cin_g, KH, KW).transpose(0, 3, 4, 2, 1)
    wg = wg.reshape(G, KH * KW, Cin_g, Cout_g)

    has_bias = bias is not None
    kernel = _make_conv_kernel(KH, KW, sh, dh, OH, OW, Cin_g, Cout_g, has_bias)

    in_specs = [
        # Whole width-gathered / height-phased image for this (batch, group).
        pl.BlockSpec((None, None, KW * sh, Hph, OW, Cin_g),
                     lambda n, g: (n, g, 0, 0, 0, 0)),
        pl.BlockSpec((None, KH * KW, Cin_g, Cout_g), lambda n, g: (g, 0, 0, 0)),
    ]
    operands = [xg, wg]
    if has_bias:
        in_specs.append(pl.BlockSpec((None, 1, Cout_g), lambda n, g: (g, 0, 0)))
        operands.append(bias.astype(jnp.float32).reshape(G, 1, Cout_g))

    flops = 2 * N * G * OH * OW * KH * KW * Cin_g * Cout_g
    bytes_accessed = (
        xg.size * xg.dtype.itemsize
        + wg.size * wg.dtype.itemsize
        + N * G * OH * OW * Cout_g * np.dtype(out_dtype).itemsize
    )

    out = pl.pallas_call(
        kernel,
        out_shape=jax.ShapeDtypeStruct((N, G, OH, OW, Cout_g), out_dtype),
        grid=(N, G),
        in_specs=in_specs,
        out_specs=pl.BlockSpec((None, None, OH, OW, Cout_g),
                               lambda n, g: (n, g, 0, 0, 0)),
        compiler_params=pltpu.CompilerParams(
            dimension_semantics=("parallel", "parallel"),
        ),
        cost_estimate=pl.CostEstimate(
            flops=flops, transcendentals=0, bytes_accessed=bytes_accessed),
    )(*operands)

    # Free reshape for groups == 1; tiny channel interleave otherwise.
    out = out.transpose(0, 2, 3, 1, 4).reshape(N, OH, OW, Cout)
    return out


class Conv2dPallas:
    """JAX/Pallas analog of the test Conv2d module: one or many chained 2D convs.

    Activations stay NHWC between chained convs; the NCHW interface conversion
    happens once at the model boundary (matching the PyTorch module's NCHW API).
    """

    def __init__(
        self,
        key,
        nbr_conv=1,
        in_channels=None,
        out_channels=None,
        kernel_size=None,
        stride=None,
        padding=None,
        dilation=None,
        groups=None,
        bias=None,
        dtype=jnp.float32,
        compute_dtype=jnp.bfloat16,   # MXU operand dtype; accumulation is always f32
    ):
        self.nbr_convs = nbr_conv
        self.compute_dtype = compute_dtype
        in_channels = [2] * nbr_conv if in_channels is None else list(in_channels)
        out_channels = [1 * nbr_conv] if out_channels is None else list(out_channels)
        kernel_size = [(3, 3)] * nbr_conv if kernel_size is None else list(kernel_size)
        stride = [(2, 2)] * nbr_conv if stride is None else list(stride)
        padding = [(1, 1)] * nbr_conv if padding is None else list(padding)
        dilation = [(1, 1)] * nbr_conv if dilation is None else list(dilation)
        groups = [1] * nbr_conv if groups is None else list(groups)
        bias = [True] * nbr_conv if bias is None else list(bias)

        self.params = []
        self.cfg = []
        for i in range(nbr_conv):
            cin, cout = in_channels[i], out_channels[i]
            kh, kw = kernel_size[i]
            g = groups[i]
            fan_in = (cin // g) * kh * kw
            bound = 1.0 / math.sqrt(fan_in)  # matches torch's default init bound
            key, wk, bk = jax.random.split(key, 3)
            w = jax.random.uniform(
                wk, (cout, cin // g, kh, kw), dtype=dtype, minval=-bound, maxval=bound
            )
            b = (
                jax.random.uniform(bk, (cout,), dtype=dtype, minval=-bound, maxval=bound)
                if bias[i]
                else None
            )
            self.params.append((w, b))
            self.cfg.append((tuple(stride[i]), tuple(padding[i]),
                             tuple(dilation[i]), int(g)))
        # TODO(synk): only padding_mode='zeros' (the module default) is implemented.

    def __call__(self, x):
        # NCHW -> NHWC once, run the whole chain in NHWC, convert back once.
        x = jnp.transpose(x, (0, 2, 3, 1))
        for i in range(self.nbr_convs):
            w, b = self.params[i]
            s, p, d, g = self.cfg[i]
            x = conv2d_pallas_nhwc(
                x, w, b,
                stride=s, padding=p, dilation=d, groups=g,
                compute_dtype=self.compute_dtype,
            )
        return jnp.transpose(x, (0, 3, 1, 2))


def _reference_conv(x, weight, bias, stride, padding, dilation, groups):
    out = jax.lax.conv_general_dilated(
        x,
        weight,
        window_strides=stride,
        padding=[(padding[0], padding[0]), (padding[1], padding[1])],
        rhs_dilation=dilation,
        feature_group_count=groups,
        dimension_numbers=("NCHW", "OIHW", "NCHW"),
    )
    if bias is not None:
        out = out + bias.reshape(1, -1, 1, 1)
    return out


if __name__ == "__main__":
    key = jax.random.PRNGKey(0)
    key, xk = jax.random.split(key)

    # Small shapes consistent with the module's forward (NCHW input).
    batches, cin, height, width = 2, 4, 16, 16
    x = jax.random.normal(xk, (batches, cin, height, width), dtype=jnp.float32)

    # --- Test 1: single 3x3 conv, stride 2, pad 1 (default-ish config), f32 exact. ---
    cout = 8
    key, k1 = jax.random.split(key)
    model = Conv2dPallas(
        k1, nbr_conv=1, in_channels=[cin], out_channels=[cout],
        kernel_size=[(3, 3)], stride=[(2, 2)], padding=[(1, 1)],
        dilation=[(1, 1)], groups=[1], bias=[True],
        compute_dtype=jnp.float32,
    )
    out = jax.block_until_ready(model(x))
    w, b = model.params[0]
    s, p, d, g = model.cfg[0]
    ref = jax.block_until_ready(_reference_conv(x, w, b, s, p, d, g))
    assert out.shape == ref.shape == (batches, cout, height // 2, width // 2)
    np.testing.assert_allclose(np.asarray(out), np.asarray(ref), rtol=1e-5, atol=1e-5)

    # --- Test 2: grouped conv, stride 1 (groups handled by the grid), f32 exact. ---
    key, k2 = jax.random.split(key)
    model2 = Conv2dPallas(
        k2, nbr_conv=1, in_channels=[cin], out_channels=[4],
        kernel_size=[(3, 3)], stride=[(1, 1)], padding=[(1, 1)],
        dilation=[(1, 1)], groups=[2], bias=[True],
        compute_dtype=jnp.float32,
    )
    out2 = jax.block_until_ready(model2(x))
    w2, b2 = model2.params[0]
    s2, p2, d2, g2 = model2.cfg[0]
    ref2 = jax.block_until_ready(_reference_conv(x, w2, b2, s2, p2, d2, g2))
    np.testing.assert_allclose(np.asarray(out2), np.asarray(ref2), rtol=1e-5, atol=1e-5)

    # --- Test 3: chained convs (activation stays NHWC between layers), f32. ---
    key, k3 = jax.random.split(key)
    model3 = Conv2dPallas(
        k3, nbr_conv=2, in_channels=[4, 8], out_channels=[8, 6],
        kernel_size=[(3, 3), (3, 3)], stride=[(2, 2), (1, 1)],
        padding=[(1, 1), (1, 1)], dilation=[(1, 1), (1, 1)],
        groups=[1, 1], bias=[True, False],
        compute_dtype=jnp.float32,
    )
    out3 = jax.block_until_ready(model3(x))
    ref3 = x
    for i in range(2):
        wi, bi = model3.params[i]
        si, pi, di, gi = model3.cfg[i]
        ref3 = _reference_conv(ref3, wi, bi, si, pi, di, gi)
    ref3 = jax.block_until_ready(ref3)
    np.testing.assert_allclose(np.asarray(out3), np.asarray(ref3), rtol=1e-4, atol=1e-4)

    # --- Test 4: default bf16 MXU operands with f32 accumulation (perf config). ---
    key, k4 = jax.random.split(key)
    model4 = Conv2dPallas(
        k4, nbr_conv=1, in_channels=[cin], out_channels=[cout],
        kernel_size=[(3, 3)], stride=[(2, 2)], padding=[(1, 1)],
        dilation=[(1, 1)], groups=[1], bias=[True],
    )  # compute_dtype defaults to bfloat16
    out4 = jax.block_until_ready(model4(x))
    w4, b4 = model4.params[0]
    s4, p4, d4, g4 = model4.cfg[0]
    x_bf = x.astype(jnp.bfloat16).astype(jnp.float32)
    w_bf = w4.astype(jnp.bfloat16).astype(jnp.float32)
    ref4 = jax.block_until_ready(_reference_conv(x_bf, w_bf, b4, s4, p4, d4, g4))
    np.testing.assert_allclose(np.asarray(out4), np.asarray(ref4), rtol=2e-2, atol=2e-2)

    print("KERNEL_OK")
</pallas_src>

<mosaic_0001>
module attributes {stable_mosaic.version = 11 : i64} {
  func.func @kernel(%arg0: i32, %arg1: i32, %arg2: memref<1x1x6x9x8x4xf32, #tpu.memory_space<vmem>>, %arg3: memref<1x9x4x8xf32, #tpu.memory_space<vmem>>, %arg4: memref<1x1x8xf32, #tpu.memory_space<vmem>>, %arg5: memref<1x1x8x8x8xf32, #tpu.memory_space<vmem>>) attributes {dimension_semantics = [#tpu.dimension_semantics<parallel>, #tpu.dimension_semantics<parallel>], iteration_bounds = array<i64: 2, 1>, scalar_prefetch = 0 : i64, scratch_operands = 0 : i64, tpu.core_type = #tpu.core_type<tc>, window_params = [{transform_indices = @transform_0, window_bounds = array<i64: 1, 1, 6, 9, 8, 4>}, {transform_indices = @transform_1, window_bounds = array<i64: 1, 9, 4, 8>}, {transform_indices = @transform_2, window_bounds = array<i64: 1, 1, 8>}, {transform_indices = @transform_3, window_bounds = array<i64: 1, 1, 8, 8, 8>}]} {
    %cst = arith.constant 0.000000e+00 : f32
    %0 = vector.broadcast %cst : f32 to vector<8x8x8xf32>
    %c0 = arith.constant 0 : index
    %c0_0 = arith.constant 0 : index
    %c0_1 = arith.constant 0 : index
    %c0_2 = arith.constant 0 : index
    %c0_3 = arith.constant 0 : index
    %c0_4 = arith.constant 0 : index
    %1 = vector.load %arg2[%c0, %c0_0, %c0_1, %c0_2, %c0_3, %c0_4] : memref<1x1x6x9x8x4xf32, #tpu.memory_space<vmem>>, vector<1x1x1x8x8x4xf32>
    %2 = vector.shape_cast %1 : vector<1x1x1x8x8x4xf32> to vector<8x8x4xf32>
    %c0_5 = arith.constant 0 : index
    %c0_6 = arith.constant 0 : index
    %c0_7 = arith.constant 0 : index
    %c0_8 = arith.constant 0 : index
    %3 = vector.load %arg3[%c0_5, %c0_6, %c0_7, %c0_8] : memref<1x9x4x8xf32, #tpu.memory_space<vmem>>, vector<1x1x4x8xf32>
    %4 = vector.shape_cast %3 : vector<1x1x4x8xf32> to vector<4x8xf32>
    %5 = vector.shape_cast %4 : vector<4x8xf32> to vector<1x4x8xf32>
    %6 = vector.broadcast %5 : vector<1x4x8xf32> to vector<8x4x8xf32>
    "tpu.trace_start"() <{level = 10 : i32, message = "hwc,hcn->hwn"}> : () -> ()
    %cst_9 = arith.constant dense<0.000000e+00> : vector<8x8x8xf32>
    %7 = tpu.matmul %2, %6, %cst_9 {dimension_numbers = #tpu.dot_dimension_numbers<[2], [1], [1], [2], [0, 0, 0, 1, 1, 2], [0], [0]>} : vector<8x8x4xf32>, vector<8x4x8xf32>, vector<8x8x8xf32> -> vector<8x8x8xf32>
    "tpu.trace_stop"() : () -> ()
    %8 = arith.addf %0, %7 : vector<8x8x8xf32>
    %c0_10 = arith.constant 0 : index
    %c0_11 = arith.constant 0 : index
    %c2 = arith.constant 2 : index
    %c0_12 = arith.constant 0 : index
    %c0_13 = arith.constant 0 : index
    %c0_14 = arith.constant 0 : index
    %9 = vector.load %arg2[%c0_10, %c0_11, %c2, %c0_12, %c0_13, %c0_14] : memref<1x1x6x9x8x4xf32, #tpu.memory_space<vmem>>, vector<1x1x1x8x8x4xf32>
    %10 = vector.shape_cast %9 : vector<1x1x1x8x8x4xf32> to vector<8x8x4xf32>
    %c0_15 = arith.constant 0 : index
    %c1 = arith.constant 1 : index
    %c0_16 = arith.constant 0 : index
    %c0_17 = arith.constant 0 : index
    %11 = vector.load %arg3[%c0_15, %c1, %c0_16, %c0_17] : memref<1x9x4x8xf32, #tpu.memory_space<vmem>>, vector<1x1x4x8xf32>
    %12 = vector.shape_cast %11 : vector<1x1x4x8xf32> to vector<4x8xf32>
    %13 = vector.shape_cast %12 : vector<4x8xf32> to vector<1x4x8xf32>
    %14 = vector.broadcast %13 : vector<1x4x8xf32> to vector<8x4x8xf32>
    "tpu.trace_start"() <{level = 10 : i32, message = "hwc,hcn->hwn"}> : () -> ()
    %cst_18 = arith.constant dense<0.000000e+00> : vector<8x8x8xf32>
    %15 = tpu.matmul %10, %14, %cst_18 {dimension_numbers = #tpu.dot_dimension_numbers<[2], [1], [1], [2], [0, 0, 0, 1, 1, 2], [0], [0]>} : vector<8x8x4xf32>, vector<8x4x8xf32>, vector<8x8x8xf32> -> vector<8x8x8xf32>
    "tpu.trace_stop"() : () -> ()
    %16 = arith.addf %8, %15 : vector<8x8x8xf32>
    %c0_19 = arith.constant 0 : index
    %c0_20 = arith.constant 0 : index
    %c4 = arith.constant 4 : index
    %c0_21 = arith.constant 0 : index
    %c0_22 = arith.constant 0 : index
    %c0_23 = arith.constant 0 : index
    %17 = vector.load %arg2[%c0_19, %c0_20, %c4, %c0_21, %c0_22, %c0_23] : memref<1x1x6x9x8x4xf32, #tpu.memory_space<vmem>>, vector<1x1x1x8x8x4xf32>
    %18 = vector.shape_cast %17 : vector<1x1x1x8x8x4xf32> to vector<8x8x4xf32>
    %c0_24 = arith.constant 0 : index
    %c2_25 = arith.constant 2 : index
    %c0_26 = arith.constant 0 : index
    %c0_27 = arith.constant 0 : index
    %19 = vector.load %arg3[%c0_24, %c2_25, %c0_26, %c0_27] : memref<1x9x4x8xf32, #tpu.memory_space<vmem>>, vector<1x1x4x8xf32>
    %20 = vector.shape_cast %19 : vector<1x1x4x8xf32> to vector<4x8xf32>
    %21 = vector.shape_cast %20 : vector<4x8xf32> to vector<1x4x8xf32>
    %22 = vector.broadcast %21 : vector<1x4x8xf32> to vector<8x4x8xf32>
    "tpu.trace_start"() <{level = 10 : i32, message = "hwc,hcn->hwn"}> : () -> ()
    %cst_28 = arith.constant dense<0.000000e+00> : vector<8x8x8xf32>
    %23 = tpu.matmul %18, %22, %cst_28 {dimension_numbers = #tpu.dot_dimension_numbers<[2], [1], [1], [2], [0, 0, 0, 1, 1, 2], [0], [0]>} : vector<8x8x4xf32>, vector<8x4x8xf32>, vector<8x8x8xf32> -> vector<8x8x8xf32>
    "tpu.trace_stop"() : () -> ()
    %24 = arith.addf %16, %23 : vector<8x8x8xf32>
    %c0_29 = arith.constant 0 : index
    %c0_30 = arith.constant 0 : index
    %c1_31 = arith.constant 1 : index
    %c0_32 = arith.constant 0 : index
    %c0_33 = arith.constant 0 : index
    %c0_34 = arith.constant 0 : index
    %25 = vector.load %arg2[%c0_29, %c0_30, %c1_31, %c0_32, %c0_33, %c0_34] : memref<1x1x6x9x8x4xf32, #tpu.memory_space<vmem>>, vector<1x1x1x8x8x4xf32>
    %26 = vector.shape_cast %25 : vector<1x1x1x8x8x4xf32> to vector<8x8x4xf32>
    %c0_35 = arith.constant 0 : index
    %c3 = arith.constant 3 : index
    %c0_36 = arith.constant 0 : index
    %c0_37 = arith.constant 0 : index
    %27 = vector.load %arg3[%c0_35, %c3, %c0_36, %c0_37] : memref<1x9x4x8xf32, #tpu.memory_space<vmem>>, vector<1x1x4x8xf32>
    %28 = vector.shape_cast %27 : vector<1x1x4x8xf32> to vector<4x8xf32>
    %29 = vector.shape_cast %28 : vector<4x8xf32> to vector<1x4x8xf32>
    %30 = vector.broadcast %29 : vector<1x4x8xf32> to vector<8x4x8xf32>
    "tpu.trace_start"() <{level = 10 : i32, message = "hwc,hcn->hwn"}> : () -> ()
    %cst_38 = arith.constant dense<0.000000e+00> : vector<8x8x8xf32>
    %31 = tpu.matmul %26, %30, %cst_38 {dimension_numbers = #tpu.dot_dimension_numbers<[2], [1], [1], [2], [0, 0, 0, 1, 1, 2], [0], [0]>} : vector<8x8x4xf32>, vector<8x4x8xf32>, vector<8x8x8xf32> -> vector<8x8x8xf32>
    "tpu.trace_stop"() : () -> ()
    %32 = arith.addf %24, %31 : vector<8x8x8xf32>
    %c0_39 = arith.constant 0 : index
    %c0_40 = arith.constant 0 : index
    %c3_41 = arith.constant 3 : index
    %c0_42 = arith.constant 0 : index
    %c0_43 = arith.constant 0 : index
    %c0_44 = arith.constant 0 : index
    %33 = vector.load %arg2[%c0_39, %c0_40, %c3_41, %c0_42, %c0_43, %c0_44] : memref<1x1x6x9x8x4xf32, #tpu.memory_space<vmem>>, vector<1x1x1x8x8x4xf32>
    %34 = vector.shape_cast %33 : vector<1x1x1x8x8x4xf32> to vector<8x8x4xf32>
    %c0_45 = arith.constant 0 : index
    %c4_46 = arith.constant 4 : index
    %c0_47 = arith.constant 0 : index
    %c0_48 = arith.constant 0 : index
    %35 = vector.load %arg3[%c0_45, %c4_46, %c0_47, %c0_48] : memref<1x9x4x8xf32, #tpu.memory_space<vmem>>, vector<1x1x4x8xf32>
    %36 = vector.shape_cast %35 : vector<1x1x4x8xf32> to vector<4x8xf32>
    %37 = vector.shape_cast %36 : vector<4x8xf32> to vector<1x4x8xf32>
    %38 = vector.broadcast %37 : vector<1x4x8xf32> to vector<8x4x8xf32>
    "tpu.trace_start"() <{level = 10 : i32, message = "hwc,hcn->hwn"}> : () -> ()
    %cst_49 = arith.constant dense<0.000000e+00> : vector<8x8x8xf32>
    %39 = tpu.matmul %34, %38, %cst_49 {dimension_numbers = #tpu.dot_dimension_numbers<[2], [1], [1], [2], [0, 0, 0, 1, 1, 2], [0], [0]>} : vector<8x8x4xf32>, vector<8x4x8xf32>, vector<8x8x8xf32> -> vector<8x8x8xf32>
    "tpu.trace_stop"() : () -> ()
    %40 = arith.addf %32, %39 : vector<8x8x8xf32>
    %c0_50 = arith.constant 0 : index
    %c0_51 = arith.constant 0 : index
    %c5 = arith.constant 5 : index
    %c0_52 = arith.constant 0 : index
    %c0_53 = arith.constant 0 : index
    %c0_54 = arith.constant 0 : index
    %41 = vector.load %arg2[%c0_50, %c0_51, %c5, %c0_52, %c0_53, %c0_54] : memref<1x1x6x9x8x4xf32, #tpu.memory_space<vmem>>, vector<1x1x1x8x8x4xf32>
    %42 = vector.shape_cast %41 : vector<1x1x1x8x8x4xf32> to vector<8x8x4xf32>
    %c0_55 = arith.constant 0 : index
    %c5_56 = arith.constant 5 : index
    %c0_57 = arith.constant 0 : index
    %c0_58 = arith.constant 0 : index
    %43 = vector.load %arg3[%c0_55, %c5_56, %c0_57, %c0_58] : memref<1x9x4x8xf32, #tpu.memory_space<vmem>>, vector<1x1x4x8xf32>
    %44 = vector.shape_cast %43 : vector<1x1x4x8xf32> to vector<4x8xf32>
    %45 = vector.shape_cast %44 : vector<4x8xf32> to vector<1x4x8xf32>
    %46 = vector.broadcast %45 : vector<1x4x8xf32> to vector<8x4x8xf32>
    "tpu.trace_start"() <{level = 10 : i32, message = "hwc,hcn->hwn"}> : () -> ()
    %cst_59 = arith.constant dense<0.000000e+00> : vector<8x8x8xf32>
    %47 = tpu.matmul %42, %46, %cst_59 {dimension_numbers = #tpu.dot_dimension_numbers<[2], [1], [1], [2], [0, 0, 0, 1, 1, 2], [0], [0]>} : vector<8x8x4xf32>, vector<8x4x8xf32>, vector<8x8x8xf32> -> vector<8x8x8xf32>
    "tpu.trace_stop"() : () -> ()
    %48 = arith.addf %40, %47 : vector<8x8x8xf32>
    %c0_60 = arith.constant 0 : index
    %c0_61 = arith.constant 0 : index
    %c0_62 = arith.constant 0 : index
    %c1_63 = arith.constant 1 : index
    %c0_64 = arith.constant 0 : index
    %c0_65 = arith.constant 0 : index
    %49 = vector.load %arg2[%c0_60, %c0_61, %c0_62, %c1_63, %c0_64, %c0_65] : memref<1x1x6x9x8x4xf32, #tpu.memory_space<vmem>>, vector<1x1x1x8x8x4xf32>
    %50 = vector.shape_cast %49 : vector<1x1x1x8x8x4xf32> to vector<8x8x4xf32>
    %c0_66 = arith.constant 0 : index
    %c6 = arith.constant 6 : index
    %c0_67 = arith.constant 0 : index
    %c0_68 = arith.constant 0 : index
    %51 = vector.load %arg3[%c0_66, %c6, %c0_67, %c0_68] : memref<1x9x4x8xf32, #tpu.memory_space<vmem>>, vector<1x1x4x8xf32>
    %52 = vector.shape_cast %51 : vector<1x1x4x8xf32> to vector<4x8xf32>
    %53 = vector.shape_cast %52 : vector<4x8xf32> to vector<1x4x8xf32>
    %54 = vector.broadcast %53 : vector<1x4x8xf32> to vector<8x4x8xf32>
    "tpu.trace_start"() <{level = 10 : i32, message = "hwc,hcn->hwn"}> : () -> ()
    %cst_69 = arith.constant dense<0.000000e+00> : vector<8x8x8xf32>
    %55 = tpu.matmul %50, %54, %cst_69 {dimension_numbers = #tpu.dot_dimension_numbers<[2], [1], [1], [2], [0, 0, 0, 1, 1, 2], [0], [0]>} : vector<8x8x4xf32>, vector<8x4x8xf32>, vector<8x8x8xf32> -> vector<8x8x8xf32>
    "tpu.trace_stop"() : () -> ()
    %56 = arith.addf %48, %55 : vector<8x8x8xf32>
    %c0_70 = arith.constant 0 : index
    %c0_71 = arith.constant 0 : index
    %c2_72 = arith.constant 2 : index
    %c1_73 = arith.constant 1 : index
    %c0_74 = arith.constant 0 : index
    %c0_75 = arith.constant 0 : index
    %57 = vector.load %arg2[%c0_70, %c0_71, %c2_72, %c1_73, %c0_74, %c0_75] : memref<1x1x6x9x8x4xf32, #tpu.memory_space<vmem>>, vector<1x1x1x8x8x4xf32>
    %58 = vector.shape_cast %57 : vector<1x1x1x8x8x4xf32> to vector<8x8x4xf32>
    %c0_76 = arith.constant 0 : index
    %c7 = arith.constant 7 : index
    %c0_77 = arith.constant 0 : index
    %c0_78 = arith.constant 0 : index
    %59 = vector.load %arg3[%c0_76, %c7, %c0_77, %c0_78] : memref<1x9x4x8xf32, #tpu.memory_space<vmem>>, vector<1x1x4x8xf32>
    %60 = vector.shape_cast %59 : vector<1x1x4x8xf32> to vector<4x8xf32>
    %61 = vector.shape_cast %60 : vector<4x8xf32> to vector<1x4x8xf32>
    %62 = vector.broadcast %61 : vector<1x4x8xf32> to vector<8x4x8xf32>
    "tpu.trace_start"() <{level = 10 : i32, message = "hwc,hcn->hwn"}> : () -> ()
    %cst_79 = arith.constant dense<0.000000e+00> : vector<8x8x8xf32>
    %63 = tpu.matmul %58, %62, %cst_79 {dimension_numbers = #tpu.dot_dimension_numbers<[2], [1], [1], [2], [0, 0, 0, 1, 1, 2], [0], [0]>} : vector<8x8x4xf32>, vector<8x4x8xf32>, vector<8x8x8xf32> -> vector<8x8x8xf32>
    "tpu.trace_stop"() : () -> ()
    %64 = arith.addf %56, %63 : vector<8x8x8xf32>
    %c0_80 = arith.constant 0 : index
    %c0_81 = arith.constant 0 : index
    %c4_82 = arith.constant 4 : index
    %c1_83 = arith.constant 1 : index
    %c0_84 = arith.constant 0 : index
    %c0_85 = arith.constant 0 : index
    %65 = vector.load %arg2[%c0_80, %c0_81, %c4_82, %c1_83, %c0_84, %c0_85] : memref<1x1x6x9x8x4xf32, #tpu.memory_space<vmem>>, vector<1x1x1x8x8x4xf32>
    %66 = vector.shape_cast %65 : vector<1x1x1x8x8x4xf32> to vector<8x8x4xf32>
    %c0_86 = arith.constant 0 : index
    %c8 = arith.constant 8 : index
    %c0_87 = arith.constant 0 : index
    %c0_88 = arith.constant 0 : index
    %67 = vector.load %arg3[%c0_86, %c8, %c0_87, %c0_88] : memref<1x9x4x8xf32, #tpu.memory_space<vmem>>, vector<1x1x4x8xf32>
    %68 = vector.shape_cast %67 : vector<1x1x4x8xf32> to vector<4x8xf32>
    %69 = vector.shape_cast %68 : vector<4x8xf32> to vector<1x4x8xf32>
    %70 = vector.broadcast %69 : vector<1x4x8xf32> to vector<8x4x8xf32>
    "tpu.trace_start"() <{level = 10 : i32, message = "hwc,hcn->hwn"}> : () -> ()
    %cst_89 = arith.constant dense<0.000000e+00> : vector<8x8x8xf32>
    %71 = tpu.matmul %66, %70, %cst_89 {dimension_numbers = #tpu.dot_dimension_numbers<[2], [1], [1], [2], [0, 0, 0, 1, 1, 2], [0], [0]>} : vector<8x8x4xf32>, vector<8x4x8xf32>, vector<8x8x8xf32> -> vector<8x8x8xf32>
    "tpu.trace_stop"() : () -> ()
    %72 = arith.addf %64, %71 : vector<8x8x8xf32>
    %c0_90 = arith.constant 0 : index
    %c0_91 = arith.constant 0 : index
    %c0_92 = arith.constant 0 : index
    %73 = vector.load %arg4[%c0_90, %c0_91, %c0_92] : memref<1x1x8xf32, #tpu.memory_space<vmem>>, vector<1x1x8xf32>
    %74 = vector.shape_cast %73 : vector<1x1x8xf32> to vector<1x8xf32>
    %75 = vector.shape_cast %74 : vector<1x8xf32> to vector<1x1x8xf32>
    %76 = vector.broadcast %75 : vector<1x1x8xf32> to vector<8x8x8xf32>
    %77 = arith.addf %72, %76 : vector<8x8x8xf32>
    %c0_93 = arith.constant 0 : index
    %c0_94 = arith.constant 0 : index
    %c0_95 = arith.constant 0 : index
    %c0_96 = arith.constant 0 : index
    %c0_97 = arith.constant 0 : index
    %78 = vector.load %arg5[%c0_93, %c0_94, %c0_95, %c0_96, %c0_97] : memref<1x1x8x8x8xf32, #tpu.memory_space<vmem>>, vector<1x1x8x8x8xf32>
    %79 = vector.shape_cast %78 : vector<1x1x8x8x8xf32> to vector<8x8x8xf32>
    %80 = vector.shape_cast %77 : vector<8x8x8xf32> to vector<1x1x8x8x8xf32>
    tpu.vector_store %arg5[%c0_93, %c0_94, %c0_95, %c0_96, %c0_97], %80 {strides = array<i32>} : memref<1x1x8x8x8xf32, #tpu.memory_space<vmem>>, vector<1x1x8x8x8xf32>,
    return
  }
  func.func @transform_0(%arg0: i32, %arg1: i32) -> (i32, i32, i32, i32, i32, i32) {
    %c0_i32 = arith.constant 0 : i32
    %c0_i32_0 = arith.constant 0 : i32
    %c0_i32_1 = arith.constant 0 : i32
    %c0_i32_2 = arith.constant 0 : i32
    %c0_i32_3 = arith.constant 0 : i32
    return %arg0, %arg1, %c0_i32, %c0_i32_0, %c0_i32_1, %c0_i32_2 : i32, i32, i32, i32, i32, i32
  }
  func.func @transform_1(%arg0: i32, %arg1: i32) -> (i32, i32, i32, i32) {
    %c0_i32 = arith.constant 0 : i32
    %c0_i32_0 = arith.constant 0 : i32
    %c0_i32_1 = arith.constant 0 : i32
    %c0_i32_2 = arith.constant 0 : i32
    return %arg1, %c0_i32, %c0_i32_0, %c0_i32_1 : i32, i32, i32, i32
  }
  func.func @transform_2(%arg0: i32, %arg1: i32) -> (i32, i32, i32) {
    %c0_i32 = arith.constant 0 : i32
    %c0_i32_0 = arith.constant 0 : i32
    %c0_i32_1 = arith.constant 0 : i32
    return %arg1, %c0_i32, %c0_i32_0 : i32, i32, i32
  }
  func.func @transform_3(%arg0: i32, %arg1: i32) -> (i32, i32, i32, i32, i32) {
    %c0_i32 = arith.constant 0 : i32
    %c0_i32_0 = arith.constant 0 : i32
    %c0_i32_1 = arith.constant 0 : i32
    %c0_i32_2 = arith.constant 0 : i32
    return %arg0, %arg1, %c0_i32, %c0_i32_0, %c0_i32_1 : i32, i32, i32, i32, i32
  }
}

</mosaic_0001>

<llo_original>
// kernel: conv2d_pallas_nhwc.1
$region0: #{conv2d_pallas_nhwc.1}
  #allocation0 [shape = 'u32[]', space=smem, size = 0x4, offset = 0x4, fixed_abs, tag = 'smem constant byte address 0x4 - core index']
  #allocation1 [shape = 'u32[144,128]{1,0:T(1,128)}', space=vmem, size = 0x12000, scoped, tag = 'internal scratch']
  %s0 = inlined_call_operand.vmem [shape: f32[2,1,6,9,8,4], index: 0, kind: input, shape index: {}]
  %s1 = inlined_call_operand.vmem [shape: f32[1,9,4,8], index: 1, kind: input, shape index: {}]
  %s2 = inlined_call_operand.vmem [shape: f32[1,1,8], index: 2, kind: input, shape index: {}]
  %s3 = inlined_call_operand.hbm [shape: f32[2,1,8,8,8], index: 3, kind: output, shape index: {}]
  %s4 = sld [smem:[#allocation0]]
  $region45: #{conv2d_pallas_nhwc.1} parent=0
    _
  %s6 = ssub.s32 1, %s4
  %s7 = scalar_select 0, %s6, %s4
  $region1: #{conv2d_pallas_nhwc.1} parent=0
    #allocation2 [shape = 'u8[65536]{0}', space=vmem, size = 0x10000, scoped, tag = 'output window, operand 0']
    #allocation3 [shape = 's32[2]{0}', space=sflag, size = 0x8, scoped, tag = 'scoped memory for conv2d_pallas_nhwc.1']
    %8 = vsyncpa [#allocation3], 0
    %s9 = scalar_lea.sflag [#allocation3], 1
    %10 = vsyncpa %s9, 0
    loop: start=0, step=1, limit=4
    $region2: #{conv2d_pallas_nhwc.1} parent=1 // loop_pre_header
      _
    $region3: #{conv2d_pallas_nhwc.1} parent=1 // loop_header
      %s12 = sphi 0, %s16
      %p13 = scmp.ge.s32.totalorder %s12, 4
      %s19 = sphi 0, %s31
      %s20 = sphi 0, %s27
      %s21 = sphi 0, %s19
      %s22 = sphi 0, %s20
      %s23 = sphi 0, %s21
      %s24 = sphi 0, %s22
      %s36 = sphi 0, %s38
      %s39 = sphi 0, %s36
      %s40 = sphi 0, %s39
      %s56 = sphi 0, %s40
      %s62 = sphi 0, %s64
      %s65 = sphi 0, %s62
      %s66 = sphi 0, %s65
      %s82 = sphi 0, %s66
      %s88 = sphi 0, %s90
      %s91 = sphi 0, %s88
      %s92 = sphi 0, %s91
      %s108 = sphi 0, %s92
      %s116 = sphi 0, %s118
      %s119 = sphi 0, %s116
      %s120 = sphi 0, %s119
      %s136 = sphi 0, %s120
    $region4: #{conv2d_pallas_nhwc.1} parent=1 // loop_header_branch
      %15 = sbr.rel (%p13) target = $region8
    $region5: #{conv2d_pallas_nhwc.1} parent=1 // loop_body
      %s17 = ssub.s32 %s12, 1
      %s18 = ssub.s32 %s12, 2
      %s25 = sadd.s32 1, %s20
      %p26 = scmp.ge.s32.totalorder %s25, 1
      %s27 = scalar_select %p26, 0, %s25
      %s28 = sadd.s32 1, %s19
      %s29 = scalar_select %p26, %s28, %s19
      %p30 = scmp.ge.s32.totalorder %s29, 2
      %s31 = scalar_select %p30, 0, %s29
      %s32 = ssub.s32 %s19, %s31
      %s33 = ssub.s32 %s20, %s27
      %s34 = sor.u32 %s32, %s33
      %p35 = scmp.eq.s32.totalorder %s34, 0
      %s37 = sadd.s32 %s36, 1
      %s38 = scalar_select %p35, %s36, %s37
      %p41 = pneg %p35
      %p42 = scmp.eq.s32.totalorder %s12, 1
      %p43 = por %p41, %p42
      %p44 = scmp.ne.s32.totalorder %s36, %s39
      %p45 = scmp.eq.s32.totalorder %s12, 0
      %p46 = por %p44, %p45
      %p47 = scmp.ne.s32.totalorder %s36, %s39
      %p48 = scmp.eq.s32.totalorder %s17, 1
      %p49 = por %p47, %p48
      %p50 = scmp.ne.s32.totalorder %s39, %s40
      %p51 = scmp.eq.s32.totalorder %s17, 0
      %p52 = por %p50, %p51
      %p53 = scmp.ne.s32.totalorder %s39, %s40
      %p54 = scmp.eq.s32.totalorder %s18, 1
      %p55 = por %p53, %p54
      %p57 = scmp.ne.s32.totalorder %s40, %s56
      %p58 = scmp.eq.s32.totalorder %s18, 0
      %p59 = por %p57, %p58
      %s60 = ssub.s32 %s20, %s27
      %p61 = scmp.eq.s32.totalorder %s60, 0
      %s63 = sadd.s32 %s62, 1
      %s64 = scalar_select %p61, %s62, %s63
      %p67 = pneg %p61
      %p68 = scmp.eq.s32.totalorder %s12, 1
      %p69 = por %p67, %p68
      %p70 = scmp.ne.s32.totalorder %s62, %s65
      %p71 = scmp.eq.s32.totalorder %s12, 0
      %p72 = por %p70, %p71
      %p73 = scmp.ne.s32.totalorder %s62, %s65
      %p74 = scmp.eq.s32.totalorder %s17, 1
      %p75 = por %p73, %p74
      %p76 = scmp.ne.s32.totalorder %s65, %s66
      %p77 = scmp.eq.s32.totalorder %s17, 0
      %p78 = por %p76, %p77
      %p79 = scmp.ne.s32.totalorder %s65, %s66
      %p80 = scmp.eq.s32.totalorder %s18, 1
      %p81 = por %p79, %p80
      %p83 = scmp.ne.s32.totalorder %s66, %s82
      %p84 = scmp.eq.s32.totalorder %s18, 0
      %p85 = por %p83, %p84
      %s86 = ssub.s32 %s20, %s27
      %p87 = scmp.eq.s32.totalorder %s86, 0
      %s89 = sadd.s32 %s88, 1
      %s90 = scalar_select %p87, %s88, %s89
      %p93 = pneg %p87
      %p94 = scmp.eq.s32.totalorder %s12, 1
      %p95 = por %p93, %p94
      %p96 = scmp.ne.s32.totalorder %s88, %s91
      %p97 = scmp.eq.s32.totalorder %s12, 0
      %p98 = por %p96, %p97
      %p99 = scmp.ne.s32.totalorder %s88, %s91
      %p100 = scmp.eq.s32.totalorder %s17, 1
      %p101 = por %p99, %p100
      %p102 = scmp.ne.s32.totalorder %s91, %s92
      %p103 = scmp.eq.s32.totalorder %s17, 0
      %p104 = por %p102, %p103
      %p105 = scmp.ne.s32.totalorder %s91, %s92
      %p106 = scmp.eq.s32.totalorder %s18, 1
      %p107 = por %p105, %p106
      %p109 = scmp.ne.s32.totalorder %s92, %s108
      %p110 = scmp.eq.s32.totalorder %s18, 0
      %p111 = por %p109, %p110
      %s112 = ssub.s32 %s19, %s31
      %s113 = ssub.s32 %s20, %s27
      %s114 = sor.u32 %s112, %s113
      %p115 = scmp.eq.s32.totalorder %s114, 0
      %s117 = sadd.s32 %s116, 1
      %s118 = scalar_select %p115, %s116, %s117
      %p121 = pneg %p115
      %p122 = scmp.eq.s32.totalorder %s12, 1
      %p123 = por %p121, %p122
      %p124 = scmp.ne.s32.totalorder %s116, %s119
      %p125 = scmp.eq.s32.totalorder %s12, 0
      %p126 = por %p124, %p125
      %p127 = scmp.ne.s32.totalorder %s116, %s119
      %p128 = scmp.eq.s32.totalorder %s17, 1
      %p129 = por %p127, %p128
      %p130 = scmp.ne.s32.totalorder %s119, %s120
      %p131 = scmp.eq.s32.totalorder %s17, 0
      %p132 = por %p130, %p131
      %p133 = scmp.ne.s32.totalorder %s119, %s120
      %p134 = scmp.eq.s32.totalorder %s18, 1
      %p135 = por %p133, %p134
      %p137 = scmp.ne.s32.totalorder %s120, %s136
      %p138 = scmp.eq.s32.totalorder %s18, 0
      %p139 = por %p137, %p138
      %p140 = scmp.le.s32.totalorder 1, %s12
      %p141 = scmp.lt.s32.totalorder %s12, 3
      %p142 = pnand %p140, %p141
      %p143 = pneg %p142
      // Predicated region
      $region9: #{conv2d_pallas_nhwc.1} parent=5 // pred_check
        _
      $region10: #{conv2d_pallas_nhwc.1} parent=5 // pred_check_branch
        %145 = sbr.rel (%p142) target = $region12
      $region11: #{conv2d_pallas_nhwc.1} parent=5 // pred_region
        %s146 = ssub.s32 %s12, 1
        // Predicated region
        $region13: #{conv2d_pallas_nhwc.1} parent=11 // pred_check
          %p147 = pneg %p78
        $region14: #{conv2d_pallas_nhwc.1} parent=11 // pred_check_branch
          %149 = sbr.rel (%p147) target = $region16
        $region15: #{conv2d_pallas_nhwc.1} parent=11 // pred_region
          %p150 = scmp.lt.s32.totalorder %s22, 0
          %s151 = scalar_select %p150, %s22, 0
          %s152 = smul.addr %s151, 9
          %s153 = smul.addr %s152, 4
          %s154 = scalar_lea.vmem %s1, %s153
        $region16: #{conv2d_pallas_nhwc.1} parent=11 // pred_fallthru
          _
        // Predicated region
        $region17: #{conv2d_pallas_nhwc.1} parent=11 // pred_check
          %p155 = pneg %p104
        $region18: #{conv2d_pallas_nhwc.1} parent=11 // pred_check_branch
          %157 = sbr.rel (%p155) target = $region20
        $region19: #{conv2d_pallas_nhwc.1} parent=11 // pred_region
          %p158 = scmp.lt.s32.totalorder %s22, 0
          %s159 = scalar_select %p158, %s22, 0
          %s160 = scalar_lea.vmem %s2, %s159
        $region20: #{conv2d_pallas_nhwc.1} parent=11 // pred_fallthru
          _
      $region12: #{conv2d_pallas_nhwc.1} parent=5 // pred_fallthru
        _
      %p161 = scmp.lt.s32.totalorder %s12, 2
      // Predicated region
      $region21: #{conv2d_pallas_nhwc.1} parent=5 // pred_check
        %p162 = pneg %p161
      $region22: #{conv2d_pallas_nhwc.1} parent=5 // pred_check_branch
        %164 = sbr.rel (%p162) target = $region24
      $region23: #{conv2d_pallas_nhwc.1} parent=5 // pred_region
        // Predicated region
        $region25: #{conv2d_pallas_nhwc.1} parent=23 // pred_check
          %p165 = pneg %p46
        $region26: #{conv2d_pallas_nhwc.1} parent=23 // pred_check_branch
          %167 = sbr.rel (%p165) target = $region28
        $region27: #{conv2d_pallas_nhwc.1} parent=23 // pred_region
          %p168 = scmp.lt.s32.totalorder %s19, 1
          %s169 = scalar_select %p168, %s19, 1
          %p170 = scmp.lt.s32.totalorder %s20, 0
          %s171 = scalar_select %p170, %s20, 0
          %s172 = smul.addr %s171, 54
          %s173 = smul.addr %s169, 54
          %s174 = sadd.s32 %s172, %s173
          %s175 = smul.addr %s174, 8
          %s176 = scalar_lea.vmem %s0, %s175
        $region28: #{conv2d_pallas_nhwc.1} parent=23 // pred_fallthru
          _
      $region24: #{conv2d_pallas_nhwc.1} parent=5 // pred_fallthru
        _
      %p177 = scmp.le.s32.totalorder 1, %s12
      %p178 = scmp.lt.s32.totalorder %s12, 3
      %p179 = pnand %p177, %p178
      %p180 = pneg %p179
      // Predicated region
      $region29: #{conv2d_pallas_nhwc.1} parent=5 // pred_check
        _
      $region30: #{conv2d_pallas_nhwc.1} parent=5 // pred_check_branch
        %182 = sbr.rel (%p179) target = $region32
      $region31: #{conv2d_pallas_nhwc.1} parent=5 // pred_region
        %s183 = ssub.s32 %s12, 1
        %p184 = scmp.lt.s32.totalorder %s21, 1
        %s185 = scalar_select %p184, %s21, 1
        %p186 = scmp.lt.s32.totalorder %s22, 0
        %s187 = scalar_select %p186, %s22, 0
        %s188 = smul.addr %s187, 54
        %s189 = smul.addr %s185, 54
        %s190 = sadd.s32 %s188, %s189
        %s191 = smul.addr %s190, 8
        %s192 = scalar_lea.vmem %s0, %s191
        %p193 = pneg %p52
        %p194 = pneg %p49
        %p195 = scmp.lt.s32.totalorder %s22, 0
        %s196 = scalar_select %p195, %s22, 0
        %s197 = smul.addr %s196, 9
        %s198 = smul.addr %s197, 4
        %s199 = scalar_lea.vmem %s1, %s198
        %p200 = pneg %p78
        %p201 = pneg %p75
        %p202 = scmp.lt.s32.totalorder %s22, 0
        %s203 = scalar_select %p202, %s22, 0
        %s204 = scalar_lea.vmem %s2, %s203
        %p205 = pneg %p104
        %p206 = pneg %p101
        %p207 = pneg %p132
        %p208 = pneg %p129
        %s209 = sand.u32 %s119, 1
        %s210 = scalar_lea.sflag [#allocation3], %s209
        %s211 = sand.u32 %s119, 1
        %s212 = smul.addr %s211, 64
        %s213 = scalar_lea.vmem [#allocation2], %s212
        %p214 = scmp.lt.s32.totalorder %s21, 1
        %s215 = scalar_select %p214, %s21, 1
        %p216 = scmp.lt.s32.totalorder %s22, 0
        %s217 = scalar_select %p216, %s22, 0
        %s218 = smul.addr %s217, 54
        %s219 = smul.addr %s215, 54
        %s220 = sadd.s32 %s218, %s219
        %s221 = smul.addr %s220, 8
        %s222 = scalar_lea.vmem %s0, %s221
        %p223 = scmp.lt.s32.totalorder %s22, 0
        %s224 = scalar_select %p223, %s22, 0
        %s225 = smul.addr %s224, 9
        %s226 = smul.addr %s225, 4
        %s227 = scalar_lea.vmem %s1, %s226
        %p228 = scmp.lt.s32.totalorder %s22, 0
        %s229 = scalar_select %p228, %s22, 0
        %s230 = scalar_lea.vmem %s2, %s229
        %v231 = vld [vmem:[%s222] sm:$0xff]
        %v232 = vld [vmem:[%s222 + $0x8] sm:$0xff]
        %v233 = vld [vmem:[%s222 + $0x10] sm:$0xff]
        %v234 = vld [vmem:[%s222 + $0x18] sm:$0xff]
        %v235 = vld [vmem:[%s222 + $0x20] sm:$0xff]
        %v236 = vld [vmem:[%s222 + $0x28] sm:$0xff]
        %v237 = vld [vmem:[%s222 + $0x30] sm:$0xff]
        %v238 = vld [vmem:[%s222 + $0x38] sm:$0xff]
        %v239 = vld [vmem:[%s227] sm:$0xf]
        %s240 = scalar_lea.vmem %s222, 144
        %v241 = vld [vmem:[%s240] sm:$0xff]
        %v242 = vld [vmem:[%s240 + $0x8] sm:$0xff]
        %v243 = vld [vmem:[%s240 + $0x10] sm:$0xff]
        %v244 = vld [vmem:[%s240 + $0x18] sm:$0xff]
        %v245 = vld [vmem:[%s240 + $0x20] sm:$0xff]
        %v246 = vld [vmem:[%s240 + $0x28] sm:$0xff]
        %v247 = vld [vmem:[%s240 + $0x30] sm:$0xff]
        %v248 = vld [vmem:[%s240 + $0x38] sm:$0xff]
        %s249 = scalar_lea.vmem %s227, 4
        %v250 = vld [vmem:[%s249] sm:$0xf]
        %vm251 = vcmask 31744
        %v253 = vsel %vm251, %v241, 0
        %vm255 = vcmask 1043456
        %v257 = vsel %vm255, %v250, 0
        %259 = vmatprep.subr.mxu0 0.0
        %260 = vmatpush1.msra.mxu0 0.0
        %261 = vmatprep.subr.mxu0 0.0
        %262 = vmatpush1.msra.mxu0 0.0
        %263 = vmatprep.subr.mxu0 0.0
        %264 = vmatpush1.msra.mxu0 0.0
        %265 = vmatprep.subr.mxu0 0.0
        %266 = vmatpush1.msra.mxu0 0.0
        %267 = vmatprep.subr.mxu0 0.0
        %268 = vmatpush1.msra.mxu0 0.0
        %269 = vmatprep.subr.mxu0 0.0
        %270 = vmatpush1.msra.mxu0 0.0
        %271 = vmatprep.subr.mxu0 0.0
        %272 = vmatpush1.msra.mxu0 0.0
        %273 = vmatprep.subr.mxu0 0.0
        %274 = vmatpush1.msra.mxu0 0.0
        %275 = vmatprep.subr.mxu0 0.0
        %276 = vmatpush1.msra.mxu0 0.0
        %277 = vmatprep.subr.mxu0 0.0
        %278 = vmatpush1.msra.mxu0 0.0
        %279 = vmatprep.subr.mxu0 0.0
        %280 = vmatpush1.msra.mxu0 0.0
        %281 = vmatprep.subr.mxu0 0.0
        %282 = vmatpush1.msra.mxu0 0.0
        %283 = vmatprep.subr.mxu0 0.0
        %284 = vmatpush1.msra.mxu0 0.0
        %285 = vmatprep.subr.mxu0 0.0
        %286 = vmatpush1.msra.mxu0 0.0
        %287 = vmatprep.subr.mxu0 0.0
        %288 = vmatpush1.msra.mxu0 0.0
        %289 = vmatprep.subr.mxu0 0.0
        %290 = vmatpush1.msra.mxu0 %v257
        %291 = vmatprep.subr.mxu0 0.0
        %292 = vmatpush2.msra.mxu0 0.0
        %293 = vmatprep.subr.mxu0 0.0
        %294 = vmatpush2.msra.mxu0 0.0
        %295 = vmatprep.subr.mxu0 0.0
        %296 = vmatpush2.msra.mxu0 0.0
        %297 = vmatprep.subr.mxu0 0.0
        %298 = vmatpush2.msra.mxu0 0.0
        %299 = vmatprep.subr.mxu0 0.0
        %300 = vmatpush2.msra.mxu0 0.0
        %301 = vmatprep.subr.mxu0 0.0
        %302 = vmatpush2.msra.mxu0 0.0
        %303 = vmatprep.subr.mxu0 0.0
        %304 = vmatpush2.msra.mxu0 0.0
        %305 = vmatprep.subr.mxu0 0.0
        %306 = vmatpush2.msra.mxu0 0.0
        %307 = vmatprep.subr.mxu0 0.0
        %308 = vmatpush2.msra.mxu0 0.0
        %309 = vmatprep.subr.mxu0 0.0
        %310 = vmatpush2.msra.mxu0 0.0
        %311 = vmatprep.subr.mxu0 0.0
        %312 = vmatpush2.msra.mxu0 0.0
        %313 = vmatprep.subr.mxu0 0.0
        %314 = vmatpush2.msra.mxu0 0.0
        %315 = vmatprep.subr.mxu0 0.0
        %316 = vmatpush2.msra.mxu0 0.0
        %317 = vmatprep.subr.mxu0 0.0
        %318 = vmatpush2.msra.mxu0 0.0
        %319 = vmatprep.subr.mxu0 0.0
        %320 = vmatpush2.msra.mxu0 0.0
        %321 = vmatprep.subr.mxu0 0.0
        %322 = vmatpush2.msra.mxu0 0.0
        %323 = vmatprep.mubr.f32.mxu0 0.0
        %324 = vmatmul.mubr.f32.gmra.mxu0 %v253
        %v325 = vpop.f32.mrf.mxu0
        %v326 = vadd.f32 0.0, %v325
        %v327 = vpop.f32.mrf.mxu0
        %328 = vdwg.mxu0
        %v330 = vsel %vm251, %v242, 0
        %332 = vmatprep.subr.mxu0 0.0
        %333 = vmatpush1.msra.mxu0 0.0
        %334 = vmatprep.subr.mxu0 0.0
        %335 = vmatpush1.msra.mxu0 0.0
        %336 = vmatprep.subr.mxu0 0.0
        %337 = vmatpush1.msra.mxu0 0.0
        %338 = vmatprep.subr.mxu0 0.0
        %339 = vmatpush1.msra.mxu0 0.0
        %340 = vmatprep.subr.mxu0 0.0
        %341 = vmatpush1.msra.mxu0 0.0
        %342 = vmatprep.subr.mxu0 0.0
        %343 = vmatpush1.msra.mxu0 0.0
        %344 = vmatprep.subr.mxu0 0.0
        %345 = vmatpush1.msra.mxu0 0.0
        %346 = vmatprep.subr.mxu0 0.0
        %347 = vmatpush1.msra.mxu0 0.0
        %348 = vmatprep.subr.mxu0 0.0
        %349 = vmatpush1.msra.mxu0 0.0
        %350 = vmatprep.subr.mxu0 0.0
        %351 = vmatpush1.msra.mxu0 0.0
        %352 = vmatprep.subr.mxu0 0.0
        %353 = vmatpush1.msra.mxu0 0.0
        %354 = vmatprep.subr.mxu0 0.0
        %355 = vmatpush1.msra.mxu0 0.0
        %356 = vmatprep.subr.mxu0 0.0
        %357 = vmatpush1.msra.mxu0 0.0
        %358 = vmatprep.subr.mxu0 0.0
        %359 = vmatpush1.msra.mxu0 0.0
        %360 = vmatprep.subr.mxu0 0.0
        %361 = vmatpush1.msra.mxu0 0.0
        %362 = vmatprep.subr.mxu0 0.0
        %363 = vmatpush1.msra.mxu0 %v257
        %364 = vmatprep.subr.mxu0 0.0
        %365 = vmatpush2.msra.mxu0 0.0
        %366 = vmatprep.subr.mxu0 0.0
        %367 = vmatpush2.msra.mxu0 0.0
        %368 = vmatprep.subr.mxu0 0.0
        %369 = vmatpush2.msra.mxu0 0.0
        %370 = vmatprep.subr.mxu0 0.0
        %371 = vmatpush2.msra.mxu0 0.0
        %372 = vmatprep.subr.mxu0 0.0
        %373 = vmatpush2.msra.mxu0 0.0
        %374 = vmatprep.subr.mxu0 0.0
        %375 = vmatpush2.msra.mxu0 0.0
        %376 = vmatprep.subr.mxu0 0.0
        %377 = vmatpush2.msra.mxu0 0.0
        %378 = vmatprep.subr.mxu0 0.0
        %379 = vmatpush2.msra.mxu0 0.0
        %380 = vmatprep.subr.mxu0 0.0
        %381 = vmatpush2.msra.mxu0 0.0
        %382 = vmatprep.subr.mxu0 0.0
        %383 = vmatpush2.msra.mxu0 0.0
        %384 = vmatprep.subr.mxu0 0.0
        %385 = vmatpush2.msra.mxu0 0.0
        %386 = vmatprep.subr.mxu0 0.0
        %387 = vmatpush2.msra.mxu0 0.0
        %388 = vmatprep.subr.mxu0 0.0
        %389 = vmatpush2.msra.mxu0 0.0
        %390 = vmatprep.subr.mxu0 0.0
        %391 = vmatpush2.msra.mxu0 0.0
        %392 = vmatprep.subr.mxu0 0.0
        %393 = vmatpush2.msra.mxu0 0.0
        %394 = vmatprep.subr.mxu0 0.0
        %395 = vmatpush2.msra.mxu0 0.0
        %396 = vmatprep.mubr.f32.mxu0 0.0
        %397 = vmatmul.mubr.f32.gmra.mxu0 %v330
        %v398 = vpop.f32.mrf.mxu0
        %v399 = vadd.f32 0.0, %v398
        %v400 = vpop.f32.mrf.mxu0
        %401 = vdwg.mxu0
        %v403 = vsel %vm251, %v243, 0
        %405 = vmatprep.subr.mxu0 0.0
        %406 = vmatpush1.msra.mxu0 0.0
        %407 = vmatprep.subr.mxu0 0.0
        %408 = vmatpush1.msra.mxu0 0.0
        %409 = vmatprep.subr.mxu0 0.0
        %410 = vmatpush1.msra.mxu0 0.0
        %411 = vmatprep.subr.mxu0 0.0
        %412 = vmatpush1.msra.mxu0 0.0
        %413 = vmatprep.subr.mxu0 0.0
        %414 = vmatpush1.msra.mxu0 0.0
        %415 = vmatprep.subr.mxu0 0.0
        %416 = vmatpush1.msra.mxu0 0.0
        %417 = vmatprep.subr.mxu0 0.0
        %418 = vmatpush1.msra.mxu0 0.0
        %419 = vmatprep.subr.mxu0 0.0
        %420 = vmatpush1.msra.mxu0 0.0
        %421 = vmatprep.subr.mxu0 0.0
        %422 = vmatpush1.msra.mxu0 0.0
        %423 = vmatprep.subr.mxu0 0.0
        %424 = vmatpush1.msra.mxu0 0.0
        %425 = vmatprep.subr.mxu0 0.0
        %426 = vmatpush1.msra.mxu0 0.0
        %427 = vmatprep.subr.mxu0 0.0
        %428 = vmatpush1.msra.mxu0 0.0
        %429 = vmatprep.subr.mxu0 0.0
        %430 = vmatpush1.msra.mxu0 0.0
        %431 = vmatprep.subr.mxu0 0.0
        %432 = vmatpush1.msra.mxu0 0.0
        %433 = vmatprep.subr.mxu0 0.0
        %434 = vmatpush1.msra.mxu0 0.0
        %435 = vmatprep.subr.mxu0 0.0
        %436 = vmatpush1.msra.mxu0 %v257
        %437 = vmatprep.subr.mxu0 0.0
        %438 = vmatpush2.msra.mxu0 0.0
        %439 = vmatprep.subr.mxu0 0.0
        %440 = vmatpush2.msra.mxu0 0.0
        %441 = vmatprep.subr.mxu0 0.0
        %442 = vmatpush2.msra.mxu0 0.0
        %443 = vmatprep.subr.mxu0 0.0
        %444 = vmatpush2.msra.mxu0 0.0
        %445 = vmatprep.subr.mxu0 0.0
        %446 = vmatpush2.msra.mxu0 0.0
        %447 = vmatprep.subr.mxu0 0.0
        %448 = vmatpush2.msra.mxu0 0.0
        %449 = vmatprep.subr.mxu0 0.0
        %450 = vmatpush2.msra.mxu0 0.0
        %451 = vmatprep.subr.mxu0 0.0
        %452 = vmatpush2.msra.mxu0 0.0
        %453 = vmatprep.subr.mxu0 0.0
        %454 = vmatpush2.msra.mxu0 0.0
        %455 = vmatprep.subr.mxu0 0.0
        %456 = vmatpush2.msra.mxu0 0.0
        %457 = vmatprep.subr.mxu0 0.0
        %458 = vmatpush2.msra.mxu0 0.0
        %459 = vmatprep.subr.mxu0 0.0
        %460 = vmatpush2.msra.mxu0 0.0
        %461 = vmatprep.subr.mxu0 0.0
        %462 = vmatpush2.msra.mxu0 0.0
        %463 = vmatprep.subr.mxu0 0.0
        %464 = vmatpush2.msra.mxu0 0.0
        %465 = vmatprep.subr.mxu0 0.0
        %466 = vmatpush2.msra.mxu0 0.0
        %467 = vmatprep.subr.mxu0 0.0
        %468 = vmatpush2.msra.mxu0 0.0
        %469 = vmatprep.mubr.f32.mxu0 0.0
        %470 = vmatmul.mubr.f32.gmra.mxu0 %v403
        %v471 = vpop.f32.mrf.mxu0
        %v472 = vadd.f32 0.0, %v471
        %v473 = vpop.f32.mrf.mxu0
        %474 = vdwg.mxu0
        %v476 = vsel %vm251, %v244, 0
        %478 = vmatprep.subr.mxu0 0.0
        %479 = vmatpush1.msra.mxu0 0.0
        %480 = vmatprep.subr.mxu0 0.0
        %481 = vmatpush1.msra.mxu0 0.0
        %482 = vmatprep.subr.mxu0 0.0
        %483 = vmatpush1.msra.mxu0 0.0
        %484 = vmatprep.subr.mxu0 0.0
        %485 = vmatpush1.msra.mxu0 0.0
        %486 = vmatprep.subr.mxu0 0.0
        %487 = vmatpush1.msra.mxu0 0.0
        %488 = vmatprep.subr.mxu0 0.0
        %489 = vmatpush1.msra.mxu0 0.0
        %490 = vmatprep.subr.mxu0 0.0
        %491 = vmatpush1.msra.mxu0 0.0
        %492 = vmatprep.subr.mxu0 0.0
        %493 = vmatpush1.msra.mxu0 0.0
        %494 = vmatprep.subr.mxu0 0.0
        %495 = vmatpush1.msra.mxu0 0.0
        %496 = vmatprep.subr.mxu0 0.0
        %497 = vmatpush1.msra.mxu0 0.0
        %498 = vmatprep.subr.mxu0 0.0
        %499 = vmatpush1.msra.mxu0 0.0
        %500 = vmatprep.subr.mxu0 0.0
        %501 = vmatpush1.msra.mxu0 0.0
        %502 = vmatprep.subr.mxu0 0.0
        %503 = vmatpush1.msra.mxu0 0.0
        %504 = vmatprep.subr.mxu0 0.0
        %505 = vmatpush1.msra.mxu0 0.0
        %506 = vmatprep.subr.mxu0 0.0
        %507 = vmatpush1.msra.mxu0 0.0
        %508 = vmatprep.subr.mxu0 0.0
        %509 = vmatpush1.msra.mxu0 %v257
        %510 = vmatprep.subr.mxu0 0.0
        %511 = vmatpush2.msra.mxu0 0.0
        %512 = vmatprep.subr.mxu0 0.0
        %513 = vmatpush2.msra.mxu0 0.0
        %514 = vmatprep.subr.mxu0 0.0
        %515 = vmatpush2.msra.mxu0 0.0
        %516 = vmatprep.subr.mxu0 0.0
        %517 = vmatpush2.msra.mxu0 0.0
        %518 = vmatprep.subr.mxu0 0.0
        %519 = vmatpush2.msra.mxu0 0.0
        %520 = vmatprep.subr.mxu0 0.0
        %521 = vmatpush2.msra.mxu0 0.0
        %522 = vmatprep.subr.mxu0 0.0
        %523 = vmatpush2.msra.mxu0 0.0
        %524 = vmatprep.subr.mxu0 0.0
        %525 = vmatpush2.msra.mxu0 0.0
        %526 = vmatprep.subr.mxu0 0.0
        %527 = vmatpush2.msra.mxu0 0.0
        %528 = vmatprep.subr.mxu0 0.0
        %529 = vmatpush2.msra.mxu0 0.0
        %530 = vmatprep.subr.mxu0 0.0
        %531 = vmatpush2.msra.mxu0 0.0
        %532 = vmatprep.subr.mxu0 0.0
        %533 = vmatpush2.msra.mxu0 0.0
        %534 = vmatprep.subr.mxu0 0.0
        %535 = vmatpush2.msra.mxu0 0.0
        %536 = vmatprep.subr.mxu0 0.0
        %537 = vmatpush2.msra.mxu0 0.0
        %538 = vmatprep.subr.mxu0 0.0
        %539 = vmatpush2.msra.mxu0 0.0
        %540 = vmatprep.subr.mxu0 0.0
        %541 = vmatpush2.msra.mxu0 0.0
        %542 = vmatprep.mubr.f32.mxu0 0.0
        %543 = vmatmul.mubr.f32.gmra.mxu0 %v476
        %v544 = vpop.f32.mrf.mxu0
        %v545 = vadd.f32 0.0, %v544
        %v546 = vpop.f32.mrf.mxu0
        %547 = vdwg.mxu0
        %v549 = vsel %vm251, %v245, 0
        %551 = vmatprep.subr.mxu0 0.0
        %552 = vmatpush1.msra.mxu0 0.0
        %553 = vmatprep.subr.mxu0 0.0
        %554 = vmatpush1.msra.mxu0 0.0
        %555 = vmatprep.subr.mxu0 0.0
        %556 = vmatpush1.msra.mxu0 0.0
        %557 = vmatprep.subr.mxu0 0.0
        %558 = vmatpush1.msra.mxu0 0.0
        %559 = vmatprep.subr.mxu0 0.0
        %560 = vmatpush1.msra.mxu0 0.0
        %561 = vmatprep.subr.mxu0 0.0
        %562 = vmatpush1.msra.mxu0 0.0
        %563 = vmatprep.subr.mxu0 0.0
        %564 = vmatpush1.msra.mxu0 0.0
        %565 = vmatprep.subr.mxu0 0.0
        %566 = vmatpush1.msra.mxu0 0.0
        %567 = vmatprep.subr.mxu0 0.0
        %568 = vmatpush1.msra.mxu0 0.0
        %569 = vmatprep.subr.mxu0 0.0
        %570 = vmatpush1.msra.mxu0 0.0
        %571 = vmatprep.subr.mxu0 0.0
        %572 = vmatpush1.msra.mxu0 0.0
        %573 = vmatprep.subr.mxu0 0.0
        %574 = vmatpush1.msra.mxu0 0.0
        %575 = vmatprep.subr.mxu0 0.0
        %576 = vmatpush1.msra.mxu0 0.0
        %577 = vmatprep.subr.mxu0 0.0
        %578 = vmatpush1.msra.mxu0 0.0
        %579 = vmatprep.subr.mxu0 0.0
        %580 = vmatpush1.msra.mxu0 0.0
        %581 = vmatprep.subr.mxu0 0.0
        %582 = vmatpush1.msra.mxu0 %v257
        %583 = vmatprep.subr.mxu0 0.0
        %584 = vmatpush2.msra.mxu0 0.0
        %585 = vmatprep.subr.mxu0 0.0
        %586 = vmatpush2.msra.mxu0 0.0
        %587 = vmatprep.subr.mxu0 0.0
        %588 = vmatpush2.msra.mxu0 0.0
        %589 = vmatprep.subr.mxu0 0.0
        %590 = vmatpush2.msra.mxu0 0.0
        %591 = vmatprep.subr.mxu0 0.0
        %592 = vmatpush2.msra.mxu0 0.0
        %593 = vmatprep.subr.mxu0 0.0
        %594 = vmatpush2.msra.mxu0 0.0
        %595 = vmatprep.subr.mxu0 0.0
        %596 = vmatpush2.msra.mxu0 0.0
        %597 = vmatprep.subr.mxu0 0.0
        %598 = vmatpush2.msra.mxu0 0.0
        %599 = vmatprep.subr.mxu0 0.0
        %600 = vmatpush2.msra.mxu0 0.0
        %601 = vmatprep.subr.mxu0 0.0
        %602 = vmatpush2.msra.mxu0 0.0
        %603 = vmatprep.subr.mxu0 0.0
        %604 = vmatpush2.msra.mxu0 0.0
        %605 = vmatprep.subr.mxu0 0.0
        %606 = vmatpush2.msra.mxu0 0.0
        %607 = vmatprep.subr.mxu0 0.0
        %608 = vmatpush2.msra.mxu0 0.0
        %609 = vmatprep.subr.mxu0 0.0
        %610 = vmatpush2.msra.mxu0 0.0
        %611 = vmatprep.subr.mxu0 0.0
        %612 = vmatpush2.msra.mxu0 0.0
        %613 = vmatprep.subr.mxu0 0.0
        %614 = vmatpush2.msra.mxu0 0.0
        %615 = vmatprep.mubr.f32.mxu0 0.0
        %616 = vmatmul.mubr.f32.gmra.mxu0 %v549
        %v617 = vpop.f32.mrf.mxu0
        %v618 = vadd.f32 0.0, %v617
        %v619 = vpop.f32.mrf.mxu0
        %620 = vdwg.mxu0
        %v622 = vsel %vm251, %v246, 0
        %624 = vmatprep.subr.mxu0 0.0
        %625 = vmatpush1.msra.mxu0 0.0
        %626 = vmatprep.subr.mxu0 0.0
        %627 = vmatpush1.msra.mxu0 0.0
        %628 = vmatprep.subr.mxu0 0.0
        %629 = vmatpush1.msra.mxu0 0.0
        %630 = vmatprep.subr.mxu0 0.0
        %631 = vmatpush1.msra.mxu0 0.0
        %632 = vmatprep.subr.mxu0 0.0
        %633 = vmatpush1.msra.mxu0 0.0
        %634 = vmatprep.subr.mxu0 0.0
        %635 = vmatpush1.msra.mxu0 0.0
        %636 = vmatprep.subr.mxu0 0.0
        %637 = vmatpush1.msra.mxu0 0.0
        %638 = vmatprep.subr.mxu0 0.0
        %639 = vmatpush1.msra.mxu0 0.0
        %640 = vmatprep.subr.mxu0 0.0
        %641 = vmatpush1.msra.mxu0 0.0
        %642 = vmatprep.subr.mxu0 0.0
        %643 = vmatpush1.msra.mxu0 0.0
        %644 = vmatprep.subr.mxu0 0.0
        %645 = vmatpush1.msra.mxu0 0.0
        %646 = vmatprep.subr.mxu0 0.0
        %647 = vmatpush1.msra.mxu0 0.0
        %648 = vmatprep.subr.mxu0 0.0
        %649 = vmatpush1.msra.mxu0 0.0
        %650 = vmatprep.subr.mxu0 0.0
        %651 = vmatpush1.msra.mxu0 0.0
        %652 = vmatprep.subr.mxu0 0.0
        %653 = vmatpush1.msra.mxu0 0.0
        %654 = vmatprep.subr.mxu0 0.0
        %655 = vmatpush1.msra.mxu0 %v257
        %656 = vmatprep.subr.mxu0 0.0
        %657 = vmatpush2.msra.mxu0 0.0
        %658 = vmatprep.subr.mxu0 0.0
        %659 = vmatpush2.msra.mxu0 0.0
        %660 = vmatprep.subr.mxu0 0.0
        %661 = vmatpush2.msra.mxu0 0.0
        %662 = vmatprep.subr.mxu0 0.0
        %663 = vmatpush2.msra.mxu0 0.0
        %664 = vmatprep.subr.mxu0 0.0
        %665 = vmatpush2.msra.mxu0 0.0
        %666 = vmatprep.subr.mxu0 0.0
        %667 = vmatpush2.msra.mxu0 0.0
        %668 = vmatprep.subr.mxu0 0.0
        %669 = vmatpush2.msra.mxu0 0.0
        %670 = vmatprep.subr.mxu0 0.0
        %671 = vmatpush2.msra.mxu0 0.0
        %672 = vmatprep.subr.mxu0 0.0
        %673 = vmatpush2.msra.mxu0 0.0
        %674 = vmatprep.subr.mxu0 0.0
        %675 = vmatpush2.msra.mxu0 0.0
        %676 = vmatprep.subr.mxu0 0.0
        %677 = vmatpush2.msra.mxu0 0.0
        %678 = vmatprep.subr.mxu0 0.0
        %679 = vmatpush2.msra.mxu0 0.0
        %680 = vmatprep.subr.mxu0 0.0
        %681 = vmatpush2.msra.mxu0 0.0
        %682 = vmatprep.subr.mxu0 0.0
        %683 = vmatpush2.msra.mxu0 0.0
        %684 = vmatprep.subr.mxu0 0.0
        %685 = vmatpush2.msra.mxu0 0.0
        %686 = vmatprep.subr.mxu0 0.0
        %687 = vmatpush2.msra.mxu0 0.0
        %688 = vmatprep.mubr.f32.mxu0 0.0
        %689 = vmatmul.mubr.f32.gmra.mxu0 %v622
        %v690 = vpop.f32.mrf.mxu0
        %v691 = vadd.f32 0.0, %v690
        %v692 = vpop.f32.mrf.mxu0
        %693 = vdwg.mxu0
        %v695 = vsel %vm251, %v247, 0
        %697 = vmatprep.subr.mxu0 0.0
        %698 = vmatpush1.msra.mxu0 0.0
        %699 = vmatprep.subr.mxu0 0.0
        %700 = vmatpush1.msra.mxu0 0.0
        %701 = vmatprep.subr.mxu0 0.0
        %702 = vmatpush1.msra.mxu0 0.0
        %703 = vmatprep.subr.mxu0 0.0
        %704 = vmatpush1.msra.mxu0 0.0
        %705 = vmatprep.subr.mxu0 0.0
        %706 = vmatpush1.msra.mxu0 0.0
        %707 = vmatprep.subr.mxu0 0.0
        %708 = vmatpush1.msra.mxu0 0.0
        %709 = vmatprep.subr.mxu0 0.0
        %710 = vmatpush1.msra.mxu0 0.0
        %711 = vmatprep.subr.mxu0 0.0
        %712 = vmatpush1.msra.mxu0 0.0
        %713 = vmatprep.subr.mxu0 0.0
        %714 = vmatpush1.msra.mxu0 0.0
        %715 = vmatprep.subr.mxu0 0.0
        %716 = vmatpush1.msra.mxu0 0.0
        %717 = vmatprep.subr.mxu0 0.0
        %718 = vmatpush1.msra.mxu0 0.0
        %719 = vmatprep.subr.mxu0 0.0
        %720 = vmatpush1.msra.mxu0 0.0
        %721 = vmatprep.subr.mxu0 0.0
        %722 = vmatpush1.msra.mxu0 0.0
        %723 = vmatprep.subr.mxu0 0.0
        %724 = vmatpush1.msra.mxu0 0.0
        %725 = vmatprep.subr.mxu0 0.0
        %726 = vmatpush1.msra.mxu0 0.0
        %727 = vmatprep.subr.mxu0 0.0
        %728 = vmatpush1.msra.mxu0 %v257
        %729 = vmatprep.subr.mxu0 0.0
        %730 = vmatpush2.msra.mxu0 0.0
        %731 = vmatprep.subr.mxu0 0.0
        %732 = vmatpush2.msra.mxu0 0.0
        %733 = vmatprep.subr.mxu0 0.0
        %734 = vmatpush2.msra.mxu0 0.0
        %735 = vmatprep.subr.mxu0 0.0
        %736 = vmatpush2.msra.mxu0 0.0
        %737 = vmatprep.subr.mxu0 0.0
        %738 = vmatpush2.msra.mxu0 0.0
        %739 = vmatprep.subr.mxu0 0.0
        %740 = vmatpush2.msra.mxu0 0.0
        %741 = vmatprep.subr.mxu0 0.0
        %742 = vmatpush2.msra.mxu0 0.0
        %743 = vmatprep.subr.mxu0 0.0
        %744 = vmatpush2.msra.mxu0 0.0
        %745 = vmatprep.subr.mxu0 0.0
        %746 = vmatpush2.msra.mxu0 0.0
        %747 = vmatprep.subr.mxu0 0.0
        %748 = vmatpush2.msra.mxu0 0.0
        %749 = vmatprep.subr.mxu0 0.0
        %750 = vmatpush2.msra.mxu0 0.0
        %751 = vmatprep.subr.mxu0 0.0
        %752 = vmatpush2.msra.mxu0 0.0
        %753 = vmatprep.subr.mxu0 0.0
        %754 = vmatpush2.msra.mxu0 0.0
        %755 = vmatprep.subr.mxu0 0.0
        %756 = vmatpush2.msra.mxu0 0.0
        %757 = vmatprep.subr.mxu0 0.0
        %758 = vmatpush2.msra.mxu0 0.0
        %759 = vmatprep.subr.mxu0 0.0
        %760 = vmatpush2.msra.mxu0 0.0
        %761 = vmatprep.mubr.f32.mxu0 0.0
        %762 = vmatmul.mubr.f32.gmra.mxu0 %v695
        %v763 = vpop.f32.mrf.mxu0
        %v764 = vadd.f32 0.0, %v763
        %v765 = vpop.f32.mrf.mxu0
        %766 = vdwg.mxu0
        %v768 = vsel %vm251, %v248, 0
        %770 = vmatprep.subr.mxu0 0.0
        %771 = vmatpush1.msra.mxu0 0.0
        %772 = vmatprep.subr.mxu0 0.0
        %773 = vmatpush1.msra.mxu0 0.0
        %774 = vmatprep.subr.mxu0 0.0
        %775 = vmatpush1.msra.mxu0 0.0
        %776 = vmatprep.subr.mxu0 0.0
        %777 = vmatpush1.msra.mxu0 0.0
        %778 = vmatprep.subr.mxu0 0.0
        %779 = vmatpush1.msra.mxu0 0.0
        %780 = vmatprep.subr.mxu0 0.0
        %781 = vmatpush1.msra.mxu0 0.0
        %782 = vmatprep.subr.mxu0 0.0
        %783 = vmatpush1.msra.mxu0 0.0
        %784 = vmatprep.subr.mxu0 0.0
        %785 = vmatpush1.msra.mxu0 0.0
        %786 = vmatprep.subr.mxu0 0.0
        %787 = vmatpush1.msra.mxu0 0.0
        %788 = vmatprep.subr.mxu0 0.0
        %789 = vmatpush1.msra.mxu0 0.0
        %790 = vmatprep.subr.mxu0 0.0
        %791 = vmatpush1.msra.mxu0 0.0
        %792 = vmatprep.subr.mxu0 0.0
        %793 = vmatpush1.msra.mxu0 0.0
        %794 = vmatprep.subr.mxu0 0.0
        %795 = vmatpush1.msra.mxu0 0.0
        %796 = vmatprep.subr.mxu0 0.0
        %797 = vmatpush1.msra.mxu0 0.0
        %798 = vmatprep.subr.mxu0 0.0
        %799 = vmatpush1.msra.mxu0 0.0
        %800 = vmatprep.subr.mxu0 0.0
        %801 = vmatpush1.msra.mxu0 %v257
        %802 = vmatprep.subr.mxu0 0.0
        %803 = vmatpush2.msra.mxu0 0.0
        %804 = vmatprep.subr.mxu0 0.0
        %805 = vmatpush2.msra.mxu0 0.0
        %806 = vmatprep.subr.mxu0 0.0
        %807 = vmatpush2.msra.mxu0 0.0
        %808 = vmatprep.subr.mxu0 0.0
        %809 = vmatpush2.msra.mxu0 0.0
        %810 = vmatprep.subr.mxu0 0.0
        %811 = vmatpush2.msra.mxu0 0.0
        %812 = vmatprep.subr.mxu0 0.0
        %813 = vmatpush2.msra.mxu0 0.0
        %814 = vmatprep.subr.mxu0 0.0
        %815 = vmatpush2.msra.mxu0 0.0
        %816 = vmatprep.subr.mxu0 0.0
        %817 = vmatpush2.msra.mxu0 0.0
        %818 = vmatprep.subr.mxu0 0.0
        %819 = vmatpush2.msra.mxu0 0.0
        %820 = vmatprep.subr.mxu0 0.0
        %821 = vmatpush2.msra.mxu0 0.0
        %822 = vmatprep.subr.mxu0 0.0
        %823 = vmatpush2.msra.mxu0 0.0
        %824 = vmatprep.subr.mxu0 0.0
        %825 = vmatpush2.msra.mxu0 0.0
        %826 = vmatprep.subr.mxu0 0.0
        %827 = vmatpush2.msra.mxu0 0.0
        %828 = vmatprep.subr.mxu0 0.0
        %829 = vmatpush2.msra.mxu0 0.0
        %830 = vmatprep.subr.mxu0 0.0
        %831 = vmatpush2.msra.mxu0 0.0
        %832 = vmatprep.subr.mxu0 0.0
        %833 = vmatpush2.msra.mxu0 0.0
        %834 = vmatprep.mubr.f32.mxu0 0.0
        %835 = vmatmul.mubr.f32.gmra.mxu0 %v768
        %v836 = vpop.f32.mrf.mxu0
        %v837 = vadd.f32 0.0, %v836
        %v838 = vpop.f32.mrf.mxu0
        %839 = vdwg.mxu0
        %v841 = vsel %vm251, %v231, 0
        %v844 = vsel %vm255, %v239, 0
        %846 = vmatprep.subr.mxu0 0.0
        %847 = vmatpush1.msra.mxu0 0.0
        %848 = vmatprep.subr.mxu0 0.0
        %849 = vmatpush1.msra.mxu0 0.0
        %850 = vmatprep.subr.mxu0 0.0
        %851 = vmatpush1.msra.mxu0 0.0
        %852 = vmatprep.subr.mxu0 0.0
        %853 = vmatpush1.msra.mxu0 0.0
        %854 = vmatprep.subr.mxu0 0.0
        %855 = vmatpush1.msra.mxu0 0.0
        %856 = vmatprep.subr.mxu0 0.0
        %857 = vmatpush1.msra.mxu0 0.0
        %858 = vmatprep.subr.mxu0 0.0
        %859 = vmatpush1.msra.mxu0 0.0
        %860 = vmatprep.subr.mxu0 0.0
        %861 = vmatpush1.msra.mxu0 0.0
        %862 = vmatprep.subr.mxu0 0.0
        %863 = vmatpush1.msra.mxu0 0.0
        %864 = vmatprep.subr.mxu0 0.0
        %865 = vmatpush1.msra.mxu0 0.0
        %866 = vmatprep.subr.mxu0 0.0
        %867 = vmatpush1.msra.mxu0 0.0
        %868 = vmatprep.subr.mxu0 0.0
        %869 = vmatpush1.msra.mxu0 0.0
        %870 = vmatprep.subr.mxu0 0.0
        %871 = vmatpush1.msra.mxu0 0.0
        %872 = vmatprep.subr.mxu0 0.0
        %873 = vmatpush1.msra.mxu0 0.0
        %874 = vmatprep.subr.mxu0 0.0
        %875 = vmatpush1.msra.mxu0 0.0
        %876 = vmatprep.subr.mxu0 0.0
        %877 = vmatpush1.msra.mxu0 %v844
        %878 = vmatprep.subr.mxu0 0.0
        %879 = vmatpush2.msra.mxu0 0.0
        %880 = vmatprep.subr.mxu0 0.0
        %881 = vmatpush2.msra.mxu0 0.0
        %882 = vmatprep.subr.mxu0 0.0
        %883 = vmatpush2.msra.mxu0 0.0
        %884 = vmatprep.subr.mxu0 0.0
        %885 = vmatpush2.msra.mxu0 0.0
        %886 = vmatprep.subr.mxu0 0.0
        %887 = vmatpush2.msra.mxu0 0.0
        %888 = vmatprep.subr.mxu0 0.0
        %889 = vmatpush2.msra.mxu0 0.0
        %890 = vmatprep.subr.mxu0 0.0
        %891 = vmatpush2.msra.mxu0 0.0
        %892 = vmatprep.subr.mxu0 0.0
        %893 = vmatpush2.msra.mxu0 0.0
        %894 = vmatprep.subr.mxu0 0.0
        %895 = vmatpush2.msra.mxu0 0.0
        %896 = vmatprep.subr.mxu0 0.0
        %897 = vmatpush2.msra.mxu0 0.0
        %898 = vmatprep.subr.mxu0 0.0
        %899 = vmatpush2.msra.mxu0 0.0
        %900 = vmatprep.subr.mxu0 0.0
        %901 = vmatpush2.msra.mxu0 0.0
        %902 = vmatprep.subr.mxu0 0.0
        %903 = vmatpush2.msra.mxu0 0.0
        %904 = vmatprep.subr.mxu0 0.0
        %905 = vmatpush2.msra.mxu0 0.0
        %906 = vmatprep.subr.mxu0 0.0
        %907 = vmatpush2.msra.mxu0 0.0
        %908 = vmatprep.subr.mxu0 0.0
        %909 = vmatpush2.msra.mxu0 0.0
        %910 = vmatprep.mubr.f32.mxu0 0.0
        %911 = vmatmul.mubr.f32.gmra.mxu0 %v841
        %v912 = vpop.f32.mrf.mxu0
        %v913 = vadd.f32 %v326, %v912
        %v914 = vpop.f32.mrf.mxu0
        %915 = vdwg.mxu0
        %v917 = vsel %vm251, %v232, 0
        %919 = vmatprep.subr.mxu0 0.0
        %920 = vmatpush1.msra.mxu0 0.0
        %921 = vmatprep.subr.mxu0 0.0
        %922 = vmatpush1.msra.mxu0 0.0
        %923 = vmatprep.subr.mxu0 0.0
        %924 = vmatpush1.msra.mxu0 0.0
        %925 = vmatprep.subr.mxu0 0.0
        %926 = vmatpush1.msra.mxu0 0.0
        %927 = vmatprep.subr.mxu0 0.0
        %928 = vmatpush1.msra.mxu0 0.0
        %929 = vmatprep.subr.mxu0 0.0
        %930 = vmatpush1.msra.mxu0 0.0
        %931 = vmatprep.subr.mxu0 0.0
        %932 = vmatpush1.msra.mxu0 0.0
        %933 = vmatprep.subr.mxu0 0.0
        %934 = vmatpush1.msra.mxu0 0.0
        %935 = vmatprep.subr.mxu0 0.0
        %936 = vmatpush1.msra.mxu0 0.0
        %937 = vmatprep.subr.mxu0 0.0
        %938 = vmatpush1.msra.mxu0 0.0
        %939 = vmatprep.subr.mxu0 0.0
        %940 = vmatpush1.msra.mxu0 0.0
        %941 = vmatprep.subr.mxu0 0.0
        %942 = vmatpush1.msra.mxu0 0.0
        %943 = vmatprep.subr.mxu0 0.0
        %944 = vmatpush1.msra.mxu0 0.0
        %945 = vmatprep.subr.mxu0 0.0
        %946 = vmatpush1.msra.mxu0 0.0
        %947 = vmatprep.subr.mxu0 0.0
        %948 = vmatpush1.msra.mxu0 0.0
        %949 = vmatprep.subr.mxu0 0.0
        %950 = vmatpush1.msra.mxu0 %v844
        %951 = vmatprep.subr.mxu0 0.0
        %952 = vmatpush2.msra.mxu0 0.0
        %953 = vmatprep.subr.mxu0 0.0
        %954 = vmatpush2.msra.mxu0 0.0
        %955 = vmatprep.subr.mxu0 0.0
        %956 = vmatpush2.msra.mxu0 0.0
        %957 = vmatprep.subr.mxu0 0.0
        %958 = vmatpush2.msra.mxu0 0.0
        %959 = vmatprep.subr.mxu0 0.0
        %960 = vmatpush2.msra.mxu0 0.0
        %961 = vmatprep.subr.mxu0 0.0
        %962 = vmatpush2.msra.mxu0 0.0
        %963 = vmatprep.subr.mxu0 0.0
        %964 = vmatpush2.msra.mxu0 0.0
        %965 = vmatprep.subr.mxu0 0.0
        %966 = vmatpush2.msra.mxu0 0.0
        %967 = vmatprep.subr.mxu0 0.0
        %968 = vmatpush2.msra.mxu0 0.0
        %969 = vmatprep.subr.mxu0 0.0
        %970 = vmatpush2.msra.mxu0 0.0
        %971 = vmatprep.subr.mxu0 0.0
        %972 = vmatpush2.msra.mxu0 0.0
        %973 = vmatprep.subr.mxu0 0.0
        %974 = vmatpush2.msra.mxu0 0.0
        %975 = vmatprep.subr.mxu0 0.0
        %976 = vmatpush2.msra.mxu0 0.0
        %977 = vmatprep.subr.mxu0 0.0
        %978 = vmatpush2.msra.mxu0 0.0
        %979 = vmatprep.subr.mxu0 0.0
        %980 = vmatpush2.msra.mxu0 0.0
        %981 = vmatprep.subr.mxu0 0.0
        %982 = vmatpush2.msra.mxu0 0.0
        %983 = vmatprep.mubr.f32.mxu0 0.0
        %984 = vmatmul.mubr.f32.gmra.mxu0 %v917
        %v985 = vpop.f32.mrf.mxu0
        %v986 = vadd.f32 %v399, %v985
        %v987 = vpop.f32.mrf.mxu0
        %988 = vdwg.mxu0
        %v990 = vsel %vm251, %v233, 0
        %992 = vmatprep.subr.mxu0 0.0
        %993 = vmatpush1.msra.mxu0 0.0
        %994 = vmatprep.subr.mxu0 0.0
        %995 = vmatpush1.msra.mxu0 0.0
        %996 = vmatprep.subr.mxu0 0.0
        %997 = vmatpush1.msra.mxu0 0.0
        %998 = vmatprep.subr.mxu0 0.0
        %999 = vmatpush1.msra.mxu0 0.0
        %1000 = vmatprep.subr.mxu0 0.0
        %1001 = vmatpush1.msra.mxu0 0.0
        %1002 = vmatprep.subr.mxu0 0.0
        %1003 = vmatpush1.msra.mxu0 0.0
        %1004 = vmatprep.subr.mxu0 0.0
        %1005 = vmatpush1.msra.mxu0 0.0
        %1006 = vmatprep.subr.mxu0 0.0
        %1007 = vmatpush1.msra.mxu0 0.0
        %1008 = vmatprep.subr.mxu0 0.0
        %1009 = vmatpush1.msra.mxu0 0.0
        %1010 = vmatprep.subr.mxu0 0.0
        %1011 = vmatpush1.msra.mxu0 0.0
        %1012 = vmatprep.subr.mxu0 0.0
        %1013 = vmatpush1.msra.mxu0 0.0
        %1014 = vmatprep.subr.mxu0 0.0
        %1015 = vmatpush1.msra.mxu0 0.0
        %1016 = vmatprep.subr.mxu0 0.0
        %1017 = vmatpush1.msra.mxu0 0.0
        %1018 = vmatprep.subr.mxu0 0.0
        %1019 = vmatpush1.msra.mxu0 0.0
        %1020 = vmatprep.subr.mxu0 0.0
        %1021 = vmatpush1.msra.mxu0 0.0
        %1022 = vmatprep.subr.mxu0 0.0
        %1023 = vmatpush1.msra.mxu0 %v844
        %1024 = vmatprep.subr.mxu0 0.0
        %1025 = vmatpush2.msra.mxu0 0.0
        %1026 = vmatprep.subr.mxu0 0.0
        %1027 = vmatpush2.msra.mxu0 0.0
        %1028 = vmatprep.subr.mxu0 0.0
        %1029 = vmatpush2.msra.mxu0 0.0
        %1030 = vmatprep.subr.mxu0 0.0
        %1031 = vmatpush2.msra.mxu0 0.0
        %1032 = vmatprep.subr.mxu0 0.0
        %1033 = vmatpush2.msra.mxu0 0.0
        %1034 = vmatprep.subr.mxu0 0.0
        %1035 = vmatpush2.msra.mxu0 0.0
        %1036 = vmatprep.subr.mxu0 0.0
        %1037 = vmatpush2.msra.mxu0 0.0
        %1038 = vmatprep.subr.mxu0 0.0
        %1039 = vmatpush2.msra.mxu0 0.0
        %1040 = vmatprep.subr.mxu0 0.0
        %1041 = vmatpush2.msra.mxu0 0.0
        %1042 = vmatprep.subr.mxu0 0.0
        %1043 = vmatpush2.msra.mxu0 0.0
        %1044 = vmatprep.subr.mxu0 0.0
        %1045 = vmatpush2.msra.mxu0 0.0
        %1046 = vmatprep.subr.mxu0 0.0
        %1047 = vmatpush2.msra.mxu0 0.0
        %1048 = vmatprep.subr.mxu0 0.0
        %1049 = vmatpush2.msra.mxu0 0.0
        %1050 = vmatprep.subr.mxu0 0.0
        %1051 = vmatpush2.msra.mxu0 0.0
        %1052 = vmatprep.subr.mxu0 0.0
        %1053 = vmatpush2.msra.mxu0 0.0
        %1054 = vmatprep.subr.mxu0 0.0
        %1055 = vmatpush2.msra.mxu0 0.0
        %1056 = vmatprep.mubr.f32.mxu0 0.0
        %1057 = vmatmul.mubr.f32.gmra.mxu0 %v990
        %v1058 = vpop.f32.mrf.mxu0
        %v1059 = vadd.f32 %v472, %v1058
        %v1060 = vpop.f32.mrf.mxu0
        %1061 = vdwg.mxu0
        %v1063 = vsel %vm251, %v234, 0
        %1065 = vmatprep.subr.mxu0 0.0
        %1066 = vmatpush1.msra.mxu0 0.0
        %1067 = vmatprep.subr.mxu0 0.0
        %1068 = vmatpush1.msra.mxu0 0.0
        %1069 = vmatprep.subr.mxu0 0.0
        %1070 = vmatpush1.msra.mxu0 0.0
        %1071 = vmatprep.subr.mxu0 0.0
        %1072 = vmatpush1.msra.mxu0 0.0
        %1073 = vmatprep.subr.mxu0 0.0
        %1074 = vmatpush1.msra.mxu0 0.0
        %1075 = vmatprep.subr.mxu0 0.0
        %1076 = vmatpush1.msra.mxu0 0.0
        %1077 = vmatprep.subr.mxu0 0.0
        %1078 = vmatpush1.msra.mxu0 0.0
        %1079 = vmatprep.subr.mxu0 0.0
        %1080 = vmatpush1.msra.mxu0 0.0
        %1081 = vmatprep.subr.mxu0 0.0
        %1082 = vmatpush1.msra.mxu0 0.0
        %1083 = vmatprep.subr.mxu0 0.0
        %1084 = vmatpush1.msra.mxu0 0.0
        %1085 = vmatprep.subr.mxu0 0.0
        %1086 = vmatpush1.msra.mxu0 0.0
        %1087 = vmatprep.subr.mxu0 0.0
        %1088 = vmatpush1.msra.mxu0 0.0
        %1089 = vmatprep.subr.mxu0 0.0
        %1090 = vmatpush1.msra.mxu0 0.0
        %1091 = vmatprep.subr.mxu0 0.0
        %1092 = vmatpush1.msra.mxu0 0.0
        %1093 = vmatprep.subr.mxu0 0.0
        %1094 = vmatpush1.msra.mxu0 0.0
        %1095 = vmatprep.subr.mxu0 0.0
        %1096 = vmatpush1.msra.mxu0 %v844
        %1097 = vmatprep.subr.mxu0 0.0
        %1098 = vmatpush2.msra.mxu0 0.0
        %1099 = vmatprep.subr.mxu0 0.0
        %1100 = vmatpush2.msra.mxu0 0.0
        %1101 = vmatprep.subr.mxu0 0.0
        %1102 = vmatpush2.msra.mxu0 0.0
        %1103 = vmatprep.subr.mxu0 0.0
        %1104 = vmatpush2.msra.mxu0 0.0
        %1105 = vmatprep.subr.mxu0 0.0
        %1106 = vmatpush2.msra.mxu0 0.0
        %1107 = vmatprep.subr.mxu0 0.0
        %1108 = vmatpush2.msra.mxu0 0.0
        %1109 = vmatprep.subr.mxu0 0.0
        %1110 = vmatpush2.msra.mxu0 0.0
        %1111 = vmatprep.subr.mxu0 0.0
        %1112 = vmatpush2.msra.mxu0 0.0
        %1113 = vmatprep.subr.mxu0 0.0
        %1114 = vmatpush2.msra.mxu0 0.0
        %1115 = vmatprep.subr.mxu0 0.0
        %1116 = vmatpush2.msra.mxu0 0.0
        %1117 = vmatprep.subr.mxu0 0.0
        %1118 = vmatpush2.msra.mxu0 0.0
        %1119 = vmatprep.subr.mxu0 0.0
        %1120 = vmatpush2.msra.mxu0 0.0
        %1121 = vmatprep.subr.mxu0 0.0
        %1122 = vmatpush2.msra.mxu0 0.0
        %1123 = vmatprep.subr.mxu0 0.0
        %1124 = vmatpush2.msra.mxu0 0.0
        %1125 = vmatprep.subr.mxu0 0.0
        %1126 = vmatpush2.msra.mxu0 0.0
        %1127 = vmatprep.subr.mxu0 0.0
        %1128 = vmatpush2.msra.mxu0 0.0
        %1129 = vmatprep.mubr.f32.mxu0 0.0
        %1130 = vmatmul.mubr.f32.gmra.mxu0 %v1063
        %v1131 = vpop.f32.mrf.mxu0
        %v1132 = vadd.f32 %v545, %v1131
        %v1133 = vpop.f32.mrf.mxu0
        %1134 = vdwg.mxu0
        %v1136 = vsel %vm251, %v235, 0
        %1138 = vmatprep.subr.mxu0 0.0
        %1139 = vmatpush1.msra.mxu0 0.0
        %1140 = vmatprep.subr.mxu0 0.0
        %1141 = vmatpush1.msra.mxu0 0.0
        %1142 = vmatprep.subr.mxu0 0.0
        %1143 = vmatpush1.msra.mxu0 0.0
        %1144 = vmatprep.subr.mxu0 0.0
        %1145 = vmatpush1.msra.mxu0 0.0
        %1146 = vmatprep.subr.mxu0 0.0
        %1147 = vmatpush1.msra.mxu0 0.0
        %1148 = vmatprep.subr.mxu0 0.0
        %1149 = vmatpush1.msra.mxu0 0.0
        %1150 = vmatprep.subr.mxu0 0.0
        %1151 = vmatpush1.msra.mxu0 0.0
        %1152 = vmatprep.subr.mxu0 0.0
        %1153 = vmatpush1.msra.mxu0 0.0
        %1154 = vmatprep.subr.mxu0 0.0
        %1155 = vmatpush1.msra.mxu0 0.0
        %1156 = vmatprep.subr.mxu0 0.0
        %1157 = vmatpush1.msra.mxu0 0.0
        %1158 = vmatprep.subr.mxu0 0.0
        %1159 = vmatpush1.msra.mxu0 0.0
        %1160 = vmatprep.subr.mxu0 0.0
        %1161 = vmatpush1.msra.mxu0 0.0
        %1162 = vmatprep.subr.mxu0 0.0
        %1163 = vmatpush1.msra.mxu0 0.0
        %1164 = vmatprep.subr.mxu0 0.0
        %1165 = vmatpush1.msra.mxu0 0.0
        %1166 = vmatprep.subr.mxu0 0.0
        %1167 = vmatpush1.msra.mxu0 0.0
        %1168 = vmatprep.subr.mxu0 0.0
        %1169 = vmatpush1.msra.mxu0 %v844
        %1170 = vmatprep.subr.mxu0 0.0
        %1171 = vmatpush2.msra.mxu0 0.0
        %1172 = vmatprep.subr.mxu0 0.0
        %1173 = vmatpush2.msra.mxu0 0.0
        %1174 = vmatprep.subr.mxu0 0.0
        %1175 = vmatpush2.msra.mxu0 0.0
        %1176 = vmatprep.subr.mxu0 0.0
        %1177 = vmatpush2.msra.mxu0 0.0
        %1178 = vmatprep.subr.mxu0 0.0
        %1179 = vmatpush2.msra.mxu0 0.0
        %1180 = vmatprep.subr.mxu0 0.0
        %1181 = vmatpush2.msra.mxu0 0.0
        %1182 = vmatprep.subr.mxu0 0.0
        %1183 = vmatpush2.msra.mxu0 0.0
        %1184 = vmatprep.subr.mxu0 0.0
        %1185 = vmatpush2.msra.mxu0 0.0
        %1186 = vmatprep.subr.mxu0 0.0
        %1187 = vmatpush2.msra.mxu0 0.0
        %1188 = vmatprep.subr.mxu0 0.0
        %1189 = vmatpush2.msra.mxu0 0.0
        %1190 = vmatprep.subr.mxu0 0.0
        %1191 = vmatpush2.msra.mxu0 0.0
        %1192 = vmatprep.subr.mxu0 0.0
        %1193 = vmatpush2.msra.mxu0 0.0
        %1194 = vmatprep.subr.mxu0 0.0
        %1195 = vmatpush2.msra.mxu0 0.0
        %1196 = vmatprep.subr.mxu0 0.0
        %1197 = vmatpush2.msra.mxu0 0.0
        %1198 = vmatprep.subr.mxu0 0.0
        %1199 = vmatpush2.msra.mxu0 0.0
        %1200 = vmatprep.subr.mxu0 0.0
        %1201 = vmatpush2.msra.mxu0 0.0
        %1202 = vmatprep.mubr.f32.mxu0 0.0
        %1203 = vmatmul.mubr.f32.gmra.mxu0 %v1136
        %v1204 = vpop.f32.mrf.mxu0
        %v1205 = vadd.f32 %v618, %v1204
        %v1206 = vpop.f32.mrf.mxu0
        %1207 = vdwg.mxu0
        %v1209 = vsel %vm251, %v236, 0
        %1211 = vmatprep.subr.mxu0 0.0
        %1212 = vmatpush1.msra.mxu0 0.0
        %1213 = vmatprep.subr.mxu0 0.0
        %1214 = vmatpush1.msra.mxu0 0.0
        %1215 = vmatprep.subr.mxu0 0.0
        %1216 = vmatpush1.msra.mxu0 0.0
        %1217 = vmatprep.subr.mxu0 0.0
        %1218 = vmatpush1.msra.mxu0 0.0
        %1219 = vmatprep.subr.mxu0 0.0
        %1220 = vmatpush1.msra.mxu0 0.0
        %1221 = vmatprep.subr.mxu0 0.0
        %1222 = vmatpush1.msra.mxu0 0.0
        %1223 = vmatprep.subr.mxu0 0.0
        %1224 = vmatpush1.msra.mxu0 0.0
        %1225 = vmatprep.subr.mxu0 0.0
        %1226 = vmatpush1.msra.mxu0 0.0
        %1227 = vmatprep.subr.mxu0 0.0
        %1228 = vmatpush1.msra.mxu0 0.0
        %1229 = vmatprep.subr.mxu0 0.0
        %1230 = vmatpush1.msra.mxu0 0.0
        %1231 = vmatprep.subr.mxu0 0.0
        %1232 = vmatpush1.msra.mxu0 0.0
        %1233 = vmatprep.subr.mxu0 0.0
        %1234 = vmatpush1.msra.mxu0 0.0
        %1235 = vmatprep.subr.mxu0 0.0
        %1236 = vmatpush1.msra.mxu0 0.0
        %1237 = vmatprep.subr.mxu0 0.0
        %1238 = vmatpush1.msra.mxu0 0.0
        %1239 = vmatprep.subr.mxu0 0.0
        %1240 = vmatpush1.msra.mxu0 0.0
        %1241 = vmatprep.subr.mxu0 0.0
        %1242 = vmatpush1.msra.mxu0 %v844
        %1243 = vmatprep.subr.mxu0 0.0
        %1244 = vmatpush2.msra.mxu0 0.0
        %1245 = vmatprep.subr.mxu0 0.0
        %1246 = vmatpush2.msra.mxu0 0.0
        %1247 = vmatprep.subr.mxu0 0.0
        %1248 = vmatpush2.msra.mxu0 0.0
        %1249 = vmatprep.subr.mxu0 0.0
        %1250 = vmatpush2.msra.mxu0 0.0
        %1251 = vmatprep.subr.mxu0 0.0
        %1252 = vmatpush2.msra.mxu0 0.0
        %1253 = vmatprep.subr.mxu0 0.0
        %1254 = vmatpush2.msra.mxu0 0.0
        %1255 = vmatprep.subr.mxu0 0.0
        %1256 = vmatpush2.msra.mxu0 0.0
        %1257 = vmatprep.subr.mxu0 0.0
        %1258 = vmatpush2.msra.mxu0 0.0
        %1259 = vmatprep.subr.mxu0 0.0
        %1260 = vmatpush2.msra.mxu0 0.0
        %1261 = vmatprep.subr.mxu0 0.0
        %1262 = vmatpush2.msra.mxu0 0.0
        %1263 = vmatprep.subr.mxu0 0.0
        %1264 = vmatpush2.msra.mxu0 0.0
        %1265 = vmatprep.subr.mxu0 0.0
        %1266 = vmatpush2.msra.mxu0 0.0
        %1267 = vmatprep.subr.mxu0 0.0
        %1268 = vmatpush2.msra.mxu0 0.0
        %1269 = vmatprep.subr.mxu0 0.0
        %1270 = vmatpush2.msra.mxu0 0.0
        %1271 = vmatprep.subr.mxu0 0.0
        %1272 = vmatpush2.msra.mxu0 0.0
        %1273 = vmatprep.subr.mxu0 0.0
        %1274 = vmatpush2.msra.mxu0 0.0
        %1275 = vmatprep.mubr.f32.mxu0 0.0
        %1276 = vmatmul.mubr.f32.gmra.mxu0 %v1209
        %v1277 = vpop.f32.mrf.mxu0
        %v1278 = vadd.f32 %v691, %v1277
        %v1279 = vpop.f32.mrf.mxu0
        %1280 = vdwg.mxu0
        %v1282 = vsel %vm251, %v237, 0
        %1284 = vmatprep.subr.mxu0 0.0
        %1285 = vmatpush1.msra.mxu0 0.0
        %1286 = vmatprep.subr.mxu0 0.0
        %1287 = vmatpush1.msra.mxu0 0.0
        %1288 = vmatprep.subr.mxu0 0.0
        %1289 = vmatpush1.msra.mxu0 0.0
        %1290 = vmatprep.subr.mxu0 0.0
        %1291 = vmatpush1.msra.mxu0 0.0
        %1292 = vmatprep.subr.mxu0 0.0
        %1293 = vmatpush1.msra.mxu0 0.0
        %1294 = vmatprep.subr.mxu0 0.0
        %1295 = vmatpush1.msra.mxu0 0.0
        %1296 = vmatprep.subr.mxu0 0.0
        %1297 = vmatpush1.msra.mxu0 0.0
        %1298 = vmatprep.subr.mxu0 0.0
        %1299 = vmatpush1.msra.mxu0 0.0
        %1300 = vmatprep.subr.mxu0 0.0
        %1301 = vmatpush1.msra.mxu0 0.0
        %1302 = vmatprep.subr.mxu0 0.0
        %1303 = vmatpush1.msra.mxu0 0.0
        %1304 = vmatprep.subr.mxu0 0.0
        %1305 = vmatpush1.msra.mxu0 0.0
        %1306 = vmatprep.subr.mxu0 0.0
        %1307 = vmatpush1.msra.mxu0 0.0
        %1308 = vmatprep.subr.mxu0 0.0
        %1309 = vmatpush1.msra.mxu0 0.0
        %1310 = vmatprep.subr.mxu0 0.0
        %1311 = vmatpush1.msra.mxu0 0.0
        %1312 = vmatprep.subr.mxu0 0.0
        %1313 = vmatpush1.msra.mxu0 0.0
        %1314 = vmatprep.subr.mxu0 0.0
        %1315 = vmatpush1.msra.mxu0 %v844
        %1316 = vmatprep.subr.mxu0 0.0
        %1317 = vmatpush2.msra.mxu0 0.0
        %1318 = vmatprep.subr.mxu0 0.0
        %1319 = vmatpush2.msra.mxu0 0.0
        %1320 = vmatprep.subr.mxu0 0.0
        %1321 = vmatpush2.msra.mxu0 0.0
        %1322 = vmatprep.subr.mxu0 0.0
        %1323 = vmatpush2.msra.mxu0 0.0
        %1324 = vmatprep.subr.mxu0 0.0
        %1325 = vmatpush2.msra.mxu0 0.0
        %1326 = vmatprep.subr.mxu0 0.0
        %1327 = vmatpush2.msra.mxu0 0.0
        %1328 = vmatprep.subr.mxu0 0.0
        %1329 = vmatpush2.msra.mxu0 0.0
        %1330 = vmatprep.subr.mxu0 0.0
        %1331 = vmatpush2.msra.mxu0 0.0
        %1332 = vmatprep.subr.mxu0 0.0
        %1333 = vmatpush2.msra.mxu0 0.0
        %1334 = vmatprep.subr.mxu0 0.0
        %1335 = vmatpush2.msra.mxu0 0.0
        %1336 = vmatprep.subr.mxu0 0.0
        %1337 = vmatpush2.msra.mxu0 0.0
        %1338 = vmatprep.subr.mxu0 0.0
        %1339 = vmatpush2.msra.mxu0 0.0
        %1340 = vmatprep.subr.mxu0 0.0
        %1341 = vmatpush2.msra.mxu0 0.0
        %1342 = vmatprep.subr.mxu0 0.0
        %1343 = vmatpush2.msra.mxu0 0.0
        %1344 = vmatprep.subr.mxu0 0.0
        %1345 = vmatpush2.msra.mxu0 0.0
        %1346 = vmatprep.subr.mxu0 0.0
        %1347 = vmatpush2.msra.mxu0 0.0
        %1348 = vmatprep.mubr.f32.mxu0 0.0
        %1349 = vmatmul.mubr.f32.gmra.mxu0 %v1282
        %v1350 = vpop.f32.mrf.mxu0
        %v1351 = vadd.f32 %v764, %v1350
        %v1352 = vpop.f32.mrf.mxu0
        %1353 = vdwg.mxu0
        %v1355 = vsel %vm251, %v238, 0
        %1357 = vmatprep.subr.mxu0 0.0
        %1358 = vmatpush1.msra.mxu0 0.0
        %1359 = vmatprep.subr.mxu0 0.0
        %1360 = vmatpush1.msra.mxu0 0.0
        %1361 = vmatprep.subr.mxu0 0.0
        %1362 = vmatpush1.msra.mxu0 0.0
        %1363 = vmatprep.subr.mxu0 0.0
        %1364 = vmatpush1.msra.mxu0 0.0
        %1365 = vmatprep.subr.mxu0 0.0
        %1366 = vmatpush1.msra.mxu0 0.0
        %1367 = vmatprep.subr.mxu0 0.0
        %1368 = vmatpush1.msra.mxu0 0.0
        %1369 = vmatprep.subr.mxu0 0.0
        %1370 = vmatpush1.msra.mxu0 0.0
        %1371 = vmatprep.subr.mxu0 0.0
        %1372 = vmatpush1.msra.mxu0 0.0
        %1373 = vmatprep.subr.mxu0 0.0
        %1374 = vmatpush1.msra.mxu0 0.0
        %1375 = vmatprep.subr.mxu0 0.0
        %1376 = vmatpush1.msra.mxu0 0.0
        %1377 = vmatprep.subr.mxu0 0.0
        %1378 = vmatpush1.msra.mxu0 0.0
        %1379 = vmatprep.subr.mxu0 0.0
        %1380 = vmatpush1.msra.mxu0 0.0
        %1381 = vmatprep.subr.mxu0 0.0
        %1382 = vmatpush1.msra.mxu0 0.0
        %1383 = vmatprep.subr.mxu0 0.0
        %1384 = vmatpush1.msra.mxu0 0.0
        %1385 = vmatprep.subr.mxu0 0.0
        %1386 = vmatpush1.msra.mxu0 0.0
        %1387 = vmatprep.subr.mxu0 0.0
        %1388 = vmatpush1.msra.mxu0 %v844
        %1389 = vmatprep.subr.mxu0 0.0
        %1390 = vmatpush2.msra.mxu0 0.0
        %1391 = vmatprep.subr.mxu0 0.0
        %1392 = vmatpush2.msra.mxu0 0.0
        %1393 = vmatprep.subr.mxu0 0.0
        %1394 = vmatpush2.msra.mxu0 0.0
        %1395 = vmatprep.subr.mxu0 0.0
        %1396 = vmatpush2.msra.mxu0 0.0
        %1397 = vmatprep.subr.mxu0 0.0
        %1398 = vmatpush2.msra.mxu0 0.0
        %1399 = vmatprep.subr.mxu0 0.0
        %1400 = vmatpush2.msra.mxu0 0.0
        %1401 = vmatprep.subr.mxu0 0.0
        %1402 = vmatpush2.msra.mxu0 0.0
        %1403 = vmatprep.subr.mxu0 0.0
        %1404 = vmatpush2.msra.mxu0 0.0
        %1405 = vmatprep.subr.mxu0 0.0
        %1406 = vmatpush2.msra.mxu0 0.0
        %1407 = vmatprep.subr.mxu0 0.0
        %1408 = vmatpush2.msra.mxu0 0.0
        %1409 = vmatprep.subr.mxu0 0.0
        %1410 = vmatpush2.msra.mxu0 0.0
        %1411 = vmatprep.subr.mxu0 0.0
        %1412 = vmatpush2.msra.mxu0 0.0
        %1413 = vmatprep.subr.mxu0 0.0
        %1414 = vmatpush2.msra.mxu0 0.0
        %1415 = vmatprep.subr.mxu0 0.0
        %1416 = vmatpush2.msra.mxu0 0.0
        %1417 = vmatprep.subr.mxu0 0.0
        %1418 = vmatpush2.msra.mxu0 0.0
        %1419 = vmatprep.subr.mxu0 0.0
        %1420 = vmatpush2.msra.mxu0 0.0
        %1421 = vmatprep.mubr.f32.mxu0 0.0
        %1422 = vmatmul.mubr.f32.gmra.mxu0 %v1355
        %v1423 = vpop.f32.mrf.mxu0
        %v1424 = vadd.f32 %v837, %v1423
        %v1425 = vpop.f32.mrf.mxu0
        %1426 = vdwg.mxu0
        %s1427 = scalar_lea.vmem %s222, 288
        %v1428 = vld [vmem:[%s1427] sm:$0xff]
        %v1429 = vld [vmem:[%s1427 + $0x8] sm:$0xff]
        %v1430 = vld [vmem:[%s1427 + $0x10] sm:$0xff]
        %v1431 = vld [vmem:[%s1427 + $0x18] sm:$0xff]
        %v1432 = vld [vmem:[%s1427 + $0x20] sm:$0xff]
        %v1433 = vld [vmem:[%s1427 + $0x28] sm:$0xff]
        %v1434 = vld [vmem:[%s1427 + $0x30] sm:$0xff]
        %v1435 = vld [vmem:[%s1427 + $0x38] sm:$0xff]
        %s1436 = scalar_lea.vmem %s227, 8
        %v1437 = vld [vmem:[%s1436] sm:$0xf]
        %v1439 = vsel %vm251, %v1428, 0
        %v1442 = vsel %vm255, %v1437, 0
        %1444 = vmatprep.subr.mxu0 0.0
        %1445 = vmatpush1.msra.mxu0 0.0
        %1446 = vmatprep.subr.mxu0 0.0
        %1447 = vmatpush1.msra.mxu0 0.0
        %1448 = vmatprep.subr.mxu0 0.0
        %1449 = vmatpush1.msra.mxu0 0.0
        %1450 = vmatprep.subr.mxu0 0.0
        %1451 = vmatpush1.msra.mxu0 0.0
        %1452 = vmatprep.subr.mxu0 0.0
        %1453 = vmatpush1.msra.mxu0 0.0
        %1454 = vmatprep.subr.mxu0 0.0
        %1455 = vmatpush1.msra.mxu0 0.0
        %1456 = vmatprep.subr.mxu0 0.0
        %1457 = vmatpush1.msra.mxu0 0.0
        %1458 = vmatprep.subr.mxu0 0.0
        %1459 = vmatpush1.msra.mxu0 0.0
        %1460 = vmatprep.subr.mxu0 0.0
        %1461 = vmatpush1.msra.mxu0 0.0
        %1462 = vmatprep.subr.mxu0 0.0
        %1463 = vmatpush1.msra.mxu0 0.0
        %1464 = vmatprep.subr.mxu0 0.0
        %1465 = vmatpush1.msra.mxu0 0.0
        %1466 = vmatprep.subr.mxu0 0.0
        %1467 = vmatpush1.msra.mxu0 0.0
        %1468 = vmatprep.subr.mxu0 0.0
        %1469 = vmatpush1.msra.mxu0 0.0
        %1470 = vmatprep.subr.mxu0 0.0
        %1471 = vmatpush1.msra.mxu0 0.0
        %1472 = vmatprep.subr.mxu0 0.0
        %1473 = vmatpush1.msra.mxu0 0.0
        %1474 = vmatprep.subr.mxu0 0.0
        %1475 = vmatpush1.msra.mxu0 %v1442
        %1476 = vmatprep.subr.mxu0 0.0
        %1477 = vmatpush2.msra.mxu0 0.0
        %1478 = vmatprep.subr.mxu0 0.0
        %1479 = vmatpush2.msra.mxu0 0.0
        %1480 = vmatprep.subr.mxu0 0.0
        %1481 = vmatpush2.msra.mxu0 0.0
        %1482 = vmatprep.subr.mxu0 0.0
        %1483 = vmatpush2.msra.mxu0 0.0
        %1484 = vmatprep.subr.mxu0 0.0
        %1485 = vmatpush2.msra.mxu0 0.0
        %1486 = vmatprep.subr.mxu0 0.0
        %1487 = vmatpush2.msra.mxu0 0.0
        %1488 = vmatprep.subr.mxu0 0.0
        %1489 = vmatpush2.msra.mxu0 0.0
        %1490 = vmatprep.subr.mxu0 0.0
        %1491 = vmatpush2.msra.mxu0 0.0
        %1492 = vmatprep.subr.mxu0 0.0
        %1493 = vmatpush2.msra.mxu0 0.0
        %1494 = vmatprep.subr.mxu0 0.0
        %1495 = vmatpush2.msra.mxu0 0.0
        %1496 = vmatprep.subr.mxu0 0.0
        %1497 = vmatpush2.msra.mxu0 0.0
        %1498 = vmatprep.subr.mxu0 0.0
        %1499 = vmatpush2.msra.mxu0 0.0
        %1500 = vmatprep.subr.mxu0 0.0
        %1501 = vmatpush2.msra.mxu0 0.0
        %1502 = vmatprep.subr.mxu0 0.0
        %1503 = vmatpush2.msra.mxu0 0.0
        %1504 = vmatprep.subr.mxu0 0.0
        %1505 = vmatpush2.msra.mxu0 0.0
        %1506 = vmatprep.subr.mxu0 0.0
        %1507 = vmatpush2.msra.mxu0 0.0
        %1508 = vmatprep.mubr.f32.mxu0 0.0
        %1509 = vmatmul.mubr.f32.gmra.mxu0 %v1439
        %v1510 = vpop.f32.mrf.mxu0
        %v1511 = vadd.f32 0.0, %v1510
        %v1512 = vpop.f32.mrf.mxu0
        %1513 = vdwg.mxu0
        %v1515 = vsel %vm251, %v1429, 0
        %1517 = vmatprep.subr.mxu0 0.0
        %1518 = vmatpush1.msra.mxu0 0.0
        %1519 = vmatprep.subr.mxu0 0.0
        %1520 = vmatpush1.msra.mxu0 0.0
        %1521 = vmatprep.subr.mxu0 0.0
        %1522 = vmatpush1.msra.mxu0 0.0
        %1523 = vmatprep.subr.mxu0 0.0
        %1524 = vmatpush1.msra.mxu0 0.0
        %1525 = vmatprep.subr.mxu0 0.0
        %1526 = vmatpush1.msra.mxu0 0.0
        %1527 = vmatprep.subr.mxu0 0.0
        %1528 = vmatpush1.msra.mxu0 0.0
        %1529 = vmatprep.subr.mxu0 0.0
        %1530 = vmatpush1.msra.mxu0 0.0
        %1531 = vmatprep.subr.mxu0 0.0
        %1532 = vmatpush1.msra.mxu0 0.0
        %1533 = vmatprep.subr.mxu0 0.0
        %1534 = vmatpush1.msra.mxu0 0.0
        %1535 = vmatprep.subr.mxu0 0.0
        %1536 = vmatpush1.msra.mxu0 0.0
        %1537 = vmatprep.subr.mxu0 0.0
        %1538 = vmatpush1.msra.mxu0 0.0
        %1539 = vmatprep.subr.mxu0 0.0
        %1540 = vmatpush1.msra.mxu0 0.0
        %1541 = vmatprep.subr.mxu0 0.0
        %1542 = vmatpush1.msra.mxu0 0.0
        %1543 = vmatprep.subr.mxu0 0.0
        %1544 = vmatpush1.msra.mxu0 0.0
        %1545 = vmatprep.subr.mxu0 0.0
        %1546 = vmatpush1.msra.mxu0 0.0
        %1547 = vmatprep.subr.mxu0 0.0
        %1548 = vmatpush1.msra.mxu0 %v1442
        %1549 = vmatprep.subr.mxu0 0.0
        %1550 = vmatpush2.msra.mxu0 0.0
        %1551 = vmatprep.subr.mxu0 0.0
        %1552 = vmatpush2.msra.mxu0 0.0
        %1553 = vmatprep.subr.mxu0 0.0
        %1554 = vmatpush2.msra.mxu0 0.0
        %1555 = vmatprep.subr.mxu0 0.0
        %1556 = vmatpush2.msra.mxu0 0.0
        %1557 = vmatprep.subr.mxu0 0.0
        %1558 = vmatpush2.msra.mxu0 0.0
        %1559 = vmatprep.subr.mxu0 0.0
        %1560 = vmatpush2.msra.mxu0 0.0
        %1561 = vmatprep.subr.mxu0 0.0
        %1562 = vmatpush2.msra.mxu0 0.0
        %1563 = vmatprep.subr.mxu0 0.0
        %1564 = vmatpush2.msra.mxu0 0.0
        %1565 = vmatprep.subr.mxu0 0.0
        %1566 = vmatpush2.msra.mxu0 0.0
        %1567 = vmatprep.subr.mxu0 0.0
        %1568 = vmatpush2.msra.mxu0 0.0
        %1569 = vmatprep.subr.mxu0 0.0
        %1570 = vmatpush2.msra.mxu0 0.0
        %1571 = vmatprep.subr.mxu0 0.0
        %1572 = vmatpush2.msra.mxu0 0.0
        %1573 = vmatprep.subr.mxu0 0.0
        %1574 = vmatpush2.msra.mxu0 0.0
        %1575 = vmatprep.subr.mxu0 0.0
        %1576 = vmatpush2.msra.mxu0 0.0
        %1577 = vmatprep.subr.mxu0 0.0
        %1578 = vmatpush2.msra.mxu0 0.0
        %1579 = vmatprep.subr.mxu0 0.0
        %1580 = vmatpush2.msra.mxu0 0.0
        %1581 = vmatprep.mubr.f32.mxu0 0.0
        %1582 = vmatmul.mubr.f32.gmra.mxu0 %v1515
        %v1583 = vpop.f32.mrf.mxu0
        %v1584 = vadd.f32 0.0, %v1583
        %v1585 = vpop.f32.mrf.mxu0
        %1586 = vdwg.mxu0
        %v1588 = vsel %vm251, %v1430, 0
        %1590 = vmatprep.subr.mxu0 0.0
        %1591 = vmatpush1.msra.mxu0 0.0
        %1592 = vmatprep.subr.mxu0 0.0
        %1593 = vmatpush1.msra.mxu0 0.0
        %1594 = vmatprep.subr.mxu0 0.0
        %1595 = vmatpush1.msra.mxu0 0.0
        %1596 = vmatprep.subr.mxu0 0.0
        %1597 = vmatpush1.msra.mxu0 0.0
        %1598 = vmatprep.subr.mxu0 0.0
        %1599 = vmatpush1.msra.mxu0 0.0
        %1600 = vmatprep.subr.mxu0 0.0
        %1601 = vmatpush1.msra.mxu0 0.0
        %1602 = vmatprep.subr.mxu0 0.0
        %1603 = vmatpush1.msra.mxu0 0.0
        %1604 = vmatprep.subr.mxu0 0.0
        %1605 = vmatpush1.msra.mxu0 0.0
        %1606 = vmatprep.subr.mxu0 0.0
        %1607 = vmatpush1.msra.mxu0 0.0
        %1608 = vmatprep.subr.mxu0 0.0
        %1609 = vmatpush1.msra.mxu0 0.0
        %1610 = vmatprep.subr.mxu0 0.0
        %1611 = vmatpush1.msra.mxu0 0.0
        %1612 = vmatprep.subr.mxu0 0.0
        %1613 = vmatpush1.msra.mxu0 0.0
        %1614 = vmatprep.subr.mxu0 0.0
        %1615 = vmatpush1.msra.mxu0 0.0
        %1616 = vmatprep.subr.mxu0 0.0
        %1617 = vmatpush1.msra.mxu0 0.0
        %1618 = vmatprep.subr.mxu0 0.0
        %1619 = vmatpush1.msra.mxu0 0.0
        %1620 = vmatprep.subr.mxu0 0.0
        %1621 = vmatpush1.msra.mxu0 %v1442
        %1622 = vmatprep.subr.mxu0 0.0
        %1623 = vmatpush2.msra.mxu0 0.0
        %1624 = vmatprep.subr.mxu0 0.0
        %1625 = vmatpush2.msra.mxu0 0.0
        %1626 = vmatprep.subr.mxu0 0.0
        %1627 = vmatpush2.msra.mxu0 0.0
        %1628 = vmatprep.subr.mxu0 0.0
        %1629 = vmatpush2.msra.mxu0 0.0
        %1630 = vmatprep.subr.mxu0 0.0
        %1631 = vmatpush2.msra.mxu0 0.0
        %1632 = vmatprep.subr.mxu0 0.0
        %1633 = vmatpush2.msra.mxu0 0.0
        %1634 = vmatprep.subr.mxu0 0.0
        %1635 = vmatpush2.msra.mxu0 0.0
        %1636 = vmatprep.subr.mxu0 0.0
        %1637 = vmatpush2.msra.mxu0 0.0
        %1638 = vmatprep.subr.mxu0 0.0
        %1639 = vmatpush2.msra.mxu0 0.0
        %1640 = vmatprep.subr.mxu0 0.0
        %1641 = vmatpush2.msra.mxu0 0.0
        %1642 = vmatprep.subr.mxu0 0.0
        %1643 = vmatpush2.msra.mxu0 0.0
        %1644 = vmatprep.subr.mxu0 0.0
        %1645 = vmatpush2.msra.mxu0 0.0
        %1646 = vmatprep.subr.mxu0 0.0
        %1647 = vmatpush2.msra.mxu0 0.0
        %1648 = vmatprep.subr.mxu0 0.0
        %1649 = vmatpush2.msra.mxu0 0.0
        %1650 = vmatprep.subr.mxu0 0.0
        %1651 = vmatpush2.msra.mxu0 0.0
        %1652 = vmatprep.subr.mxu0 0.0
        %1653 = vmatpush2.msra.mxu0 0.0
        %1654 = vmatprep.mubr.f32.mxu0 0.0
        %1655 = vmatmul.mubr.f32.gmra.mxu0 %v1588
        %v1656 = vpop.f32.mrf.mxu0
        %v1657 = vadd.f32 0.0, %v1656
        %v1658 = vpop.f32.mrf.mxu0
        %1659 = vdwg.mxu0
        %v1661 = vsel %vm251, %v1431, 0
        %1663 = vmatprep.subr.mxu0 0.0
        %1664 = vmatpush1.msra.mxu0 0.0
        %1665 = vmatprep.subr.mxu0 0.0
        %1666 = vmatpush1.msra.mxu0 0.0
        %1667 = vmatprep.subr.mxu0 0.0
        %1668 = vmatpush1.msra.mxu0 0.0
        %1669 = vmatprep.subr.mxu0 0.0
        %1670 = vmatpush1.msra.mxu0 0.0
        %1671 = vmatprep.subr.mxu0 0.0
        %1672 = vmatpush1.msra.mxu0 0.0
        %1673 = vmatprep.subr.mxu0 0.0
        %1674 = vmatpush1.msra.mxu0 0.0
        %1675 = vmatprep.subr.mxu0 0.0
        %1676 = vmatpush1.msra.mxu0 0.0
        %1677 = vmatprep.subr.mxu0 0.0
        %1678 = vmatpush1.msra.mxu0 0.0
        %1679 = vmatprep.subr.mxu0 0.0
        %1680 = vmatpush1.msra.mxu0 0.0
        %1681 = vmatprep.subr.mxu0 0.0
        %1682 = vmatpush1.msra.mxu0 0.0
        %1683 = vmatprep.subr.mxu0 0.0
        %1684 = vmatpush1.msra.mxu0 0.0
        %1685 = vmatprep.subr.mxu0 0.0
        %1686 = vmatpush1.msra.mxu0 0.0
        %1687 = vmatprep.subr.mxu0 0.0
        %1688 = vmatpush1.msra.mxu0 0.0
        %1689 = vmatprep.subr.mxu0 0.0
        %1690 = vmatpush1.msra.mxu0 0.0
        %1691 = vmatprep.subr.mxu0 0.0
        %1692 = vmatpush1.msra.mxu0 0.0
        %1693 = vmatprep.subr.mxu0 0.0
        %1694 = vmatpush1.msra.mxu0 %v1442
        %1695 = vmatprep.subr.mxu0 0.0
        %1696 = vmatpush2.msra.mxu0 0.0
        %1697 = vmatprep.subr.mxu0 0.0
        %1698 = vmatpush2.msra.mxu0 0.0
        %1699 = vmatprep.subr.mxu0 0.0
        %1700 = vmatpush2.msra.mxu0 0.0
        %1701 = vmatprep.subr.mxu0 0.0
        %1702 = vmatpush2.msra.mxu0 0.0
        %1703 = vmatprep.subr.mxu0 0.0
        %1704 = vmatpush2.msra.mxu0 0.0
        %1705 = vmatprep.subr.mxu0 0.0
        %1706 = vmatpush2.msra.mxu0 0.0
        %1707 = vmatprep.subr.mxu0 0.0
        %1708 = vmatpush2.msra.mxu0 0.0
        %1709 = vmatprep.subr.mxu0 0.0
        %1710 = vmatpush2.msra.mxu0 0.0
        %1711 = vmatprep.subr.mxu0 0.0
        %1712 = vmatpush2.msra.mxu0 0.0
        %1713 = vmatprep.subr.mxu0 0.0
        %1714 = vmatpush2.msra.mxu0 0.0
        %1715 = vmatprep.subr.mxu0 0.0
        %1716 = vmatpush2.msra.mxu0 0.0
        %1717 = vmatprep.subr.mxu0 0.0
        %1718 = vmatpush2.msra.mxu0 0.0
        %1719 = vmatprep.subr.mxu0 0.0
        %1720 = vmatpush2.msra.mxu0 0.0
        %1721 = vmatprep.subr.mxu0 0.0
        %1722 = vmatpush2.msra.mxu0 0.0
        %1723 = vmatprep.subr.mxu0 0.0
        %1724 = vmatpush2.msra.mxu0 0.0
        %1725 = vmatprep.subr.mxu0 0.0
        %1726 = vmatpush2.msra.mxu0 0.0
        %1727 = vmatprep.mubr.f32.mxu0 0.0
        %1728 = vmatmul.mubr.f32.gmra.mxu0 %v1661
        %v1729 = vpop.f32.mrf.mxu0
        %v1730 = vadd.f32 0.0, %v1729
        %v1731 = vpop.f32.mrf.mxu0
        %1732 = vdwg.mxu0
        %v1734 = vsel %vm251, %v1432, 0
        %1736 = vmatprep.subr.mxu0 0.0
        %1737 = vmatpush1.msra.mxu0 0.0
        %1738 = vmatprep.subr.mxu0 0.0
        %1739 = vmatpush1.msra.mxu0 0.0
        %1740 = vmatprep.subr.mxu0 0.0
        %1741 = vmatpush1.msra.mxu0 0.0
        %1742 = vmatprep.subr.mxu0 0.0
        %1743 = vmatpush1.msra.mxu0 0.0
        %1744 = vmatprep.subr.mxu0 0.0
        %1745 = vmatpush1.msra.mxu0 0.0
        %1746 = vmatprep.subr.mxu0 0.0
        %1747 = vmatpush1.msra.mxu0 0.0
        %1748 = vmatprep.subr.mxu0 0.0
        %1749 = vmatpush1.msra.mxu0 0.0
        %1750 = vmatprep.subr.mxu0 0.0
        %1751 = vmatpush1.msra.mxu0 0.0
        %1752 = vmatprep.subr.mxu0 0.0
        %1753 = vmatpush1.msra.mxu0 0.0
        %1754 = vmatprep.subr.mxu0 0.0
        %1755 = vmatpush1.msra.mxu0 0.0
        %1756 = vmatprep.subr.mxu0 0.0
        %1757 = vmatpush1.msra.mxu0 0.0
        %1758 = vmatprep.subr.mxu0 0.0
        %1759 = vmatpush1.msra.mxu0 0.0
        %1760 = vmatprep.subr.mxu0 0.0
        %1761 = vmatpush1.msra.mxu0 0.0
        %1762 = vmatprep.subr.mxu0 0.0
        %1763 = vmatpush1.msra.mxu0 0.0
        %1764 = vmatprep.subr.mxu0 0.0
        %1765 = vmatpush1.msra.mxu0 0.0
        %1766 = vmatprep.subr.mxu0 0.0
        %1767 = vmatpush1.msra.mxu0 %v1442
        %1768 = vmatprep.subr.mxu0 0.0
        %1769 = vmatpush2.msra.mxu0 0.0
        %1770 = vmatprep.subr.mxu0 0.0
        %1771 = vmatpush2.msra.mxu0 0.0
        %1772 = vmatprep.subr.mxu0 0.0
        %1773 = vmatpush2.msra.mxu0 0.0
        %1774 = vmatprep.subr.mxu0 0.0
        %1775 = vmatpush2.msra.mxu0 0.0
        %1776 = vmatprep.subr.mxu0 0.0
        %1777 = vmatpush2.msra.mxu0 0.0
        %1778 = vmatprep.subr.mxu0 0.0
        %1779 = vmatpush2.msra.mxu0 0.0
        %1780 = vmatprep.subr.mxu0 0.0
        %1781 = vmatpush2.msra.mxu0 0.0
        %1782 = vmatprep.subr.mxu0 0.0
        %1783 = vmatpush2.msra.mxu0 0.0
        %1784 = vmatprep.subr.mxu0 0.0
        %1785 = vmatpush2.msra.mxu0 0.0
        %1786 = vmatprep.subr.mxu0 0.0
        %1787 = vmatpush2.msra.mxu0 0.0
        %1788 = vmatprep.subr.mxu0 0.0
        %1789 = vmatpush2.msra.mxu0 0.0
        %1790 = vmatprep.subr.mxu0 0.0
        %1791 = vmatpush2.msra.mxu0 0.0
        %1792 = vmatprep.subr.mxu0 0.0
        %1793 = vmatpush2.msra.mxu0 0.0
        %1794 = vmatprep.subr.mxu0 0.0
        %1795 = vmatpush2.msra.mxu0 0.0
        %1796 = vmatprep.subr.mxu0 0.0
        %1797 = vmatpush2.msra.mxu0 0.0
        %1798 = vmatprep.subr.mxu0 0.0
        %1799 = vmatpush2.msra.mxu0 0.0
        %1800 = vmatprep.mubr.f32.mxu0 0.0
        %1801 = vmatmul.mubr.f32.gmra.mxu0 %v1734
        %v1802 = vpop.f32.mrf.mxu0
        %v1803 = vadd.f32 0.0, %v1802
        %v1804 = vpop.f32.mrf.mxu0
        %1805 = vdwg.mxu0
        %v1807 = vsel %vm251, %v1433, 0
        %1809 = vmatprep.subr.mxu0 0.0
        %1810 = vmatpush1.msra.mxu0 0.0
        %1811 = vmatprep.subr.mxu0 0.0
        %1812 = vmatpush1.msra.mxu0 0.0
        %1813 = vmatprep.subr.mxu0 0.0
        %1814 = vmatpush1.msra.mxu0 0.0
        %1815 = vmatprep.subr.mxu0 0.0
        %1816 = vmatpush1.msra.mxu0 0.0
        %1817 = vmatprep.subr.mxu0 0.0
        %1818 = vmatpush1.msra.mxu0 0.0
        %1819 = vmatprep.subr.mxu0 0.0
        %1820 = vmatpush1.msra.mxu0 0.0
        %1821 = vmatprep.subr.mxu0 0.0
        %1822 = vmatpush1.msra.mxu0 0.0
        %1823 = vmatprep.subr.mxu0 0.0
        %1824 = vmatpush1.msra.mxu0 0.0
        %1825 = vmatprep.subr.mxu0 0.0
        %1826 = vmatpush1.msra.mxu0 0.0
        %1827 = vmatprep.subr.mxu0 0.0
        %1828 = vmatpush1.msra.mxu0 0.0
        %1829 = vmatprep.subr.mxu0 0.0
        %1830 = vmatpush1.msra.mxu0 0.0
        %1831 = vmatprep.subr.mxu0 0.0
        %1832 = vmatpush1.msra.mxu0 0.0
        %1833 = vmatprep.subr.mxu0 0.0
        %1834 = vmatpush1.msra.mxu0 0.0
        %1835 = vmatprep.subr.mxu0 0.0
        %1836 = vmatpush1.msra.mxu0 0.0
        %1837 = vmatprep.subr.mxu0 0.0
        %1838 = vmatpush1.msra.mxu0 0.0
        %1839 = vmatprep.subr.mxu0 0.0
        %1840 = vmatpush1.msra.mxu0 %v1442
        %1841 = vmatprep.subr.mxu0 0.0
        %1842 = vmatpush2.msra.mxu0 0.0
        %1843 = vmatprep.subr.mxu0 0.0
        %1844 = vmatpush2.msra.mxu0 0.0
        %1845 = vmatprep.subr.mxu0 0.0
        %1846 = vmatpush2.msra.mxu0 0.0
        %1847 = vmatprep.subr.mxu0 0.0
        %1848 = vmatpush2.msra.mxu0 0.0
        %1849 = vmatprep.subr.mxu0 0.0
        %1850 = vmatpush2.msra.mxu0 0.0
        %1851 = vmatprep.subr.mxu0 0.0
        %1852 = vmatpush2.msra.mxu0 0.0
        %1853 = vmatprep.subr.mxu0 0.0
        %1854 = vmatpush2.msra.mxu0 0.0
        %1855 = vmatprep.subr.mxu0 0.0
        %1856 = vmatpush2.msra.mxu0 0.0
        %1857 = vmatprep.subr.mxu0 0.0
        %1858 = vmatpush2.msra.mxu0 0.0
        %1859 = vmatprep.subr.mxu0 0.0
        %1860 = vmatpush2.msra.mxu0 0.0
        %1861 = vmatprep.subr.mxu0 0.0
        %1862 = vmatpush2.msra.mxu0 0.0
        %1863 = vmatprep.subr.mxu0 0.0
        %1864 = vmatpush2.msra.mxu0 0.0
        %1865 = vmatprep.subr.mxu0 0.0
        %1866 = vmatpush2.msra.mxu0 0.0
        %1867 = vmatprep.subr.mxu0 0.0
        %1868 = vmatpush2.msra.mxu0 0.0
        %1869 = vmatprep.subr.mxu0 0.0
        %1870 = vmatpush2.msra.mxu0 0.0
        %1871 = vmatprep.subr.mxu0 0.0
        %1872 = vmatpush2.msra.mxu0 0.0
        %1873 = vmatprep.mubr.f32.mxu0 0.0
        %1874 = vmatmul.mubr.f32.gmra.mxu0 %v1807
        %v1875 = vpop.f32.mrf.mxu0
        %v1876 = vadd.f32 0.0, %v1875
        %v1877 = vpop.f32.mrf.mxu0
        %1878 = vdwg.mxu0
        %v1880 = vsel %vm251, %v1434, 0
        %1882 = vmatprep.subr.mxu0 0.0
        %1883 = vmatpush1.msra.mxu0 0.0
        %1884 = vmatprep.subr.mxu0 0.0
        %1885 = vmatpush1.msra.mxu0 0.0
        %1886 = vmatprep.subr.mxu0 0.0
        %1887 = vmatpush1.msra.mxu0 0.0
        %1888 = vmatprep.subr.mxu0 0.0
        %1889 = vmatpush1.msra.mxu0 0.0
        %1890 = vmatprep.subr.mxu0 0.0
        %1891 = vmatpush1.msra.mxu0 0.0
        %1892 = vmatprep.subr.mxu0 0.0
        %1893 = vmatpush1.msra.mxu0 0.0
        %1894 = vmatprep.subr.mxu0 0.0
        %1895 = vmatpush1.msra.mxu0 0.0
        %1896 = vmatprep.subr.mxu0 0.0
        %1897 = vmatpush1.msra.mxu0 0.0
        %1898 = vmatprep.subr.mxu0 0.0
        %1899 = vmatpush1.msra.mxu0 0.0
        %1900 = vmatprep.subr.mxu0 0.0
        %1901 = vmatpush1.msra.mxu0 0.0
        %1902 = vmatprep.subr.mxu0 0.0
        %1903 = vmatpush1.msra.mxu0 0.0
        %1904 = vmatprep.subr.mxu0 0.0
        %1905 = vmatpush1.msra.mxu0 0.0
        %1906 = vmatprep.subr.mxu0 0.0
        %1907 = vmatpush1.msra.mxu0 0.0
        %1908 = vmatprep.subr.mxu0 0.0
        %1909 = vmatpush1.msra.mxu0 0.0
        %1910 = vmatprep.subr.mxu0 0.0
        %1911 = vmatpush1.msra.mxu0 0.0
        %1912 = vmatprep.subr.mxu0 0.0
        %1913 = vmatpush1.msra.mxu0 %v1442
        %1914 = vmatprep.subr.mxu0 0.0
        %1915 = vmatpush2.msra.mxu0 0.0
        %1916 = vmatprep.subr.mxu0 0.0
        %1917 = vmatpush2.msra.mxu0 0.0
        %1918 = vmatprep.subr.mxu0 0.0
        %1919 = vmatpush2.msra.mxu0 0.0
        %1920 = vmatprep.subr.mxu0 0.0
        %1921 = vmatpush2.msra.mxu0 0.0
        %1922 = vmatprep.subr.mxu0 0.0
        %1923 = vmatpush2.msra.mxu0 0.0
        %1924 = vmatprep.subr.mxu0 0.0
        %1925 = vmatpush2.msra.mxu0 0.0
        %1926 = vmatprep.subr.mxu0 0.0
        %1927 = vmatpush2.msra.mxu0 0.0
        %1928 = vmatprep.subr.mxu0 0.0
        %1929 = vmatpush2.msra.mxu0 0.0
        %1930 = vmatprep.subr.mxu0 0.0
        %1931 = vmatpush2.msra.mxu0 0.0
        %1932 = vmatprep.subr.mxu0 0.0
        %1933 = vmatpush2.msra.mxu0 0.0
        %1934 = vmatprep.subr.mxu0 0.0
        %1935 = vmatpush2.msra.mxu0 0.0
        %1936 = vmatprep.subr.mxu0 0.0
        %1937 = vmatpush2.msra.mxu0 0.0
        %1938 = vmatprep.subr.mxu0 0.0
        %1939 = vmatpush2.msra.mxu0 0.0
        %1940 = vmatprep.subr.mxu0 0.0
        %1941 = vmatpush2.msra.mxu0 0.0
        %1942 = vmatprep.subr.mxu0 0.0
        %1943 = vmatpush2.msra.mxu0 0.0
        %1944 = vmatprep.subr.mxu0 0.0
        %1945 = vmatpush2.msra.mxu0 0.0
        %1946 = vmatprep.mubr.f32.mxu0 0.0
        %1947 = vmatmul.mubr.f32.gmra.mxu0 %v1880
        %v1948 = vpop.f32.mrf.mxu0
        %v1949 = vadd.f32 0.0, %v1948
        %v1950 = vpop.f32.mrf.mxu0
        %1951 = vdwg.mxu0
        %v1953 = vsel %vm251, %v1435, 0
        %1955 = vmatprep.subr.mxu0 0.0
        %1956 = vmatpush1.msra.mxu0 0.0
        %1957 = vmatprep.subr.mxu0 0.0
        %1958 = vmatpush1.msra.mxu0 0.0
        %1959 = vmatprep.subr.mxu0 0.0
        %1960 = vmatpush1.msra.mxu0 0.0
        %1961 = vmatprep.subr.mxu0 0.0
        %1962 = vmatpush1.msra.mxu0 0.0
        %1963 = vmatprep.subr.mxu0 0.0
        %1964 = vmatpush1.msra.mxu0 0.0
        %1965 = vmatprep.subr.mxu0 0.0
        %1966 = vmatpush1.msra.mxu0 0.0
        %1967 = vmatprep.subr.mxu0 0.0
        %1968 = vmatpush1.msra.mxu0 0.0
        %1969 = vmatprep.subr.mxu0 0.0
        %1970 = vmatpush1.msra.mxu0 0.0
        %1971 = vmatprep.subr.mxu0 0.0
        %1972 = vmatpush1.msra.mxu0 0.0
        %1973 = vmatprep.subr.mxu0 0.0
        %1974 = vmatpush1.msra.mxu0 0.0
        %1975 = vmatprep.subr.mxu0 0.0
        %1976 = vmatpush1.msra.mxu0 0.0
        %1977 = vmatprep.subr.mxu0 0.0
        %1978 = vmatpush1.msra.mxu0 0.0
        %1979 = vmatprep.subr.mxu0 0.0
        %1980 = vmatpush1.msra.mxu0 0.0
        %1981 = vmatprep.subr.mxu0 0.0
        %1982 = vmatpush1.msra.mxu0 0.0
        %1983 = vmatprep.subr.mxu0 0.0
        %1984 = vmatpush1.msra.mxu0 0.0
        %1985 = vmatprep.subr.mxu0 0.0
        %1986 = vmatpush1.msra.mxu0 %v1442
        %1987 = vmatprep.subr.mxu0 0.0
        %1988 = vmatpush2.msra.mxu0 0.0
        %1989 = vmatprep.subr.mxu0 0.0
        %1990 = vmatpush2.msra.mxu0 0.0
        %1991 = vmatprep.subr.mxu0 0.0
        %1992 = vmatpush2.msra.mxu0 0.0
        %1993 = vmatprep.subr.mxu0 0.0
        %1994 = vmatpush2.msra.mxu0 0.0
        %1995 = vmatprep.subr.mxu0 0.0
        %1996 = vmatpush2.msra.mxu0 0.0
        %1997 = vmatprep.subr.mxu0 0.0
        %1998 = vmatpush2.msra.mxu0 0.0
        %1999 = vmatprep.subr.mxu0 0.0
        %2000 = vmatpush2.msra.mxu0 0.0
        %2001 = vmatprep.subr.mxu0 0.0
        %2002 = vmatpush2.msra.mxu0 0.0
        %2003 = vmatprep.subr.mxu0 0.0
        %2004 = vmatpush2.msra.mxu0 0.0
        %2005 = vmatprep.subr.mxu0 0.0
        %2006 = vmatpush2.msra.mxu0 0.0
        %2007 = vmatprep.subr.mxu0 0.0
        %2008 = vmatpush2.msra.mxu0 0.0
        %2009 = vmatprep.subr.mxu0 0.0
        %2010 = vmatpush2.msra.mxu0 0.0
        %2011 = vmatprep.subr.mxu0 0.0
        %2012 = vmatpush2.msra.mxu0 0.0
        %2013 = vmatprep.subr.mxu0 0.0
        %2014 = vmatpush2.msra.mxu0 0.0
        %2015 = vmatprep.subr.mxu0 0.0
        %2016 = vmatpush2.msra.mxu0 0.0
        %2017 = vmatprep.subr.mxu0 0.0
        %2018 = vmatpush2.msra.mxu0 0.0
        %2019 = vmatprep.mubr.f32.mxu0 0.0
        %2020 = vmatmul.mubr.f32.gmra.mxu0 %v1953
        %v2021 = vpop.f32.mrf.mxu0
        %v2022 = vadd.f32 0.0, %v2021
        %v2023 = vpop.f32.mrf.mxu0
        %2024 = vdwg.mxu0
        %v2025 = vadd.f32 %v913, %v1511
        %v2026 = vadd.f32 %v986, %v1584
        %v2027 = vadd.f32 %v1059, %v1657
        %v2028 = vadd.f32 %v1132, %v1730
        %v2029 = vadd.f32 %v1205, %v1803
        %v2030 = vadd.f32 %v1278, %v1876
        %v2031 = vadd.f32 %v1351, %v1949
        %v2032 = vadd.f32 %v1424, %v2022
        %s2033 = scalar_lea.vmem %s222, 72
        %v2034 = vld [vmem:[%s2033] sm:$0xff]
        %v2035 = vld [vmem:[%s2033 + $0x8] sm:$0xff]
        %v2036 = vld [vmem:[%s2033 + $0x10] sm:$0xff]
        %v2037 = vld [vmem:[%s2033 + $0x18] sm:$0xff]
        %v2038 = vld [vmem:[%s2033 + $0x20] sm:$0xff]
        %v2039 = vld [vmem:[%s2033 + $0x28] sm:$0xff]
        %v2040 = vld [vmem:[%s2033 + $0x30] sm:$0xff]
        %v2041 = vld [vmem:[%s2033 + $0x38] sm:$0xff]
        %s2042 = scalar_lea.vmem %s227, 12
        %v2043 = vld [vmem:[%s2042] sm:$0xf]
        %v2045 = vsel %vm251, %v2034, 0
        %v2048 = vsel %vm255, %v2043, 0
        %2050 = vmatprep.subr.mxu0 0.0
        %2051 = vmatpush1.msra.mxu0 0.0
        %2052 = vmatprep.subr.mxu0 0.0
        %2053 = vmatpush1.msra.mxu0 0.0
        %2054 = vmatprep.subr.mxu0 0.0
        %2055 = vmatpush1.msra.mxu0 0.0
        %2056 = vmatprep.subr.mxu0 0.0
        %2057 = vmatpush1.msra.mxu0 0.0
        %2058 = vmatprep.subr.mxu0 0.0
        %2059 = vmatpush1.msra.mxu0 0.0
        %2060 = vmatprep.subr.mxu0 0.0
        %2061 = vmatpush1.msra.mxu0 0.0
        %2062 = vmatprep.subr.mxu0 0.0
        %2063 = vmatpush1.msra.mxu0 0.0
        %2064 = vmatprep.subr.mxu0 0.0
        %2065 = vmatpush1.msra.mxu0 0.0
        %2066 = vmatprep.subr.mxu0 0.0
        %2067 = vmatpush1.msra.mxu0 0.0
        %2068 = vmatprep.subr.mxu0 0.0
        %2069 = vmatpush1.msra.mxu0 0.0
        %2070 = vmatprep.subr.mxu0 0.0
        %2071 = vmatpush1.msra.mxu0 0.0
        %2072 = vmatprep.subr.mxu0 0.0
        %2073 = vmatpush1.msra.mxu0 0.0
        %2074 = vmatprep.subr.mxu0 0.0
        %2075 = vmatpush1.msra.mxu0 0.0
        %2076 = vmatprep.subr.mxu0 0.0
        %2077 = vmatpush1.msra.mxu0 0.0
        %2078 = vmatprep.subr.mxu0 0.0
        %2079 = vmatpush1.msra.mxu0 0.0
        %2080 = vmatprep.subr.mxu0 0.0
        %2081 = vmatpush1.msra.mxu0 %v2048
        %2082 = vmatprep.subr.mxu0 0.0
        %2083 = vmatpush2.msra.mxu0 0.0
        %2084 = vmatprep.subr.mxu0 0.0
        %2085 = vmatpush2.msra.mxu0 0.0
        %2086 = vmatprep.subr.mxu0 0.0
        %2087 = vmatpush2.msra.mxu0 0.0
        %2088 = vmatprep.subr.mxu0 0.0
        %2089 = vmatpush2.msra.mxu0 0.0
        %2090 = vmatprep.subr.mxu0 0.0
        %2091 = vmatpush2.msra.mxu0 0.0
        %2092 = vmatprep.subr.mxu0 0.0
        %2093 = vmatpush2.msra.mxu0 0.0
        %2094 = vmatprep.subr.mxu0 0.0
        %2095 = vmatpush2.msra.mxu0 0.0
        %2096 = vmatprep.subr.mxu0 0.0
        %2097 = vmatpush2.msra.mxu0 0.0
        %2098 = vmatprep.subr.mxu0 0.0
        %2099 = vmatpush2.msra.mxu0 0.0
        %2100 = vmatprep.subr.mxu0 0.0
        %2101 = vmatpush2.msra.mxu0 0.0
        %2102 = vmatprep.subr.mxu0 0.0
        %2103 = vmatpush2.msra.mxu0 0.0
        %2104 = vmatprep.subr.mxu0 0.0
        %2105 = vmatpush2.msra.mxu0 0.0
        %2106 = vmatprep.subr.mxu0 0.0
        %2107 = vmatpush2.msra.mxu0 0.0
        %2108 = vmatprep.subr.mxu0 0.0
        %2109 = vmatpush2.msra.mxu0 0.0
        %2110 = vmatprep.subr.mxu0 0.0
        %2111 = vmatpush2.msra.mxu0 0.0
        %2112 = vmatprep.subr.mxu0 0.0
        %2113 = vmatpush2.msra.mxu0 0.0
        %2114 = vmatprep.mubr.f32.mxu0 0.0
        %2115 = vmatmul.mubr.f32.gmra.mxu0 %v2045
        %v2116 = vpop.f32.mrf.mxu0
        %v2117 = vadd.f32 0.0, %v2116
        %v2118 = vpop.f32.mrf.mxu0
        %2119 = vdwg.mxu0
        %v2121 = vsel %vm251, %v2035, 0
        %2123 = vmatprep.subr.mxu0 0.0
        %2124 = vmatpush1.msra.mxu0 0.0
        %2125 = vmatprep.subr.mxu0 0.0
        %2126 = vmatpush1.msra.mxu0 0.0
        %2127 = vmatprep.subr.mxu0 0.0
        %2128 = vmatpush1.msra.mxu0 0.0
        %2129 = vmatprep.subr.mxu0 0.0
        %2130 = vmatpush1.msra.mxu0 0.0
        %2131 = vmatprep.subr.mxu0 0.0
        %2132 = vmatpush1.msra.mxu0 0.0
        %2133 = vmatprep.subr.mxu0 0.0
        %2134 = vmatpush1.msra.mxu0 0.0
        %2135 = vmatprep.subr.mxu0 0.0
        %2136 = vmatpush1.msra.mxu0 0.0
        %2137 = vmatprep.subr.mxu0 0.0
        %2138 = vmatpush1.msra.mxu0 0.0
        %2139 = vmatprep.subr.mxu0 0.0
        %2140 = vmatpush1.msra.mxu0 0.0
        %2141 = vmatprep.subr.mxu0 0.0
        %2142 = vmatpush1.msra.mxu0 0.0
        %2143 = vmatprep.subr.mxu0 0.0
        %2144 = vmatpush1.msra.mxu0 0.0
        %2145 = vmatprep.subr.mxu0 0.0
        %2146 = vmatpush1.msra.mxu0 0.0
        %2147 = vmatprep.subr.mxu0 0.0
        %2148 = vmatpush1.msra.mxu0 0.0
        %2149 = vmatprep.subr.mxu0 0.0
        %2150 = vmatpush1.msra.mxu0 0.0
        %2151 = vmatprep.subr.mxu0 0.0
        %2152 = vmatpush1.msra.mxu0 0.0
        %2153 = vmatprep.subr.mxu0 0.0
        %2154 = vmatpush1.msra.mxu0 %v2048
        %2155 = vmatprep.subr.mxu0 0.0
        %2156 = vmatpush2.msra.mxu0 0.0
        %2157 = vmatprep.subr.mxu0 0.0
        %2158 = vmatpush2.msra.mxu0 0.0
        %2159 = vmatprep.subr.mxu0 0.0
        %2160 = vmatpush2.msra.mxu0 0.0
        %2161 = vmatprep.subr.mxu0 0.0
        %2162 = vmatpush2.msra.mxu0 0.0
        %2163 = vmatprep.subr.mxu0 0.0
        %2164 = vmatpush2.msra.mxu0 0.0
        %2165 = vmatprep.subr.mxu0 0.0
        %2166 = vmatpush2.msra.mxu0 0.0
        %2167 = vmatprep.subr.mxu0 0.0
        %2168 = vmatpush2.msra.mxu0 0.0
        %2169 = vmatprep.subr.mxu0 0.0
        %2170 = vmatpush2.msra.mxu0 0.0
        %2171 = vmatprep.subr.mxu0 0.0
        %2172 = vmatpush2.msra.mxu0 0.0
        %2173 = vmatprep.subr.mxu0 0.0
        %2174 = vmatpush2.msra.mxu0 0.0
        %2175 = vmatprep.subr.mxu0 0.0
        %2176 = vmatpush2.msra.mxu0 0.0
        %2177 = vmatprep.subr.mxu0 0.0
        %2178 = vmatpush2.msra.mxu0 0.0
        %2179 = vmatprep.subr.mxu0 0.0
        %2180 = vmatpush2.msra.mxu0 0.0
        %2181 = vmatprep.subr.mxu0 0.0
        %2182 = vmatpush2.msra.mxu0 0.0
        %2183 = vmatprep.subr.mxu0 0.0
        %2184 = vmatpush2.msra.mxu0 0.0
        %2185 = vmatprep.subr.mxu0 0.0
        %2186 = vmatpush2.msra.mxu0 0.0
        %2187 = vmatprep.mubr.f32.mxu0 0.0
        %2188 = vmatmul.mubr.f32.gmra.mxu0 %v2121
        %v2189 = vpop.f32.mrf.mxu0
        %v2190 = vadd.f32 0.0, %v2189
        %v2191 = vpop.f32.mrf.mxu0
        %2192 = vdwg.mxu0
        %v2194 = vsel %vm251, %v2036, 0
        %2196 = vmatprep.subr.mxu0 0.0
        %2197 = vmatpush1.msra.mxu0 0.0
        %2198 = vmatprep.subr.mxu0 0.0
        %2199 = vmatpush1.msra.mxu0 0.0
        %2200 = vmatprep.subr.mxu0 0.0
        %2201 = vmatpush1.msra.mxu0 0.0
        %2202 = vmatprep.subr.mxu0 0.0
        %2203 = vmatpush1.msra.mxu0 0.0
        %2204 = vmatprep.subr.mxu0 0.0
        %2205 = vmatpush1.msra.mxu0 0.0
        %2206 = vmatprep.subr.mxu0 0.0
        %2207 = vmatpush1.msra.mxu0 0.0
        %2208 = vmatprep.subr.mxu0 0.0
        %2209 = vmatpush1.msra.mxu0 0.0
        %2210 = vmatprep.subr.mxu0 0.0
        %2211 = vmatpush1.msra.mxu0 0.0
        %2212 = vmatprep.subr.mxu0 0.0
        %2213 = vmatpush1.msra.mxu0 0.0
        %2214 = vmatprep.subr.mxu0 0.0
        %2215 = vmatpush1.msra.mxu0 0.0
        %2216 = vmatprep.subr.mxu0 0.0
        %2217 = vmatpush1.msra.mxu0 0.0
        %2218 = vmatprep.subr.mxu0 0.0
        %2219 = vmatpush1.msra.mxu0 0.0
        %2220 = vmatprep.subr.mxu0 0.0
        %2221 = vmatpush1.msra.mxu0 0.0
        %2222 = vmatprep.subr.mxu0 0.0
        %2223 = vmatpush1.msra.mxu0 0.0
        %2224 = vmatprep.subr.mxu0 0.0
        %2225 = vmatpush1.msra.mxu0 0.0
        %2226 = vmatprep.subr.mxu0 0.0
        %2227 = vmatpush1.msra.mxu0 %v2048
        %2228 = vmatprep.subr.mxu0 0.0
        %2229 = vmatpush2.msra.mxu0 0.0
        %2230 = vmatprep.subr.mxu0 0.0
        %2231 = vmatpush2.msra.mxu0 0.0
        %2232 = vmatprep.subr.mxu0 0.0
        %2233 = vmatpush2.msra.mxu0 0.0
        %2234 = vmatprep.subr.mxu0 0.0
        %2235 = vmatpush2.msra.mxu0 0.0
        %2236 = vmatprep.subr.mxu0 0.0
        %2237 = vmatpush2.msra.mxu0 0.0
        %2238 = vmatprep.subr.mxu0 0.0
        %2239 = vmatpush2.msra.mxu0 0.0
        %2240 = vmatprep.subr.mxu0 0.0
        %2241 = vmatpush2.msra.mxu0 0.0
        %2242 = vmatprep.subr.mxu0 0.0
        %2243 = vmatpush2.msra.mxu0 0.0
        %2244 = vmatprep.subr.mxu0 0.0
        %2245 = vmatpush2.msra.mxu0 0.0
        %2246 = vmatprep.subr.mxu0 0.0
        %2247 = vmatpush2.msra.mxu0 0.0
        %2248 = vmatprep.subr.mxu0 0.0
        %2249 = vmatpush2.msra.mxu0 0.0
        %2250 = vmatprep.subr.mxu0 0.0
        %2251 = vmatpush2.msra.mxu0 0.0
        %2252 = vmatprep.subr.mxu0 0.0
        %2253 = vmatpush2.msra.mxu0 0.0
        %2254 = vmatprep.subr.mxu0 0.0
        %2255 = vmatpush2.msra.mxu0 0.0
        %2256 = vmatprep.subr.mxu0 0.0
        %2257 = vmatpush2.msra.mxu0 0.0
        %2258 = vmatprep.subr.mxu0 0.0
        %2259 = vmatpush2.msra.mxu0 0.0
        %2260 = vmatprep.mubr.f32.mxu0 0.0
        %2261 = vmatmul.mubr.f32.gmra.mxu0 %v2194
        %v2262 = vpop.f32.mrf.mxu0
        %v2263 = vadd.f32 0.0, %v2262
        %v2264 = vpop.f32.mrf.mxu0
        %2265 = vdwg.mxu0
        %v2267 = vsel %vm251, %v2037, 0
        %2269 = vmatprep.subr.mxu0 0.0
        %2270 = vmatpush1.msra.mxu0 0.0
        %2271 = vmatprep.subr.mxu0 0.0
        %2272 = vmatpush1.msra.mxu0 0.0
        %2273 = vmatprep.subr.mxu0 0.0
        %2274 = vmatpush1.msra.mxu0 0.0
        %2275 = vmatprep.subr.mxu0 0.0
        %2276 = vmatpush1.msra.mxu0 0.0
        %2277 = vmatprep.subr.mxu0 0.0
        %2278 = vmatpush1.msra.mxu0 0.0
        %2279 = vmatprep.subr.mxu0 0.0
        %2280 = vmatpush1.msra.mxu0 0.0
        %2281 = vmatprep.subr.mxu0 0.0
        %2282 = vmatpush1.msra.mxu0 0.0
        %2283 = vmatprep.subr.mxu0 0.0
        %2284 = vmatpush1.msra.mxu0 0.0
        %2285 = vmatprep.subr.mxu0 0.0
        %2286 = vmatpush1.msra.mxu0 0.0
        %2287 = vmatprep.subr.mxu0 0.0
        %2288 = vmatpush1.msra.mxu0 0.0
        %2289 = vmatprep.subr.mxu0 0.0
        %2290 = vmatpush1.msra.mxu0 0.0
        %2291 = vmatprep.subr.mxu0 0.0
        %2292 = vmatpush1.msra.mxu0 0.0
        %2293 = vmatprep.subr.mxu0 0.0
        %2294 = vmatpush1.msra.mxu0 0.0
        %2295 = vmatprep.subr.mxu0 0.0
        %2296 = vmatpush1.msra.mxu0 0.0
        %2297 = vmatprep.subr.mxu0 0.0
        %2298 = vmatpush1.msra.mxu0 0.0
        %2299 = vmatprep.subr.mxu0 0.0
        %2300 = vmatpush1.msra.mxu0 %v2048
        %2301 = vmatprep.subr.mxu0 0.0
        %2302 = vmatpush2.msra.mxu0 0.0
        %2303 = vmatprep.subr.mxu0 0.0
        %2304 = vmatpush2.msra.mxu0 0.0
        %2305 = vmatprep.subr.mxu0 0.0
        %2306 = vmatpush2.msra.mxu0 0.0
        %2307 = vmatprep.subr.mxu0 0.0
        %2308 = vmatpush2.msra.mxu0 0.0
        %2309 = vmatprep.subr.mxu0 0.0
        %2310 = vmatpush2.msra.mxu0 0.0
        %2311 = vmatprep.subr.mxu0 0.0
        %2312 = vmatpush2.msra.mxu0 0.0
        %2313 = vmatprep.subr.mxu0 0.0
        %2314 = vmatpush2.msra.mxu0 0.0
        %2315 = vmatprep.subr.mxu0 0.0
        %2316 = vmatpush2.msra.mxu0 0.0
        %2317 = vmatprep.subr.mxu0 0.0
        %2318 = vmatpush2.msra.mxu0 0.0
        %2319 = vmatprep.subr.mxu0 0.0
        %2320 = vmatpush2.msra.mxu0 0.0
        %2321 = vmatprep.subr.mxu0 0.0
        %2322 = vmatpush2.msra.mxu0 0.0
        %2323 = vmatprep.subr.mxu0 0.0
        %2324 = vmatpush2.msra.mxu0 0.0
        %2325 = vmatprep.subr.mxu0 0.0
        %2326 = vmatpush2.msra.mxu0 0.0
        %2327 = vmatprep.subr.mxu0 0.0
        %2328 = vmatpush2.msra.mxu0 0.0
        %2329 = vmatprep.subr.mxu0 0.0
        %2330 = vmatpush2.msra.mxu0 0.0
        %2331 = vmatprep.subr.mxu0 0.0
        %2332 = vmatpush2.msra.mxu0 0.0
        %2333 = vmatprep.mubr.f32.mxu0 0.0
        %2334 = vmatmul.mubr.f32.gmra.mxu0 %v2267
        %v2335 = vpop.f32.mrf.mxu0
        %v2336 = vadd.f32 0.0, %v2335
        %v2337 = vpop.f32.mrf.mxu0
        %2338 = vdwg.mxu0
        %v2340 = vsel %vm251, %v2038, 0
        %2342 = vmatprep.subr.mxu0 0.0
        %2343 = vmatpush1.msra.mxu0 0.0
        %2344 = vmatprep.subr.mxu0 0.0
        %2345 = vmatpush1.msra.mxu0 0.0
        %2346 = vmatprep.subr.mxu0 0.0
        %2347 = vmatpush1.msra.mxu0 0.0
        %2348 = vmatprep.subr.mxu0 0.0
        %2349 = vmatpush1.msra.mxu0 0.0
        %2350 = vmatprep.subr.mxu0 0.0
        %2351 = vmatpush1.msra.mxu0 0.0
        %2352 = vmatprep.subr.mxu0 0.0
        %2353 = vmatpush1.msra.mxu0 0.0
        %2354 = vmatprep.subr.mxu0 0.0
        %2355 = vmatpush1.msra.mxu0 0.0
        %2356 = vmatprep.subr.mxu0 0.0
        %2357 = vmatpush1.msra.mxu0 0.0
        %2358 = vmatprep.subr.mxu0 0.0
        %2359 = vmatpush1.msra.mxu0 0.0
        %2360 = vmatprep.subr.mxu0 0.0
        %2361 = vmatpush1.msra.mxu0 0.0
        %2362 = vmatprep.subr.mxu0 0.0
        %2363 = vmatpush1.msra.mxu0 0.0
        %2364 = vmatprep.subr.mxu0 0.0
        %2365 = vmatpush1.msra.mxu0 0.0
        %2366 = vmatprep.subr.mxu0 0.0
        %2367 = vmatpush1.msra.mxu0 0.0
        %2368 = vmatprep.subr.mxu0 0.0
        %2369 = vmatpush1.msra.mxu0 0.0
        %2370 = vmatprep.subr.mxu0 0.0
        %2371 = vmatpush1.msra.mxu0 0.0
        %2372 = vmatprep.subr.mxu0 0.0
        %2373 = vmatpush1.msra.mxu0 %v2048
        %2374 = vmatprep.subr.mxu0 0.0
        %2375 = vmatpush2.msra.mxu0 0.0
        %2376 = vmatprep.subr.mxu0 0.0
        %2377 = vmatpush2.msra.mxu0 0.0
        %2378 = vmatprep.subr.mxu0 0.0
        %2379 = vmatpush2.msra.mxu0 0.0
        %2380 = vmatprep.subr.mxu0 0.0
        %2381 = vmatpush2.msra.mxu0 0.0
        %2382 = vmatprep.subr.mxu0 0.0
        %2383 = vmatpush2.msra.mxu0 0.0
        %2384 = vmatprep.subr.mxu0 0.0
        %2385 = vmatpush2.msra.mxu0 0.0
        %2386 = vmatprep.subr.mxu0 0.0
        %2387 = vmatpush2.msra.mxu0 0.0
        %2388 = vmatprep.subr.mxu0 0.0
        %2389 = vmatpush2.msra.mxu0 0.0
        %2390 = vmatprep.subr.mxu0 0.0
        %2391 = vmatpush2.msra.mxu0 0.0
        %2392 = vmatprep.subr.mxu0 0.0
        %2393 = vmatpush2.msra.mxu0 0.0
        %2394 = vmatprep.subr.mxu0 0.0
        %2395 = vmatpush2.msra.mxu0 0.0
        %2396 = vmatprep.subr.mxu0 0.0
        %2397 = vmatpush2.msra.mxu0 0.0
        %2398 = vmatprep.subr.mxu0 0.0
        %2399 = vmatpush2.msra.mxu0 0.0
        %2400 = vmatprep.subr.mxu0 0.0
        %2401 = vmatpush2.msra.mxu0 0.0
        %2402 = vmatprep.subr.mxu0 0.0
        %2403 = vmatpush2.msra.mxu0 0.0
        %2404 = vmatprep.subr.mxu0 0.0
        %2405 = vmatpush2.msra.mxu0 0.0
        %2406 = vmatprep.mubr.f32.mxu0 0.0
        %2407 = vmatmul.mubr.f32.gmra.mxu0 %v2340
        %v2408 = vpop.f32.mrf.mxu0
        %v2409 = vadd.f32 0.0, %v2408
        %v2410 = vpop.f32.mrf.mxu0
        %2411 = vdwg.mxu0
        %v2413 = vsel %vm251, %v2039, 0
        %2415 = vmatprep.subr.mxu0 0.0
        %2416 = vmatpush1.msra.mxu0 0.0
        %2417 = vmatprep.subr.mxu0 0.0
        %2418 = vmatpush1.msra.mxu0 0.0
        %2419 = vmatprep.subr.mxu0 0.0
        %2420 = vmatpush1.msra.mxu0 0.0
        %2421 = vmatprep.subr.mxu0 0.0
        %2422 = vmatpush1.msra.mxu0 0.0
        %2423 = vmatprep.subr.mxu0 0.0
        %2424 = vmatpush1.msra.mxu0 0.0
        %2425 = vmatprep.subr.mxu0 0.0
        %2426 = vmatpush1.msra.mxu0 0.0
        %2427 = vmatprep.subr.mxu0 0.0
        %2428 = vmatpush1.msra.mxu0 0.0
        %2429 = vmatprep.subr.mxu0 0.0
        %2430 = vmatpush1.msra.mxu0 0.0
        %2431 = vmatprep.subr.mxu0 0.0
        %2432 = vmatpush1.msra.mxu0 0.0
        %2433 = vmatprep.subr.mxu0 0.0
        %2434 = vmatpush1.msra.mxu0 0.0
        %2435 = vmatprep.subr.mxu0 0.0
        %2436 = vmatpush1.msra.mxu0 0.0
        %2437 = vmatprep.subr.mxu0 0.0
        %2438 = vmatpush1.msra.mxu0 0.0
        %2439 = vmatprep.subr.mxu0 0.0
        %2440 = vmatpush1.msra.mxu0 0.0
        %2441 = vmatprep.subr.mxu0 0.0
        %2442 = vmatpush1.msra.mxu0 0.0
        %2443 = vmatprep.subr.mxu0 0.0
        %2444 = vmatpush1.msra.mxu0 0.0
        %2445 = vmatprep.subr.mxu0 0.0
        %2446 = vmatpush1.msra.mxu0 %v2048
        %2447 = vmatprep.subr.mxu0 0.0
        %2448 = vmatpush2.msra.mxu0 0.0
        %2449 = vmatprep.subr.mxu0 0.0
        %2450 = vmatpush2.msra.mxu0 0.0
        %2451 = vmatprep.subr.mxu0 0.0
        %2452 = vmatpush2.msra.mxu0 0.0
        %2453 = vmatprep.subr.mxu0 0.0
        %2454 = vmatpush2.msra.mxu0 0.0
        %2455 = vmatprep.subr.mxu0 0.0
        %2456 = vmatpush2.msra.mxu0 0.0
        %2457 = vmatprep.subr.mxu0 0.0
        %2458 = vmatpush2.msra.mxu0 0.0
        %2459 = vmatprep.subr.mxu0 0.0
        %2460 = vmatpush2.msra.mxu0 0.0
        %2461 = vmatprep.subr.mxu0 0.0
        %2462 = vmatpush2.msra.mxu0 0.0
        %2463 = vmatprep.subr.mxu0 0.0
        %2464 = vmatpush2.msra.mxu0 0.0
        %2465 = vmatprep.subr.mxu0 0.0
        %2466 = vmatpush2.msra.mxu0 0.0
        %2467 = vmatprep.subr.mxu0 0.0
        %2468 = vmatpush2.msra.mxu0 0.0
        %2469 = vmatprep.subr.mxu0 0.0
        %2470 = vmatpush2.msra.mxu0 0.0
        %2471 = vmatprep.subr.mxu0 0.0
        %2472 = vmatpush2.msra.mxu0 0.0
        %2473 = vmatprep.subr.mxu0 0.0
        %2474 = vmatpush2.msra.mxu0 0.0
        %2475 = vmatprep.subr.mxu0 0.0
        %2476 = vmatpush2.msra.mxu0 0.0
        %2477 = vmatprep.subr.mxu0 0.0
        %2478 = vmatpush2.msra.mxu0 0.0
        %2479 = vmatprep.mubr.f32.mxu0 0.0
        %2480 = vmatmul.mubr.f32.gmra.mxu0 %v2413
        %v2481 = vpop.f32.mrf.mxu0
        %v2482 = vadd.f32 0.0, %v2481
        %v2483 = vpop.f32.mrf.mxu0
        %2484 = vdwg.mxu0
        %v2486 = vsel %vm251, %v2040, 0
        %2488 = vmatprep.subr.mxu0 0.0
        %2489 = vmatpush1.msra.mxu0 0.0
        %2490 = vmatprep.subr.mxu0 0.0
        %2491 = vmatpush1.msra.mxu0 0.0
        %2492 = vmatprep.subr.mxu0 0.0
        %2493 = vmatpush1.msra.mxu0 0.0
        %2494 = vmatprep.subr.mxu0 0.0
        %2495 = vmatpush1.msra.mxu0 0.0
        %2496 = vmatprep.subr.mxu0 0.0
        %2497 = vmatpush1.msra.mxu0 0.0
        %2498 = vmatprep.subr.mxu0 0.0
        %2499 = vmatpush1.msra.mxu0 0.0
        %2500 = vmatprep.subr.mxu0 0.0
        %2501 = vmatpush1.msra.mxu0 0.0
        %2502 = vmatprep.subr.mxu0 0.0
        %2503 = vmatpush1.msra.mxu0 0.0
        %2504 = vmatprep.subr.mxu0 0.0
        %2505 = vmatpush1.msra.mxu0 0.0
        %2506 = vmatprep.subr.mxu0 0.0
        %2507 = vmatpush1.msra.mxu0 0.0
        %2508 = vmatprep.subr.mxu0 0.0
        %2509 = vmatpush1.msra.mxu0 0.0
        %2510 = vmatprep.subr.mxu0 0.0
        %2511 = vmatpush1.msra.mxu0 0.0
        %2512 = vmatprep.subr.mxu0 0.0
        %2513 = vmatpush1.msra.mxu0 0.0
        %2514 = vmatprep.subr.mxu0 0.0
        %2515 = vmatpush1.msra.mxu0 0.0
        %2516 = vmatprep.subr.mxu0 0.0
        %2517 = vmatpush1.msra.mxu0 0.0
        %2518 = vmatprep.subr.mxu0 0.0
        %2519 = vmatpush1.msra.mxu0 %v2048
        %2520 = vmatprep.subr.mxu0 0.0
        %2521 = vmatpush2.msra.mxu0 0.0
        %2522 = vmatprep.subr.mxu0 0.0
        %2523 = vmatpush2.msra.mxu0 0.0
        %2524 = vmatprep.subr.mxu0 0.0
        %2525 = vmatpush2.msra.mxu0 0.0
        %2526 = vmatprep.subr.mxu0 0.0
        %2527 = vmatpush2.msra.mxu0 0.0
        %2528 = vmatprep.subr.mxu0 0.0
        %2529 = vmatpush2.msra.mxu0 0.0
        %2530 = vmatprep.subr.mxu0 0.0
        %2531 = vmatpush2.msra.mxu0 0.0
        %2532 = vmatprep.subr.mxu0 0.0
        %2533 = vmatpush2.msra.mxu0 0.0
        %2534 = vmatprep.subr.mxu0 0.0
        %2535 = vmatpush2.msra.mxu0 0.0
        %2536 = vmatprep.subr.mxu0 0.0
        %2537 = vmatpush2.msra.mxu0 0.0
        %2538 = vmatprep.subr.mxu0 0.0
        %2539 = vmatpush2.msra.mxu0 0.0
        %2540 = vmatprep.subr.mxu0 0.0
        %2541 = vmatpush2.msra.mxu0 0.0
        %2542 = vmatprep.subr.mxu0 0.0
        %2543 = vmatpush2.msra.mxu0 0.0
        %2544 = vmatprep.subr.mxu0 0.0
        %2545 = vmatpush2.msra.mxu0 0.0
        %2546 = vmatprep.subr.mxu0 0.0
        %2547 = vmatpush2.msra.mxu0 0.0
        %2548 = vmatprep.subr.mxu0 0.0
        %2549 = vmatpush2.msra.mxu0 0.0
        %2550 = vmatprep.subr.mxu0 0.0
        %2551 = vmatpush2.msra.mxu0 0.0
        %2552 = vmatprep.mubr.f32.mxu0 0.0
        %2553 = vmatmul.mubr.f32.gmra.mxu0 %v2486
        %v2554 = vpop.f32.mrf.mxu0
        %v2555 = vadd.f32 0.0, %v2554
        %v2556 = vpop.f32.mrf.mxu0
        %2557 = vdwg.mxu0
        %v2559 = vsel %vm251, %v2041, 0
        %2561 = vmatprep.subr.mxu0 0.0
        %2562 = vmatpush1.msra.mxu0 0.0
        %2563 = vmatprep.subr.mxu0 0.0
        %2564 = vmatpush1.msra.mxu0 0.0
        %2565 = vmatprep.subr.mxu0 0.0
        %2566 = vmatpush1.msra.mxu0 0.0
        %2567 = vmatprep.subr.mxu0 0.0
        %2568 = vmatpush1.msra.mxu0 0.0
        %2569 = vmatprep.subr.mxu0 0.0
        %2570 = vmatpush1.msra.mxu0 0.0
        %2571 = vmatprep.subr.mxu0 0.0
        %2572 = vmatpush1.msra.mxu0 0.0
        %2573 = vmatprep.subr.mxu0 0.0
        %2574 = vmatpush1.msra.mxu0 0.0
        %2575 = vmatprep.subr.mxu0 0.0
        %2576 = vmatpush1.msra.mxu0 0.0
        %2577 = vmatprep.subr.mxu0 0.0
        %2578 = vmatpush1.msra.mxu0 0.0
        %2579 = vmatprep.subr.mxu0 0.0
        %2580 = vmatpush1.msra.mxu0 0.0
        %2581 = vmatprep.subr.mxu0 0.0
        %2582 = vmatpush1.msra.mxu0 0.0
        %2583 = vmatprep.subr.mxu0 0.0
        %2584 = vmatpush1.msra.mxu0 0.0
        %2585 = vmatprep.subr.mxu0 0.0
        %2586 = vmatpush1.msra.mxu0 0.0
        %2587 = vmatprep.subr.mxu0 0.0
        %2588 = vmatpush1.msra.mxu0 0.0
        %2589 = vmatprep.subr.mxu0 0.0
        %2590 = vmatpush1.msra.mxu0 0.0
        %2591 = vmatprep.subr.mxu0 0.0
        %2592 = vmatpush1.msra.mxu0 %v2048
        %2593 = vmatprep.subr.mxu0 0.0
        %2594 = vmatpush2.msra.mxu0 0.0
        %2595 = vmatprep.subr.mxu0 0.0
        %2596 = vmatpush2.msra.mxu0 0.0
        %2597 = vmatprep.subr.mxu0 0.0
        %2598 = vmatpush2.msra.mxu0 0.0
        %2599 = vmatprep.subr.mxu0 0.0
        %2600 = vmatpush2.msra.mxu0 0.0
        %2601 = vmatprep.subr.mxu0 0.0
        %2602 = vmatpush2.msra.mxu0 0.0
        %2603 = vmatprep.subr.mxu0 0.0
        %2604 = vmatpush2.msra.mxu0 0.0
        %2605 = vmatprep.subr.mxu0 0.0
        %2606 = vmatpush2.msra.mxu0 0.0
        %2607 = vmatprep.subr.mxu0 0.0
        %2608 = vmatpush2.msra.mxu0 0.0
        %2609 = vmatprep.subr.mxu0 0.0
        %2610 = vmatpush2.msra.mxu0 0.0
        %2611 = vmatprep.subr.mxu0 0.0
        %2612 = vmatpush2.msra.mxu0 0.0
        %2613 = vmatprep.subr.mxu0 0.0
        %2614 = vmatpush2.msra.mxu0 0.0
        %2615 = vmatprep.subr.mxu0 0.0
        %2616 = vmatpush2.msra.mxu0 0.0
        %2617 = vmatprep.subr.mxu0 0.0
        %2618 = vmatpush2.msra.mxu0 0.0
        %2619 = vmatprep.subr.mxu0 0.0
        %2620 = vmatpush2.msra.mxu0 0.0
        %2621 = vmatprep.subr.mxu0 0.0
        %2622 = vmatpush2.msra.mxu0 0.0
        %2623 = vmatprep.subr.mxu0 0.0
        %2624 = vmatpush2.msra.mxu0 0.0
        %2625 = vmatprep.mubr.f32.mxu0 0.0
        %2626 = vmatmul.mubr.f32.gmra.mxu0 %v2559
        %v2627 = vpop.f32.mrf.mxu0
        %v2628 = vadd.f32 0.0, %v2627
        %v2629 = vpop.f32.mrf.mxu0
        %2630 = vdwg.mxu0
        %v2631 = vadd.f32 %v2025, %v2117
        %v2632 = vadd.f32 %v2026, %v2190
        %v2633 = vadd.f32 %v2027, %v2263
        %v2634 = vadd.f32 %v2028, %v2336
        %v2635 = vadd.f32 %v2029, %v2409
        %v2636 = vadd.f32 %v2030, %v2482
        %v2637 = vadd.f32 %v2031, %v2555
        %v2638 = vadd.f32 %v2032, %v2628
        %s2639 = scalar_lea.vmem %s222, 216
        %v2640 = vld [vmem:[%s2639] sm:$0xff]
        %v2641 = vld [vmem:[%s2639 + $0x8] sm:$0xff]
        %v2642 = vld [vmem:[%s2639 + $0x10] sm:$0xff]
        %v2643 = vld [vmem:[%s2639 + $0x18] sm:$0xff]
        %v2644 = vld [vmem:[%s2639 + $0x20] sm:$0xff]
        %v2645 = vld [vmem:[%s2639 + $0x28] sm:$0xff]
        %v2646 = vld [vmem:[%s2639 + $0x30] sm:$0xff]
        %v2647 = vld [vmem:[%s2639 + $0x38] sm:$0xff]
        %s2648 = scalar_lea.vmem %s227, 16
        %v2649 = vld [vmem:[%s2648] sm:$0xf]
        %v2651 = vsel %vm251, %v2640, 0
        %v2654 = vsel %vm255, %v2649, 0
        %2656 = vmatprep.subr.mxu0 0.0
        %2657 = vmatpush1.msra.mxu0 0.0
        %2658 = vmatprep.subr.mxu0 0.0
        %2659 = vmatpush1.msra.mxu0 0.0
        %2660 = vmatprep.subr.mxu0 0.0
        %2661 = vmatpush1.msra.mxu0 0.0
        %2662 = vmatprep.subr.mxu0 0.0
        %2663 = vmatpush1.msra.mxu0 0.0
        %2664 = vmatprep.subr.mxu0 0.0
        %2665 = vmatpush1.msra.mxu0 0.0
        %2666 = vmatprep.subr.mxu0 0.0
        %2667 = vmatpush1.msra.mxu0 0.0
        %2668 = vmatprep.subr.mxu0 0.0
        %2669 = vmatpush1.msra.mxu0 0.0
        %2670 = vmatprep.subr.mxu0 0.0
        %2671 = vmatpush1.msra.mxu0 0.0
        %2672 = vmatprep.subr.mxu0 0.0
        %2673 = vmatpush1.msra.mxu0 0.0
        %2674 = vmatprep.subr.mxu0 0.0
        %2675 = vmatpush1.msra.mxu0 0.0
        %2676 = vmatprep.subr.mxu0 0.0
        %2677 = vmatpush1.msra.mxu0 0.0
        %2678 = vmatprep.subr.mxu0 0.0
        %2679 = vmatpush1.msra.mxu0 0.0
        %2680 = vmatprep.subr.mxu0 0.0
        %2681 = vmatpush1.msra.mxu0 0.0
        %2682 = vmatprep.subr.mxu0 0.0
        %2683 = vmatpush1.msra.mxu0 0.0
        %2684 = vmatprep.subr.mxu0 0.0
        %2685 = vmatpush1.msra.mxu0 0.0
        %2686 = vmatprep.subr.mxu0 0.0
        %2687 = vmatpush1.msra.mxu0 %v2654
        %2688 = vmatprep.subr.mxu0 0.0
        %2689 = vmatpush2.msra.mxu0 0.0
        %2690 = vmatprep.subr.mxu0 0.0
        %2691 = vmatpush2.msra.mxu0 0.0
        %2692 = vmatprep.subr.mxu0 0.0
        %2693 = vmatpush2.msra.mxu0 0.0
        %2694 = vmatprep.subr.mxu0 0.0
        %2695 = vmatpush2.msra.mxu0 0.0
        %2696 = vmatprep.subr.mxu0 0.0
        %2697 = vmatpush2.msra.mxu0 0.0
        %2698 = vmatprep.subr.mxu0 0.0
        %2699 = vmatpush2.msra.mxu0 0.0
        %2700 = vmatprep.subr.mxu0 0.0
        %2701 = vmatpush2.msra.mxu0 0.0
        %2702 = vmatprep.subr.mxu0 0.0
        %2703 = vmatpush2.msra.mxu0 0.0
        %2704 = vmatprep.subr.mxu0 0.0
        %2705 = vmatpush2.msra.mxu0 0.0
        %2706 = vmatprep.subr.mxu0 0.0
        %2707 = vmatpush2.msra.mxu0 0.0
        %2708 = vmatprep.subr.mxu0 0.0
        %2709 = vmatpush2.msra.mxu0 0.0
        %2710 = vmatprep.subr.mxu0 0.0
        %2711 = vmatpush2.msra.mxu0 0.0
        %2712 = vmatprep.subr.mxu0 0.0
        %2713 = vmatpush2.msra.mxu0 0.0
        %2714 = vmatprep.subr.mxu0 0.0
        %2715 = vmatpush2.msra.mxu0 0.0
        %2716 = vmatprep.subr.mxu0 0.0
        %2717 = vmatpush2.msra.mxu0 0.0
        %2718 = vmatprep.subr.mxu0 0.0
        %2719 = vmatpush2.msra.mxu0 0.0
        %2720 = vmatprep.mubr.f32.mxu0 0.0
        %2721 = vmatmul.mubr.f32.gmra.mxu0 %v2651
        %v2722 = vpop.f32.mrf.mxu0
        %v2723 = vadd.f32 0.0, %v2722
        %v2724 = vpop.f32.mrf.mxu0
        %2725 = vdwg.mxu0
        %v2727 = vsel %vm251, %v2641, 0
        %2729 = vmatprep.subr.mxu0 0.0
        %2730 = vmatpush1.msra.mxu0 0.0
        %2731 = vmatprep.subr.mxu0 0.0
        %2732 = vmatpush1.msra.mxu0 0.0
        %2733 = vmatprep.subr.mxu0 0.0
        %2734 = vmatpush1.msra.mxu0 0.0
        %2735 = vmatprep.subr.mxu0 0.0
        %2736 = vmatpush1.msra.mxu0 0.0
        %2737 = vmatprep.subr.mxu0 0.0
        %2738 = vmatpush1.msra.mxu0 0.0
        %2739 = vmatprep.subr.mxu0 0.0
        %2740 = vmatpush1.msra.mxu0 0.0
        %2741 = vmatprep.subr.mxu0 0.0
        %2742 = vmatpush1.msra.mxu0 0.0
        %2743 = vmatprep.subr.mxu0 0.0
        %2744 = vmatpush1.msra.mxu0 0.0
        %2745 = vmatprep.subr.mxu0 0.0
        %2746 = vmatpush1.msra.mxu0 0.0
        %2747 = vmatprep.subr.mxu0 0.0
        %2748 = vmatpush1.msra.mxu0 0.0
        %2749 = vmatprep.subr.mxu0 0.0
        %2750 = vmatpush1.msra.mxu0 0.0
        %2751 = vmatprep.subr.mxu0 0.0
        %2752 = vmatpush1.msra.mxu0 0.0
        %2753 = vmatprep.subr.mxu0 0.0
        %2754 = vmatpush1.msra.mxu0 0.0
        %2755 = vmatprep.subr.mxu0 0.0
        %2756 = vmatpush1.msra.mxu0 0.0
        %2757 = vmatprep.subr.mxu0 0.0
        %2758 = vmatpush1.msra.mxu0 0.0
        %2759 = vmatprep.subr.mxu0 0.0
        %2760 = vmatpush1.msra.mxu0 %v2654
        %2761 = vmatprep.subr.mxu0 0.0
        %2762 = vmatpush2.msra.mxu0 0.0
        %2763 = vmatprep.subr.mxu0 0.0
        %2764 = vmatpush2.msra.mxu0 0.0
        %2765 = vmatprep.subr.mxu0 0.0
        %2766 = vmatpush2.msra.mxu0 0.0
        %2767 = vmatprep.subr.mxu0 0.0
        %2768 = vmatpush2.msra.mxu0 0.0
        %2769 = vmatprep.subr.mxu0 0.0
        %2770 = vmatpush2.msra.mxu0 0.0
        %2771 = vmatprep.subr.mxu0 0.0
        %2772 = vmatpush2.msra.mxu0 0.0
        %2773 = vmatprep.subr.mxu0 0.0
        %2774 = vmatpush2.msra.mxu0 0.0
        %2775 = vmatprep.subr.mxu0 0.0
        %2776 = vmatpush2.msra.mxu0 0.0
        %2777 = vmatprep.subr.mxu0 0.0
        %2778 = vmatpush2.msra.mxu0 0.0
        %2779 = vmatprep.subr.mxu0 0.0
        %2780 = vmatpush2.msra.mxu0 0.0
        %2781 = vmatprep.subr.mxu0 0.0
        %2782 = vmatpush2.msra.mxu0 0.0
        %2783 = vmatprep.subr.mxu0 0.0
        %2784 = vmatpush2.msra.mxu0 0.0
        %2785 = vmatprep.subr.mxu0 0.0
        %2786 = vmatpush2.msra.mxu0 0.0
        %2787 = vmatprep.subr.mxu0 0.0
        %2788 = vmatpush2.msra.mxu0 0.0
        %2789 = vmatprep.subr.mxu0 0.0
        %2790 = vmatpush2.msra.mxu0 0.0
        %2791 = vmatprep.subr.mxu0 0.0
        %2792 = vmatpush2.msra.mxu0 0.0
        %2793 = vmatprep.mubr.f32.mxu0 0.0
        %2794 = vmatmul.mubr.f32.gmra.mxu0 %v2727
        %v2795 = vpop.f32.mrf.mxu0
        %v2796 = vadd.f32 0.0, %v2795
        %v2797 = vpop.f32.mrf.mxu0
        %2798 = vdwg.mxu0
        %v2800 = vsel %vm251, %v2642, 0
        %2802 = vmatprep.subr.mxu0 0.0
        %2803 = vmatpush1.msra.mxu0 0.0
        %2804 = vmatprep.subr.mxu0 0.0
        %2805 = vmatpush1.msra.mxu0 0.0
        %2806 = vmatprep.subr.mxu0 0.0
        %2807 = vmatpush1.msra.mxu0 0.0
        %2808 = vmatprep.subr.mxu0 0.0
        %2809 = vmatpush1.msra.mxu0 0.0
        %2810 = vmatprep.subr.mxu0 0.0
        %2811 = vmatpush1.msra.mxu0 0.0
        %2812 = vmatprep.subr.mxu0 0.0
        %2813 = vmatpush1.msra.mxu0 0.0
        %2814 = vmatprep.subr.mxu0 0.0
        %2815 = vmatpush1.msra.mxu0 0.0
        %2816 = vmatprep.subr.mxu0 0.0
        %2817 = vmatpush1.msra.mxu0 0.0
        %2818 = vmatprep.subr.mxu0 0.0
        %2819 = vmatpush1.msra.mxu0 0.0
        %2820 = vmatprep.subr.mxu0 0.0
        %2821 = vmatpush1.msra.mxu0 0.0
        %2822 = vmatprep.subr.mxu0 0.0
        %2823 = vmatpush1.msra.mxu0 0.0
        %2824 = vmatprep.subr.mxu0 0.0
        %2825 = vmatpush1.msra.mxu0 0.0
        %2826 = vmatprep.subr.mxu0 0.0
        %2827 = vmatpush1.msra.mxu0 0.0
        %2828 = vmatprep.subr.mxu0 0.0
        %2829 = vmatpush1.msra.mxu0 0.0
        %2830 = vmatprep.subr.mxu0 0.0
        %2831 = vmatpush1.msra.mxu0 0.0
        %2832 = vmatprep.subr.mxu0 0.0
        %2833 = vmatpush1.msra.mxu0 %v2654
        %2834 = vmatprep.subr.mxu0 0.0
        %2835 = vmatpush2.msra.mxu0 0.0
        %2836 = vmatprep.subr.mxu0 0.0
        %2837 = vmatpush2.msra.mxu0 0.0
        %2838 = vmatprep.subr.mxu0 0.0
        %2839 = vmatpush2.msra.mxu0 0.0
        %2840 = vmatprep.subr.mxu0 0.0
        %2841 = vmatpush2.msra.mxu0 0.0
        %2842 = vmatprep.subr.mxu0 0.0
        %2843 = vmatpush2.msra.mxu0 0.0
        %2844 = vmatprep.subr.mxu0 0.0
        %2845 = vmatpush2.msra.mxu0 0.0
        %2846 = vmatprep.subr.mxu0 0.0
        %2847 = vmatpush2.msra.mxu0 0.0
        %2848 = vmatprep.subr.mxu0 0.0
        %2849 = vmatpush2.msra.mxu0 0.0
        %2850 = vmatprep.subr.mxu0 0.0
        %2851 = vmatpush2.msra.mxu0 0.0
        %2852 = vmatprep.subr.mxu0 0.0
        %2853 = vmatpush2.msra.mxu0 0.0
        %2854 = vmatprep.subr.mxu0 0.0
        %2855 = vmatpush2.msra.mxu0 0.0
        %2856 = vmatprep.subr.mxu0 0.0
        %2857 = vmatpush2.msra.mxu0 0.0
        %2858 = vmatprep.subr.mxu0 0.0
        %2859 = vmatpush2.msra.mxu0 0.0
        %2860 = vmatprep.subr.mxu0 0.0
        %2861 = vmatpush2.msra.mxu0 0.0
        %2862 = vmatprep.subr.mxu0 0.0
        %2863 = vmatpush2.msra.mxu0 0.0
        %2864 = vmatprep.subr.mxu0 0.0
        %2865 = vmatpush2.msra.mxu0 0.0
        %2866 = vmatprep.mubr.f32.mxu0 0.0
        %2867 = vmatmul.mubr.f32.gmra.mxu0 %v2800
        %v2868 = vpop.f32.mrf.mxu0
        %v2869 = vadd.f32 0.0, %v2868
        %v2870 = vpop.f32.mrf.mxu0
        %2871 = vdwg.mxu0
        %v2873 = vsel %vm251, %v2643, 0
        %2875 = vmatprep.subr.mxu0 0.0
        %2876 = vmatpush1.msra.mxu0 0.0
        %2877 = vmatprep.subr.mxu0 0.0
        %2878 = vmatpush1.msra.mxu0 0.0
        %2879 = vmatprep.subr.mxu0 0.0
        %2880 = vmatpush1.msra.mxu0 0.0
        %2881 = vmatprep.subr.mxu0 0.0
        %2882 = vmatpush1.msra.mxu0 0.0
        %2883 = vmatprep.subr.mxu0 0.0
        %2884 = vmatpush1.msra.mxu0 0.0
        %2885 = vmatprep.subr.mxu0 0.0
        %2886 = vmatpush1.msra.mxu0 0.0
        %2887 = vmatprep.subr.mxu0 0.0
        %2888 = vmatpush1.msra.mxu0 0.0
        %2889 = vmatprep.subr.mxu0 0.0
        %2890 = vmatpush1.msra.mxu0 0.0
        %2891 = vmatprep.subr.mxu0 0.0
        %2892 = vmatpush1.msra.mxu0 0.0
        %2893 = vmatprep.subr.mxu0 0.0
        %2894 = vmatpush1.msra.mxu0 0.0
        %2895 = vmatprep.subr.mxu0 0.0
        %2896 = vmatpush1.msra.mxu0 0.0
        %2897 = vmatprep.subr.mxu0 0.0
        %2898 = vmatpush1.msra.mxu0 0.0
        %2899 = vmatprep.subr.mxu0 0.0
        %2900 = vmatpush1.msra.mxu0 0.0
        %2901 = vmatprep.subr.mxu0 0.0
        %2902 = vmatpush1.msra.mxu0 0.0
        %2903 = vmatprep.subr.mxu0 0.0
        %2904 = vmatpush1.msra.mxu0 0.0
        %2905 = vmatprep.subr.mxu0 0.0
        %2906 = vmatpush1.msra.mxu0 %v2654
        %2907 = vmatprep.subr.mxu0 0.0
        %2908 = vmatpush2.msra.mxu0 0.0
        %2909 = vmatprep.subr.mxu0 0.0
        %2910 = vmatpush2.msra.mxu0 0.0
        %2911 = vmatprep.subr.mxu0 0.0
        %2912 = vmatpush2.msra.mxu0 0.0
        %2913 = vmatprep.subr.mxu0 0.0
        %2914 = vmatpush2.msra.mxu0 0.0
        %2915 = vmatprep.subr.mxu0 0.0
        %2916 = vmatpush2.msra.mxu0 0.0
        %2917 = vmatprep.subr.mxu0 0.0
        %2918 = vmatpush2.msra.mxu0 0.0
        %2919 = vmatprep.subr.mxu0 0.0
        %2920 = vmatpush2.msra.mxu0 0.0
        %2921 = vmatprep.subr.mxu0 0.0
        %2922 = vmatpush2.msra.mxu0 0.0
        %2923 = vmatprep.subr.mxu0 0.0
        %2924 = vmatpush2.msra.mxu0 0.0
        %2925 = vmatprep.subr.mxu0 0.0
        %2926 = vmatpush2.msra.mxu0 0.0
        %2927 = vmatprep.subr.mxu0 0.0
        %2928 = vmatpush2.msra.mxu0 0.0
        %2929 = vmatprep.subr.mxu0 0.0
        %2930 = vmatpush2.msra.mxu0 0.0
        %2931 = vmatprep.subr.mxu0 0.0
        %2932 = vmatpush2.msra.mxu0 0.0
        %2933 = vmatprep.subr.mxu0 0.0
        %2934 = vmatpush2.msra.mxu0 0.0
        %2935 = vmatprep.subr.mxu0 0.0
        %2936 = vmatpush2.msra.mxu0 0.0
        %2937 = vmatprep.subr.mxu0 0.0
        %2938 = vmatpush2.msra.mxu0 0.0
        %2939 = vmatprep.mubr.f32.mxu0 0.0
        %2940 = vmatmul.mubr.f32.gmra.mxu0 %v2873
        %v2941 = vpop.f32.mrf.mxu0
        %v2942 = vadd.f32 0.0, %v2941
        %v2943 = vpop.f32.mrf.mxu0
        %2944 = vdwg.mxu0
        %v2946 = vsel %vm251, %v2644, 0
        %2948 = vmatprep.subr.mxu0 0.0
        %2949 = vmatpush1.msra.mxu0 0.0
        %2950 = vmatprep.subr.mxu0 0.0
        %2951 = vmatpush1.msra.mxu0 0.0
        %2952 = vmatprep.subr.mxu0 0.0
        %2953 = vmatpush1.msra.mxu0 0.0
        %2954 = vmatprep.subr.mxu0 0.0
        %2955 = vmatpush1.msra.mxu0 0.0
        %2956 = vmatprep.subr.mxu0 0.0
        %2957 = vmatpush1.msra.mxu0 0.0
        %2958 = vmatprep.subr.mxu0 0.0
        %2959 = vmatpush1.msra.mxu0 0.0
        %2960 = vmatprep.subr.mxu0 0.0
        %2961 = vmatpush1.msra.mxu0 0.0
        %2962 = vmatprep.subr.mxu0 0.0
        %2963 = vmatpush1.msra.mxu0 0.0
        %2964 = vmatprep.subr.mxu0 0.0
        %2965 = vmatpush1.msra.mxu0 0.0
        %2966 = vmatprep.subr.mxu0 0.0
        %2967 = vmatpush1.msra.mxu0 0.0
        %2968 = vmatprep.subr.mxu0 0.0
        %2969 = vmatpush1.msra.mxu0 0.0
        %2970 = vmatprep.subr.mxu0 0.0
        %2971 = vmatpush1.msra.mxu0 0.0
        %2972 = vmatprep.subr.mxu0 0.0
        %2973 = vmatpush1.msra.mxu0 0.0
        %2974 = vmatprep.subr.mxu0 0.0
        %2975 = vmatpush1.msra.mxu0 0.0
        %2976 = vmatprep.subr.mxu0 0.0
        %2977 = vmatpush1.msra.mxu0 0.0
        %2978 = vmatprep.subr.mxu0 0.0
        %2979 = vmatpush1.msra.mxu0 %v2654
        %2980 = vmatprep.subr.mxu0 0.0
        %2981 = vmatpush2.msra.mxu0 0.0
        %2982 = vmatprep.subr.mxu0 0.0
        %2983 = vmatpush2.msra.mxu0 0.0
        %2984 = vmatprep.subr.mxu0 0.0
        %2985 = vmatpush2.msra.mxu0 0.0
        %2986 = vmatprep.subr.mxu0 0.0
        %2987 = vmatpush2.msra.mxu0 0.0
        %2988 = vmatprep.subr.mxu0 0.0
        %2989 = vmatpush2.msra.mxu0 0.0
        %2990 = vmatprep.subr.mxu0 0.0
        %2991 = vmatpush2.msra.mxu0 0.0
        %2992 = vmatprep.subr.mxu0 0.0
        %2993 = vmatpush2.msra.mxu0 0.0
        %2994 = vmatprep.subr.mxu0 0.0
        %2995 = vmatpush2.msra.mxu0 0.0
        %2996 = vmatprep.subr.mxu0 0.0
        %2997 = vmatpush2.msra.mxu0 0.0
        %2998 = vmatprep.subr.mxu0 0.0
        %2999 = vmatpush2.msra.mxu0 0.0
        %3000 = vmatprep.subr.mxu0 0.0
        %3001 = vmatpush2.msra.mxu0 0.0
        %3002 = vmatprep.subr.mxu0 0.0
        %3003 = vmatpush2.msra.mxu0 0.0
        %3004 = vmatprep.subr.mxu0 0.0
        %3005 = vmatpush2.msra.mxu0 0.0
        %3006 = vmatprep.subr.mxu0 0.0
        %3007 = vmatpush2.msra.mxu0 0.0
        %3008 = vmatprep.subr.mxu0 0.0
        %3009 = vmatpush2.msra.mxu0 0.0
        %3010 = vmatprep.subr.mxu0 0.0
        %3011 = vmatpush2.msra.mxu0 0.0
        %3012 = vmatprep.mubr.f32.mxu0 0.0
        %3013 = vmatmul.mubr.f32.gmra.mxu0 %v2946
        %v3014 = vpop.f32.mrf.mxu0
        %v3015 = vadd.f32 0.0, %v3014
        %v3016 = vpop.f32.mrf.mxu0
        %3017 = vdwg.mxu0
        %v3019 = vsel %vm251, %v2645, 0
        %3021 = vmatprep.subr.mxu0 0.0
        %3022 = vmatpush1.msra.mxu0 0.0
        %3023 = vmatprep.subr.mxu0 0.0
        %3024 = vmatpush1.msra.mxu0 0.0
        %3025 = vmatprep.subr.mxu0 0.0
        %3026 = vmatpush1.msra.mxu0 0.0
        %3027 = vmatprep.subr.mxu0 0.0
        %3028 = vmatpush1.msra.mxu0 0.0
        %3029 = vmatprep.subr.mxu0 0.0
        %3030 = vmatpush1.msra.mxu0 0.0
        %3031 = vmatprep.subr.mxu0 0.0
        %3032 = vmatpush1.msra.mxu0 0.0
        %3033 = vmatprep.subr.mxu0 0.0
        %3034 = vmatpush1.msra.mxu0 0.0
        %3035 = vmatprep.subr.mxu0 0.0
        %3036 = vmatpush1.msra.mxu0 0.0
        %3037 = vmatprep.subr.mxu0 0.0
        %3038 = vmatpush1.msra.mxu0 0.0
        %3039 = vmatprep.subr.mxu0 0.0
        %3040 = vmatpush1.msra.mxu0 0.0
        %3041 = vmatprep.subr.mxu0 0.0
        %3042 = vmatpush1.msra.mxu0 0.0
        %3043 = vmatprep.subr.mxu0 0.0
        %3044 = vmatpush1.msra.mxu0 0.0
        %3045 = vmatprep.subr.mxu0 0.0
        %3046 = vmatpush1.msra.mxu0 0.0
        %3047 = vmatprep.subr.mxu0 0.0
        %3048 = vmatpush1.msra.mxu0 0.0
        %3049 = vmatprep.subr.mxu0 0.0
        %3050 = vmatpush1.msra.mxu0 0.0
        %3051 = vmatprep.subr.mxu0 0.0
        %3052 = vmatpush1.msra.mxu0 %v2654
        %3053 = vmatprep.subr.mxu0 0.0
        %3054 = vmatpush2.msra.mxu0 0.0
        %3055 = vmatprep.subr.mxu0 0.0
        %3056 = vmatpush2.msra.mxu0 0.0
        %3057 = vmatprep.subr.mxu0 0.0
        %3058 = vmatpush2.msra.mxu0 0.0
        %3059 = vmatprep.subr.mxu0 0.0
        %3060 = vmatpush2.msra.mxu0 0.0
        %3061 = vmatprep.subr.mxu0 0.0
        %3062 = vmatpush2.msra.mxu0 0.0
        %3063 = vmatprep.subr.mxu0 0.0
        %3064 = vmatpush2.msra.mxu0 0.0
        %3065 = vmatprep.subr.mxu0 0.0
        %3066 = vmatpush2.msra.mxu0 0.0
        %3067 = vmatprep.subr.mxu0 0.0
        %3068 = vmatpush2.msra.mxu0 0.0
        %3069 = vmatprep.subr.mxu0 0.0
        %3070 = vmatpush2.msra.mxu0 0.0
        %3071 = vmatprep.subr.mxu0 0.0
        %3072 = vmatpush2.msra.mxu0 0.0
        %3073 = vmatprep.subr.mxu0 0.0
        %3074 = vmatpush2.msra.mxu0 0.0
        %3075 = vmatprep.subr.mxu0 0.0
        %3076 = vmatpush2.msra.mxu0 0.0
        %3077 = vmatprep.subr.mxu0 0.0
        %3078 = vmatpush2.msra.mxu0 0.0
        %3079 = vmatprep.subr.mxu0 0.0
        %3080 = vmatpush2.msra.mxu0 0.0
        %3081 = vmatprep.subr.mxu0 0.0
        %3082 = vmatpush2.msra.mxu0 0.0
        %3083 = vmatprep.subr.mxu0 0.0
        %3084 = vmatpush2.msra.mxu0 0.0
        %3085 = vmatprep.mubr.f32.mxu0 0.0
        %3086 = vmatmul.mubr.f32.gmra.mxu0 %v3019
        %v3087 = vpop.f32.mrf.mxu0
        %v3088 = vadd.f32 0.0, %v3087
        %v3089 = vpop.f32.mrf.mxu0
        %3090 = vdwg.mxu0
        %v3092 = vsel %vm251, %v2646, 0
        %3094 = vmatprep.subr.mxu0 0.0
        %3095 = vmatpush1.msra.mxu0 0.0
        %3096 = vmatprep.subr.mxu0 0.0
        %3097 = vmatpush1.msra.mxu0 0.0
        %3098 = vmatprep.subr.mxu0 0.0
        %3099 = vmatpush1.msra.mxu0 0.0
        %3100 = vmatprep.subr.mxu0 0.0
        %3101 = vmatpush1.msra.mxu0 0.0
        %3102 = vmatprep.subr.mxu0 0.0
        %3103 = vmatpush1.msra.mxu0 0.0
        %3104 = vmatprep.subr.mxu0 0.0
        %3105 = vmatpush1.msra.mxu0 0.0
        %3106 = vmatprep.subr.mxu0 0.0
        %3107 = vmatpush1.msra.mxu0 0.0
        %3108 = vmatprep.subr.mxu0 0.0
        %3109 = vmatpush1.msra.mxu0 0.0
        %3110 = vmatprep.subr.mxu0 0.0
        %3111 = vmatpush1.msra.mxu0 0.0
        %3112 = vmatprep.subr.mxu0 0.0
        %3113 = vmatpush1.msra.mxu0 0.0
        %3114 = vmatprep.subr.mxu0 0.0
        %3115 = vmatpush1.msra.mxu0 0.0
        %3116 = vmatprep.subr.mxu0 0.0
        %3117 = vmatpush1.msra.mxu0 0.0
        %3118 = vmatprep.subr.mxu0 0.0
        %3119 = vmatpush1.msra.mxu0 0.0
        %3120 = vmatprep.subr.mxu0 0.0
        %3121 = vmatpush1.msra.mxu0 0.0
        %3122 = vmatprep.subr.mxu0 0.0
        %3123 = vmatpush1.msra.mxu0 0.0
        %3124 = vmatprep.subr.mxu0 0.0
        %3125 = vmatpush1.msra.mxu0 %v2654
        %3126 = vmatprep.subr.mxu0 0.0
        %3127 = vmatpush2.msra.mxu0 0.0
        %3128 = vmatprep.subr.mxu0 0.0
        %3129 = vmatpush2.msra.mxu0 0.0
        %3130 = vmatprep.subr.mxu0 0.0
        %3131 = vmatpush2.msra.mxu0 0.0
        %3132 = vmatprep.subr.mxu0 0.0
        %3133 = vmatpush2.msra.mxu0 0.0
        %3134 = vmatprep.subr.mxu0 0.0
        %3135 = vmatpush2.msra.mxu0 0.0
        %3136 = vmatprep.subr.mxu0 0.0
        %3137 = vmatpush2.msra.mxu0 0.0
        %3138 = vmatprep.subr.mxu0 0.0
        %3139 = vmatpush2.msra.mxu0 0.0
        %3140 = vmatprep.subr.mxu0 0.0
        %3141 = vmatpush2.msra.mxu0 0.0
        %3142 = vmatprep.subr.mxu0 0.0
        %3143 = vmatpush2.msra.mxu0 0.0
        %3144 = vmatprep.subr.mxu0 0.0
        %3145 = vmatpush2.msra.mxu0 0.0
        %3146 = vmatprep.subr.mxu0 0.0
        %3147 = vmatpush2.msra.mxu0 0.0
        %3148 = vmatprep.subr.mxu0 0.0
        %3149 = vmatpush2.msra.mxu0 0.0
        %3150 = vmatprep.subr.mxu0 0.0
        %3151 = vmatpush2.msra.mxu0 0.0
        %3152 = vmatprep.subr.mxu0 0.0
        %3153 = vmatpush2.msra.mxu0 0.0
        %3154 = vmatprep.subr.mxu0 0.0
        %3155 = vmatpush2.msra.mxu0 0.0
        %3156 = vmatprep.subr.mxu0 0.0
        %3157 = vmatpush2.msra.mxu0 0.0
        %3158 = vmatprep.mubr.f32.mxu0 0.0
        %3159 = vmatmul.mubr.f32.gmra.mxu0 %v3092
        %v3160 = vpop.f32.mrf.mxu0
        %v3161 = vadd.f32 0.0, %v3160
        %v3162 = vpop.f32.mrf.mxu0
        %3163 = vdwg.mxu0
        %v3165 = vsel %vm251, %v2647, 0
        %3167 = vmatprep.subr.mxu0 0.0
        %3168 = vmatpush1.msra.mxu0 0.0
        %3169 = vmatprep.subr.mxu0 0.0
        %3170 = vmatpush1.msra.mxu0 0.0
        %3171 = vmatprep.subr.mxu0 0.0
        %3172 = vmatpush1.msra.mxu0 0.0
        %3173 = vmatprep.subr.mxu0 0.0
        %3174 = vmatpush1.msra.mxu0 0.0
        %3175 = vmatprep.subr.mxu0 0.0
        %3176 = vmatpush1.msra.mxu0 0.0
        %3177 = vmatprep.subr.mxu0 0.0
        %3178 = vmatpush1.msra.mxu0 0.0
        %3179 = vmatprep.subr.mxu0 0.0
        %3180 = vmatpush1.msra.mxu0 0.0
        %3181 = vmatprep.subr.mxu0 0.0
        %3182 = vmatpush1.msra.mxu0 0.0
        %3183 = vmatprep.subr.mxu0 0.0
        %3184 = vmatpush1.msra.mxu0 0.0
        %3185 = vmatprep.subr.mxu0 0.0
        %3186 = vmatpush1.msra.mxu0 0.0
        %3187 = vmatprep.subr.mxu0 0.0
        %3188 = vmatpush1.msra.mxu0 0.0
        %3189 = vmatprep.subr.mxu0 0.0
        %3190 = vmatpush1.msra.mxu0 0.0
        %3191 = vmatprep.subr.mxu0 0.0
        %3192 = vmatpush1.msra.mxu0 0.0
        %3193 = vmatprep.subr.mxu0 0.0
        %3194 = vmatpush1.msra.mxu0 0.0
        %3195 = vmatprep.subr.mxu0 0.0
        %3196 = vmatpush1.msra.mxu0 0.0
        %3197 = vmatprep.subr.mxu0 0.0
        %3198 = vmatpush1.msra.mxu0 %v2654
        %3199 = vmatprep.subr.mxu0 0.0
        %3200 = vmatpush2.msra.mxu0 0.0
        %3201 = vmatprep.subr.mxu0 0.0
        %3202 = vmatpush2.msra.mxu0 0.0
        %3203 = vmatprep.subr.mxu0 0.0
        %3204 = vmatpush2.msra.mxu0 0.0
        %3205 = vmatprep.subr.mxu0 0.0
        %3206 = vmatpush2.msra.mxu0 0.0
        %3207 = vmatprep.subr.mxu0 0.0
        %3208 = vmatpush2.msra.mxu0 0.0
        %3209 = vmatprep.subr.mxu0 0.0
        %3210 = vmatpush2.msra.mxu0 0.0
        %3211 = vmatprep.subr.mxu0 0.0
        %3212 = vmatpush2.msra.mxu0 0.0
        %3213 = vmatprep.subr.mxu0 0.0
        %3214 = vmatpush2.msra.mxu0 0.0
        %3215 = vmatprep.subr.mxu0 0.0
        %3216 = vmatpush2.msra.mxu0 0.0
        %3217 = vmatprep.subr.mxu0 0.0
        %3218 = vmatpush2.msra.mxu0 0.0
        %3219 = vmatprep.subr.mxu0 0.0
        %3220 = vmatpush2.msra.mxu0 0.0
        %3221 = vmatprep.subr.mxu0 0.0
        %3222 = vmatpush2.msra.mxu0 0.0
        %3223 = vmatprep.subr.mxu0 0.0
        %3224 = vmatpush2.msra.mxu0 0.0
        %3225 = vmatprep.subr.mxu0 0.0
        %3226 = vmatpush2.msra.mxu0 0.0
        %3227 = vmatprep.subr.mxu0 0.0
        %3228 = vmatpush2.msra.mxu0 0.0
        %3229 = vmatprep.subr.mxu0 0.0
        %3230 = vmatpush2.msra.mxu0 0.0
        %3231 = vmatprep.mubr.f32.mxu0 0.0
        %3232 = vmatmul.mubr.f32.gmra.mxu0 %v3165
        %v3233 = vpop.f32.mrf.mxu0
        %v3234 = vadd.f32 0.0, %v3233
        %v3235 = vpop.f32.mrf.mxu0
        %3236 = vdwg.mxu0
        %v3237 = vadd.f32 %v2631, %v2723
        %v3238 = vadd.f32 %v2632, %v2796
        %v3239 = vadd.f32 %v2633, %v2869
        %v3240 = vadd.f32 %v2634, %v2942
        %v3241 = vadd.f32 %v2635, %v3015
        %v3242 = vadd.f32 %v2636, %v3088
        %v3243 = vadd.f32 %v2637, %v3161
        %v3244 = vadd.f32 %v2638, %v3234
        %s3245 = scalar_lea.vmem %s222, 360
        %v3246 = vld [vmem:[%s3245] sm:$0xff]
        %v3247 = vld [vmem:[%s3245 + $0x8] sm:$0xff]
        %v3248 = vld [vmem:[%s3245 + $0x10] sm:$0xff]
        %v3249 = vld [vmem:[%s3245 + $0x18] sm:$0xff]
        %v3250 = vld [vmem:[%s3245 + $0x20] sm:$0xff]
        %v3251 = vld [vmem:[%s3245 + $0x28] sm:$0xff]
        %v3252 = vld [vmem:[%s3245 + $0x30] sm:$0xff]
        %v3253 = vld [vmem:[%s3245 + $0x38] sm:$0xff]
        %s3254 = scalar_lea.vmem %s227, 20
        %v3255 = vld [vmem:[%s3254] sm:$0xf]
        %v3257 = vsel %vm251, %v3246, 0
        %v3260 = vsel %vm255, %v3255, 0
        %3262 = vmatprep.subr.mxu0 0.0
        %3263 = vmatpush1.msra.mxu0 0.0
        %3264 = vmatprep.subr.mxu0 0.0
        %3265 = vmatpush1.msra.mxu0 0.0
        %3266 = vmatprep.subr.mxu0 0.0
        %3267 = vmatpush1.msra.mxu0 0.0
        %3268 = vmatprep.subr.mxu0 0.0
        %3269 = vmatpush1.msra.mxu0 0.0
        %3270 = vmatprep.subr.mxu0 0.0
        %3271 = vmatpush1.msra.mxu0 0.0
        %3272 = vmatprep.subr.mxu0 0.0
        %3273 = vmatpush1.msra.mxu0 0.0
        %3274 = vmatprep.subr.mxu0 0.0
        %3275 = vmatpush1.msra.mxu0 0.0
        %3276 = vmatprep.subr.mxu0 0.0
        %3277 = vmatpush1.msra.mxu0 0.0
        %3278 = vmatprep.subr.mxu0 0.0
        %3279 = vmatpush1.msra.mxu0 0.0
        %3280 = vmatprep.subr.mxu0 0.0
        %3281 = vmatpush1.msra.mxu0 0.0
        %3282 = vmatprep.subr.mxu0 0.0
        %3283 = vmatpush1.msra.mxu0 0.0
        %3284 = vmatprep.subr.mxu0 0.0
        %3285 = vmatpush1.msra.mxu0 0.0
        %3286 = vmatprep.subr.mxu0 0.0
        %3287 = vmatpush1.msra.mxu0 0.0
        %3288 = vmatprep.subr.mxu0 0.0
        %3289 = vmatpush1.msra.mxu0 0.0
        %3290 = vmatprep.subr.mxu0 0.0
        %3291 = vmatpush1.msra.mxu0 0.0
        %3292 = vmatprep.subr.mxu0 0.0
        %3293 = vmatpush1.msra.mxu0 %v3260
        %3294 = vmatprep.subr.mxu0 0.0
        %3295 = vmatpush2.msra.mxu0 0.0
        %3296 = vmatprep.subr.mxu0 0.0
        %3297 = vmatpush2.msra.mxu0 0.0
        %3298 = vmatprep.subr.mxu0 0.0
        %3299 = vmatpush2.msra.mxu0 0.0
        %3300 = vmatprep.subr.mxu0 0.0
        %3301 = vmatpush2.msra.mxu0 0.0
        %3302 = vmatprep.subr.mxu0 0.0
        %3303 = vmatpush2.msra.mxu0 0.0
        %3304 = vmatprep.subr.mxu0 0.0
        %3305 = vmatpush2.msra.mxu0 0.0
        %3306 = vmatprep.subr.mxu0 0.0
        %3307 = vmatpush2.msra.mxu0 0.0
        %3308 = vmatprep.subr.mxu0 0.0
        %3309 = vmatpush2.msra.mxu0 0.0
        %3310 = vmatprep.subr.mxu0 0.0
        %3311 = vmatpush2.msra.mxu0 0.0
        %3312 = vmatprep.subr.mxu0 0.0
        %3313 = vmatpush2.msra.mxu0 0.0
        %3314 = vmatprep.subr.mxu0 0.0
        %3315 = vmatpush2.msra.mxu0 0.0
        %3316 = vmatprep.subr.mxu0 0.0
        %3317 = vmatpush2.msra.mxu0 0.0
        %3318 = vmatprep.subr.mxu0 0.0
        %3319 = vmatpush2.msra.mxu0 0.0
        %3320 = vmatprep.subr.mxu0 0.0
        %3321 = vmatpush2.msra.mxu0 0.0
        %3322 = vmatprep.subr.mxu0 0.0
        %3323 = vmatpush2.msra.mxu0 0.0
        %3324 = vmatprep.subr.mxu0 0.0
        %3325 = vmatpush2.msra.mxu0 0.0
        %3326 = vmatprep.mubr.f32.mxu0 0.0
        %3327 = vmatmul.mubr.f32.gmra.mxu0 %v3257
        %v3328 = vpop.f32.mrf.mxu0
        %v3329 = vadd.f32 0.0, %v3328
        %v3330 = vpop.f32.mrf.mxu0
        %3331 = vdwg.mxu0
        %v3333 = vsel %vm251, %v3247, 0
        %3335 = vmatprep.subr.mxu0 0.0
        %3336 = vmatpush1.msra.mxu0 0.0
        %3337 = vmatprep.subr.mxu0 0.0
        %3338 = vmatpush1.msra.mxu0 0.0
        %3339 = vmatprep.subr.mxu0 0.0
        %3340 = vmatpush1.msra.mxu0 0.0
        %3341 = vmatprep.subr.mxu0 0.0
        %3342 = vmatpush1.msra.mxu0 0.0
        %3343 = vmatprep.subr.mxu0 0.0
        %3344 = vmatpush1.msra.mxu0 0.0
        %3345 = vmatprep.subr.mxu0 0.0
        %3346 = vmatpush1.msra.mxu0 0.0
        %3347 = vmatprep.subr.mxu0 0.0
        %3348 = vmatpush1.msra.mxu0 0.0
        %3349 = vmatprep.subr.mxu0 0.0
        %3350 = vmatpush1.msra.mxu0 0.0
        %3351 = vmatprep.subr.mxu0 0.0
        %3352 = vmatpush1.msra.mxu0 0.0
        %3353 = vmatprep.subr.mxu0 0.0
        %3354 = vmatpush1.msra.mxu0 0.0
        %3355 = vmatprep.subr.mxu0 0.0
        %3356 = vmatpush1.msra.mxu0 0.0
        %3357 = vmatprep.subr.mxu0 0.0
        %3358 = vmatpush1.msra.mxu0 0.0
        %3359 = vmatprep.subr.mxu0 0.0
        %3360 = vmatpush1.msra.mxu0 0.0
        %3361 = vmatprep.subr.mxu0 0.0
        %3362 = vmatpush1.msra.mxu0 0.0
        %3363 = vmatprep.subr.mxu0 0.0
        %3364 = vmatpush1.msra.mxu0 0.0
        %3365 = vmatprep.subr.mxu0 0.0
        %3366 = vmatpush1.msra.mxu0 %v3260
        %3367 = vmatprep.subr.mxu0 0.0
        %3368 = vmatpush2.msra.mxu0 0.0
        %3369 = vmatprep.subr.mxu0 0.0
        %3370 = vmatpush2.msra.mxu0 0.0
        %3371 = vmatprep.subr.mxu0 0.0
        %3372 = vmatpush2.msra.mxu0 0.0
        %3373 = vmatprep.subr.mxu0 0.0
        %3374 = vmatpush2.msra.mxu0 0.0
        %3375 = vmatprep.subr.mxu0 0.0
        %3376 = vmatpush2.msra.mxu0 0.0
        %3377 = vmatprep.subr.mxu0 0.0
        %3378 = vmatpush2.msra.mxu0 0.0
        %3379 = vmatprep.subr.mxu0 0.0
        %3380 = vmatpush2.msra.mxu0 0.0
        %3381 = vmatprep.subr.mxu0 0.0
        %3382 = vmatpush2.msra.mxu0 0.0
        %3383 = vmatprep.subr.mxu0 0.0
        %3384 = vmatpush2.msra.mxu0 0.0
        %3385 = vmatprep.subr.mxu0 0.0
        %3386 = vmatpush2.msra.mxu0 0.0
        %3387 = vmatprep.subr.mxu0 0.0
        %3388 = vmatpush2.msra.mxu0 0.0
        %3389 = vmatprep.subr.mxu0 0.0
        %3390 = vmatpush2.msra.mxu0 0.0
        %3391 = vmatprep.subr.mxu0 0.0
        %3392 = vmatpush2.msra.mxu0 0.0
        %3393 = vmatprep.subr.mxu0 0.0
        %3394 = vmatpush2.msra.mxu0 0.0
        %3395 = vmatprep.subr.mxu0 0.0
        %3396 = vmatpush2.msra.mxu0 0.0
        %3397 = vmatprep.subr.mxu0 0.0
        %3398 = vmatpush2.msra.mxu0 0.0
        %3399 = vmatprep.mubr.f32.mxu0 0.0
        %3400 = vmatmul.mubr.f32.gmra.mxu0 %v3333
        %v3401 = vpop.f32.mrf.mxu0
        %v3402 = vadd.f32 0.0, %v3401
        %v3403 = vpop.f32.mrf.mxu0
        %3404 = vdwg.mxu0
        %v3406 = vsel %vm251, %v3248, 0
        %3408 = vmatprep.subr.mxu0 0.0
        %3409 = vmatpush1.msra.mxu0 0.0
        %3410 = vmatprep.subr.mxu0 0.0
        %3411 = vmatpush1.msra.mxu0 0.0
        %3412 = vmatprep.subr.mxu0 0.0
        %3413 = vmatpush1.msra.mxu0 0.0
        %3414 = vmatprep.subr.mxu0 0.0
        %3415 = vmatpush1.msra.mxu0 0.0
        %3416 = vmatprep.subr.mxu0 0.0
        %3417 = vmatpush1.msra.mxu0 0.0
        %3418 = vmatprep.subr.mxu0 0.0
        %3419 = vmatpush1.msra.mxu0 0.0
        %3420 = vmatprep.subr.mxu0 0.0
        %3421 = vmatpush1.msra.mxu0 0.0
        %3422 = vmatprep.subr.mxu0 0.0
        %3423 = vmatpush1.msra.mxu0 0.0
        %3424 = vmatprep.subr.mxu0 0.0
        %3425 = vmatpush1.msra.mxu0 0.0
        %3426 = vmatprep.subr.mxu0 0.0
        %3427 = vmatpush1.msra.mxu0 0.0
        %3428 = vmatprep.subr.mxu0 0.0
        %3429 = vmatpush1.msra.mxu0 0.0
        %3430 = vmatprep.subr.mxu0 0.0
        %3431 = vmatpush1.msra.mxu0 0.0
        %3432 = vmatprep.subr.mxu0 0.0
        %3433 = vmatpush1.msra.mxu0 0.0
        %3434 = vmatprep.subr.mxu0 0.0
        %3435 = vmatpush1.msra.mxu0 0.0
        %3436 = vmatprep.subr.mxu0 0.0
        %3437 = vmatpush1.msra.mxu0 0.0
        %3438 = vmatprep.subr.mxu0 0.0
        %3439 = vmatpush1.msra.mxu0 %v3260
        %3440 = vmatprep.subr.mxu0 0.0
        %3441 = vmatpush2.msra.mxu0 0.0
        %3442 = vmatprep.subr.mxu0 0.0
        %3443 = vmatpush2.msra.mxu0 0.0
        %3444 = vmatprep.subr.mxu0 0.0
        %3445 = vmatpush2.msra.mxu0 0.0
        %3446 = vmatprep.subr.mxu0 0.0
        %3447 = vmatpush2.msra.mxu0 0.0
        %3448 = vmatprep.subr.mxu0 0.0
        %3449 = vmatpush2.msra.mxu0 0.0
        %3450 = vmatprep.subr.mxu0 0.0
        %3451 = vmatpush2.msra.mxu0 0.0
        %3452 = vmatprep.subr.mxu0 0.0
        %3453 = vmatpush2.msra.mxu0 0.0
        %3454 = vmatprep.subr.mxu0 0.0
        %3455 = vmatpush2.msra.mxu0 0.0
        %3456 = vmatprep.subr.mxu0 0.0
        %3457 = vmatpush2.msra.mxu0 0.0
        %3458 = vmatprep.subr.mxu0 0.0
        %3459 = vmatpush2.msra.mxu0 0.0
        %3460 = vmatprep.subr.mxu0 0.0
        %3461 = vmatpush2.msra.mxu0 0.0
        %3462 = vmatprep.subr.mxu0 0.0
        %3463 = vmatpush2.msra.mxu0 0.0
        %3464 = vmatprep.subr.mxu0 0.0
        %3465 = vmatpush2.msra.mxu0 0.0
        %3466 = vmatprep.subr.mxu0 0.0
        %3467 = vmatpush2.msra.mxu0 0.0
        %3468 = vmatprep.subr.mxu0 0.0
        %3469 = vmatpush2.msra.mxu0 0.0
        %3470 = vmatprep.subr.mxu0 0.0
        %3471 = vmatpush2.msra.mxu0 0.0
        %3472 = vmatprep.mubr.f32.mxu0 0.0
        %3473 = vmatmul.mubr.f32.gmra.mxu0 %v3406
        %v3474 = vpop.f32.mrf.mxu0
        %v3475 = vadd.f32 0.0, %v3474
        %v3476 = vpop.f32.mrf.mxu0
        %3477 = vdwg.mxu0
        %v3479 = vsel %vm251, %v3249, 0
        %3481 = vmatprep.subr.mxu0 0.0
        %3482 = vmatpush1.msra.mxu0 0.0
        %3483 = vmatprep.subr.mxu0 0.0
        %3484 = vmatpush1.msra.mxu0 0.0
        %3485 = vmatprep.subr.mxu0 0.0
        %3486 = vmatpush1.msra.mxu0 0.0
        %3487 = vmatprep.subr.mxu0 0.0
        %3488 = vmatpush1.msra.mxu0 0.0
        %3489 = vmatprep.subr.mxu0 0.0
        %3490 = vmatpush1.msra.mxu0 0.0
        %3491 = vmatprep.subr.mxu0 0.0
        %3492 = vmatpush1.msra.mxu0 0.0
        %3493 = vmatprep.subr.mxu0 0.0
        %3494 = vmatpush1.msra.mxu0 0.0
        %3495 = vmatprep.subr.mxu0 0.0
        %3496 = vmatpush1.msra.mxu0 0.0
        %3497 = vmatprep.subr.mxu0 0.0
        %3498 = vmatpush1.msra.mxu0 0.0
        %3499 = vmatprep.subr.mxu0 0.0
        %3500 = vmatpush1.msra.mxu0 0.0
        %3501 = vmatprep.subr.mxu0 0.0
        %3502 = vmatpush1.msra.mxu0 0.0
        %3503 = vmatprep.subr.mxu0 0.0
        %3504 = vmatpush1.msra.mxu0 0.0
        %3505 = vmatprep.subr.mxu0 0.0
        %3506 = vmatpush1.msra.mxu0 0.0
        %3507 = vmatprep.subr.mxu0 0.0
        %3508 = vmatpush1.msra.mxu0 0.0
        %3509 = vmatprep.subr.mxu0 0.0
        %3510 = vmatpush1.msra.mxu0 0.0
        %3511 = vmatprep.subr.mxu0 0.0
        %3512 = vmatpush1.msra.mxu0 %v3260
        %3513 = vmatprep.subr.mxu0 0.0
        %3514 = vmatpush2.msra.mxu0 0.0
        %3515 = vmatprep.subr.mxu0 0.0
        %3516 = vmatpush2.msra.mxu0 0.0
        %3517 = vmatprep.subr.mxu0 0.0
        %3518 = vmatpush2.msra.mxu0 0.0
        %3519 = vmatprep.subr.mxu0 0.0
        %3520 = vmatpush2.msra.mxu0 0.0
        %3521 = vmatprep.subr.mxu0 0.0
        %3522 = vmatpush2.msra.mxu0 0.0
        %3523 = vmatprep.subr.mxu0 0.0
        %3524 = vmatpush2.msra.mxu0 0.0
        %3525 = vmatprep.subr.mxu0 0.0
        %3526 = vmatpush2.msra.mxu0 0.0
        %3527 = vmatprep.subr.mxu0 0.0
        %3528 = vmatpush2.msra.mxu0 0.0
        %3529 = vmatprep.subr.mxu0 0.0
        %3530 = vmatpush2.msra.mxu0 0.0
        %3531 = vmatprep.subr.mxu0 0.0
        %3532 = vmatpush2.msra.mxu0 0.0
        %3533 = vmatprep.subr.mxu0 0.0
        %3534 = vmatpush2.msra.mxu0 0.0
        %3535 = vmatprep.subr.mxu0 0.0
        %3536 = vmatpush2.msra.mxu0 0.0
        %3537 = vmatprep.subr.mxu0 0.0
        %3538 = vmatpush2.msra.mxu0 0.0
        %3539 = vmatprep.subr.mxu0 0.0
        %3540 = vmatpush2.msra.mxu0 0.0
        %3541 = vmatprep.subr.mxu0 0.0
        %3542 = vmatpush2.msra.mxu0 0.0
        %3543 = vmatprep.subr.mxu0 0.0
        %3544 = vmatpush2.msra.mxu0 0.0
        %3545 = vmatprep.mubr.f32.mxu0 0.0
        %3546 = vmatmul.mubr.f32.gmra.mxu0 %v3479
        %v3547 = vpop.f32.mrf.mxu0
        %v3548 = vadd.f32 0.0, %v3547
        %v3549 = vpop.f32.mrf.mxu0
        %3550 = vdwg.mxu0
        %v3552 = vsel %vm251, %v3250, 0
        %3554 = vmatprep.subr.mxu0 0.0
        %3555 = vmatpush1.msra.mxu0 0.0
        %3556 = vmatprep.subr.mxu0 0.0
        %3557 = vmatpush1.msra.mxu0 0.0
        %3558 = vmatprep.subr.mxu0 0.0
        %3559 = vmatpush1.msra.mxu0 0.0
        %3560 = vmatprep.subr.mxu0 0.0
        %3561 = vmatpush1.msra.mxu0 0.0
        %3562 = vmatprep.subr.mxu0 0.0
        %3563 = vmatpush1.msra.mxu0 0.0
        %3564 = vmatprep.subr.mxu0 0.0
        %3565 = vmatpush1.msra.mxu0 0.0
        %3566 = vmatprep.subr.mxu0 0.0
        %3567 = vmatpush1.msra.mxu0 0.0
        %3568 = vmatprep.subr.mxu0 0.0
        %3569 = vmatpush1.msra.mxu0 0.0
        %3570 = vmatprep.subr.mxu0 0.0
        %3571 = vmatpush1.msra.mxu0 0.0
        %3572 = vmatprep.subr.mxu0 0.0
        %3573 = vmatpush1.msra.mxu0 0.0
        %3574 = vmatprep.subr.mxu0 0.0
        %3575 = vmatpush1.msra.mxu0 0.0
        %3576 = vmatprep.subr.mxu0 0.0
        %3577 = vmatpush1.msra.mxu0 0.0
        %3578 = vmatprep.subr.mxu0 0.0
        %3579 = vmatpush1.msra.mxu0 0.0
        %3580 = vmatprep.subr.mxu0 0.0
        %3581 = vmatpush1.msra.mxu0 0.0
        %3582 = vmatprep.subr.mxu0 0.0
        %3583 = vmatpush1.msra.mxu0 0.0
        %3584 = vmatprep.subr.mxu0 0.0
        %3585 = vmatpush1.msra.mxu0 %v3260
        %3586 = vmatprep.subr.mxu0 0.0
        %3587 = vmatpush2.msra.mxu0 0.0
        %3588 = vmatprep.subr.mxu0 0.0
        %3589 = vmatpush2.msra.mxu0 0.0
        %3590 = vmatprep.subr.mxu0 0.0
        %3591 = vmatpush2.msra.mxu0 0.0
        %3592 = vmatprep.subr.mxu0 0.0
        %3593 = vmatpush2.msra.mxu0 0.0
        %3594 = vmatprep.subr.mxu0 0.0
        %3595 = vmatpush2.msra.mxu0 0.0
        %3596 = vmatprep.subr.mxu0 0.0
        %3597 = vmatpush2.msra.mxu0 0.0
        %3598 = vmatprep.subr.mxu0 0.0
        %3599 = vmatpush2.msra.mxu0 0.0
        %3600 = vmatprep.subr.mxu0 0.0
        %3601 = vmatpush2.msra.mxu0 0.0
        %3602 = vmatprep.subr.mxu0 0.0
        %3603 = vmatpush2.msra.mxu0 0.0
        %3604 = vmatprep.subr.mxu0 0.0
        %3605 = vmatpush2.msra.mxu0 0.0
        %3606 = vmatprep.subr.mxu0 0.0
        %3607 = vmatpush2.msra.mxu0 0.0
        %3608 = vmatprep.subr.mxu0 0.0
        %3609 = vmatpush2.msra.mxu0 0.0
        %3610 = vmatprep.subr.mxu0 0.0
        %3611 = vmatpush2.msra.mxu0 0.0
        %3612 = vmatprep.subr.mxu0 0.0
        %3613 = vmatpush2.msra.mxu0 0.0
        %3614 = vmatprep.subr.mxu0 0.0
        %3615 = vmatpush2.msra.mxu0 0.0
        %3616 = vmatprep.subr.mxu0 0.0
        %3617 = vmatpush2.msra.mxu0 0.0
        %3618 = vmatprep.mubr.f32.mxu0 0.0
        %3619 = vmatmul.mubr.f32.gmra.mxu0 %v3552
        %v3620 = vpop.f32.mrf.mxu0
        %v3621 = vadd.f32 0.0, %v3620
        %v3622 = vpop.f32.mrf.mxu0
        %3623 = vdwg.mxu0
        %v3625 = vsel %vm251, %v3251, 0
        %3627 = vmatprep.subr.mxu0 0.0
        %3628 = vmatpush1.msra.mxu0 0.0
        %3629 = vmatprep.subr.mxu0 0.0
        %3630 = vmatpush1.msra.mxu0 0.0
        %3631 = vmatprep.subr.mxu0 0.0
        %3632 = vmatpush1.msra.mxu0 0.0
        %3633 = vmatprep.subr.mxu0 0.0
        %3634 = vmatpush1.msra.mxu0 0.0
        %3635 = vmatprep.subr.mxu0 0.0
        %3636 = vmatpush1.msra.mxu0 0.0
        %3637 = vmatprep.subr.mxu0 0.0
        %3638 = vmatpush1.msra.mxu0 0.0
        %3639 = vmatprep.subr.mxu0 0.0
        %3640 = vmatpush1.msra.mxu0 0.0
        %3641 = vmatprep.subr.mxu0 0.0
        %3642 = vmatpush1.msra.mxu0 0.0
        %3643 = vmatprep.subr.mxu0 0.0
        %3644 = vmatpush1.msra.mxu0 0.0
        %3645 = vmatprep.subr.mxu0 0.0
        %3646 = vmatpush1.msra.mxu0 0.0
        %3647 = vmatprep.subr.mxu0 0.0
        %3648 = vmatpush1.msra.mxu0 0.0
        %3649 = vmatprep.subr.mxu0 0.0
        %3650 = vmatpush1.msra.mxu0 0.0
        %3651 = vmatprep.subr.mxu0 0.0
        %3652 = vmatpush1.msra.mxu0 0.0
        %3653 = vmatprep.subr.mxu0 0.0
        %3654 = vmatpush1.msra.mxu0 0.0
        %3655 = vmatprep.subr.mxu0 0.0
        %3656 = vmatpush1.msra.mxu0 0.0
        %3657 = vmatprep.subr.mxu0 0.0
        %3658 = vmatpush1.msra.mxu0 %v3260
        %3659 = vmatprep.subr.mxu0 0.0
        %3660 = vmatpush2.msra.mxu0 0.0
        %3661 = vmatprep.subr.mxu0 0.0
        %3662 = vmatpush2.msra.mxu0 0.0
        %3663 = vmatprep.subr.mxu0 0.0
        %3664 = vmatpush2.msra.mxu0 0.0
        %3665 = vmatprep.subr.mxu0 0.0
        %3666 = vmatpush2.msra.mxu0 0.0
        %3667 = vmatprep.subr.mxu0 0.0
        %3668 = vmatpush2.msra.mxu0 0.0
        %3669 = vmatprep.subr.mxu0 0.0
        %3670 = vmatpush2.msra.mxu0 0.0
        %3671 = vmatprep.subr.mxu0 0.0
        %3672 = vmatpush2.msra.mxu0 0.0
        %3673 = vmatprep.subr.mxu0 0.0
        %3674 = vmatpush2.msra.mxu0 0.0
        %3675 = vmatprep.subr.mxu0 0.0
        %3676 = vmatpush2.msra.mxu0 0.0
        %3677 = vmatprep.subr.mxu0 0.0
        %3678 = vmatpush2.msra.mxu0 0.0
        %3679 = vmatprep.subr.mxu0 0.0
        %3680 = vmatpush2.msra.mxu0 0.0
        %3681 = vmatprep.subr.mxu0 0.0
        %3682 = vmatpush2.msra.mxu0 0.0
        %3683 = vmatprep.subr.mxu0 0.0
        %3684 = vmatpush2.msra.mxu0 0.0
        %3685 = vmatprep.subr.mxu0 0.0
        %3686 = vmatpush2.msra.mxu0 0.0
        %3687 = vmatprep.subr.mxu0 0.0
        %3688 = vmatpush2.msra.mxu0 0.0
        %3689 = vmatprep.subr.mxu0 0.0
        %3690 = vmatpush2.msra.mxu0 0.0
        %3691 = vmatprep.mubr.f32.mxu0 0.0
        %3692 = vmatmul.mubr.f32.gmra.mxu0 %v3625
        %v3693 = vpop.f32.mrf.mxu0
        %v3694 = vadd.f32 0.0, %v3693
        %v3695 = vpop.f32.mrf.mxu0
        %3696 = vdwg.mxu0
        %v3698 = vsel %vm251, %v3252, 0
        %3700 = vmatprep.subr.mxu0 0.0
        %3701 = vmatpush1.msra.mxu0 0.0
        %3702 = vmatprep.subr.mxu0 0.0
        %3703 = vmatpush1.msra.mxu0 0.0
        %3704 = vmatprep.subr.mxu0 0.0
        %3705 = vmatpush1.msra.mxu0 0.0
        %3706 = vmatprep.subr.mxu0 0.0
        %3707 = vmatpush1.msra.mxu0 0.0
        %3708 = vmatprep.subr.mxu0 0.0
        %3709 = vmatpush1.msra.mxu0 0.0
        %3710 = vmatprep.subr.mxu0 0.0
        %3711 = vmatpush1.msra.mxu0 0.0
        %3712 = vmatprep.subr.mxu0 0.0
        %3713 = vmatpush1.msra.mxu0 0.0
        %3714 = vmatprep.subr.mxu0 0.0
        %3715 = vmatpush1.msra.mxu0 0.0
        %3716 = vmatprep.subr.mxu0 0.0
        %3717 = vmatpush1.msra.mxu0 0.0
        %3718 = vmatprep.subr.mxu0 0.0
        %3719 = vmatpush1.msra.mxu0 0.0
        %3720 = vmatprep.subr.mxu0 0.0
        %3721 = vmatpush1.msra.mxu0 0.0
        %3722 = vmatprep.subr.mxu0 0.0
        %3723 = vmatpush1.msra.mxu0 0.0
        %3724 = vmatprep.subr.mxu0 0.0
        %3725 = vmatpush1.msra.mxu0 0.0
        %3726 = vmatprep.subr.mxu0 0.0
        %3727 = vmatpush1.msra.mxu0 0.0
        %3728 = vmatprep.subr.mxu0 0.0
        %3729 = vmatpush1.msra.mxu0 0.0
        %3730 = vmatprep.subr.mxu0 0.0
        %3731 = vmatpush1.msra.mxu0 %v3260
        %3732 = vmatprep.subr.mxu0 0.0
        %3733 = vmatpush2.msra.mxu0 0.0
        %3734 = vmatprep.subr.mxu0 0.0
        %3735 = vmatpush2.msra.mxu0 0.0
        %3736 = vmatprep.subr.mxu0 0.0
        %3737 = vmatpush2.msra.mxu0 0.0
        %3738 = vmatprep.subr.mxu0 0.0
        %3739 = vmatpush2.msra.mxu0 0.0
        %3740 = vmatprep.subr.mxu0 0.0
        %3741 = vmatpush2.msra.mxu0 0.0
        %3742 = vmatprep.subr.mxu0 0.0
        %3743 = vmatpush2.msra.mxu0 0.0
        %3744 = vmatprep.subr.mxu0 0.0
        %3745 = vmatpush2.msra.mxu0 0.0
        %3746 = vmatprep.subr.mxu0 0.0
        %3747 = vmatpush2.msra.mxu0 0.0
        %3748 = vmatprep.subr.mxu0 0.0
        %3749 = vmatpush2.msra.mxu0 0.0
        %3750 = vmatprep.subr.mxu0 0.0
        %3751 = vmatpush2.msra.mxu0 0.0
        %3752 = vmatprep.subr.mxu0 0.0
        %3753 = vmatpush2.msra.mxu0 0.0
        %3754 = vmatprep.subr.mxu0 0.0
        %3755 = vmatpush2.msra.mxu0 0.0
        %3756 = vmatprep.subr.mxu0 0.0
        %3757 = vmatpush2.msra.mxu0 0.0
        %3758 = vmatprep.subr.mxu0 0.0
        %3759 = vmatpush2.msra.mxu0 0.0
        %3760 = vmatprep.subr.mxu0 0.0
        %3761 = vmatpush2.msra.mxu0 0.0
        %3762 = vmatprep.subr.mxu0 0.0
        %3763 = vmatpush2.msra.mxu0 0.0
        %3764 = vmatprep.mubr.f32.mxu0 0.0
        %3765 = vmatmul.mubr.f32.gmra.mxu0 %v3698
        %v3766 = vpop.f32.mrf.mxu0
        %v3767 = vadd.f32 0.0, %v3766
        %v3768 = vpop.f32.mrf.mxu0
        %3769 = vdwg.mxu0
        %v3771 = vsel %vm251, %v3253, 0
        %3773 = vmatprep.subr.mxu0 0.0
        %3774 = vmatpush1.msra.mxu0 0.0
        %3775 = vmatprep.subr.mxu0 0.0
        %3776 = vmatpush1.msra.mxu0 0.0
        %3777 = vmatprep.subr.mxu0 0.0
        %3778 = vmatpush1.msra.mxu0 0.0
        %3779 = vmatprep.subr.mxu0 0.0
        %3780 = vmatpush1.msra.mxu0 0.0
        %3781 = vmatprep.subr.mxu0 0.0
        %3782 = vmatpush1.msra.mxu0 0.0
        %3783 = vmatprep.subr.mxu0 0.0
        %3784 = vmatpush1.msra.mxu0 0.0
        %3785 = vmatprep.subr.mxu0 0.0
        %3786 = vmatpush1.msra.mxu0 0.0
        %3787 = vmatprep.subr.mxu0 0.0
        %3788 = vmatpush1.msra.mxu0 0.0
        %3789 = vmatprep.subr.mxu0 0.0
        %3790 = vmatpush1.msra.mxu0 0.0
        %3791 = vmatprep.subr.mxu0 0.0
        %3792 = vmatpush1.msra.mxu0 0.0
        %3793 = vmatprep.subr.mxu0 0.0
        %3794 = vmatpush1.msra.mxu0 0.0
        %3795 = vmatprep.subr.mxu0 0.0
        %3796 = vmatpush1.msra.mxu0 0.0
        %3797 = vmatprep.subr.mxu0 0.0
        %3798 = vmatpush1.msra.mxu0 0.0
        %3799 = vmatprep.subr.mxu0 0.0
        %3800 = vmatpush1.msra.mxu0 0.0
        %3801 = vmatprep.subr.mxu0 0.0
        %3802 = vmatpush1.msra.mxu0 0.0
        %3803 = vmatprep.subr.mxu0 0.0
        %3804 = vmatpush1.msra.mxu0 %v3260
        %3805 = vmatprep.subr.mxu0 0.0
        %3806 = vmatpush2.msra.mxu0 0.0
        %3807 = vmatprep.subr.mxu0 0.0
        %3808 = vmatpush2.msra.mxu0 0.0
        %3809 = vmatprep.subr.mxu0 0.0
        %3810 = vmatpush2.msra.mxu0 0.0
        %3811 = vmatprep.subr.mxu0 0.0
        %3812 = vmatpush2.msra.mxu0 0.0
        %3813 = vmatprep.subr.mxu0 0.0
        %3814 = vmatpush2.msra.mxu0 0.0
        %3815 = vmatprep.subr.mxu0 0.0
        %3816 = vmatpush2.msra.mxu0 0.0
        %3817 = vmatprep.subr.mxu0 0.0
        %3818 = vmatpush2.msra.mxu0 0.0
        %3819 = vmatprep.subr.mxu0 0.0
        %3820 = vmatpush2.msra.mxu0 0.0
        %3821 = vmatprep.subr.mxu0 0.0
        %3822 = vmatpush2.msra.mxu0 0.0
        %3823 = vmatprep.subr.mxu0 0.0
        %3824 = vmatpush2.msra.mxu0 0.0
        %3825 = vmatprep.subr.mxu0 0.0
        %3826 = vmatpush2.msra.mxu0 0.0
        %3827 = vmatprep.subr.mxu0 0.0
        %3828 = vmatpush2.msra.mxu0 0.0
        %3829 = vmatprep.subr.mxu0 0.0
        %3830 = vmatpush2.msra.mxu0 0.0
        %3831 = vmatprep.subr.mxu0 0.0
        %3832 = vmatpush2.msra.mxu0 0.0
        %3833 = vmatprep.subr.mxu0 0.0
        %3834 = vmatpush2.msra.mxu0 0.0
        %3835 = vmatprep.subr.mxu0 0.0
        %3836 = vmatpush2.msra.mxu0 0.0
        %3837 = vmatprep.mubr.f32.mxu0 0.0
        %3838 = vmatmul.mubr.f32.gmra.mxu0 %v3771
        %v3839 = vpop.f32.mrf.mxu0
        %v3840 = vadd.f32 0.0, %v3839
        %v3841 = vpop.f32.mrf.mxu0
        %3842 = vdwg.mxu0
        %v3843 = vadd.f32 %v3237, %v3329
        %v3844 = vadd.f32 %v3238, %v3402
        %v3845 = vadd.f32 %v3239, %v3475
        %v3846 = vadd.f32 %v3240, %v3548
        %v3847 = vadd.f32 %v3241, %v3621
        %v3848 = vadd.f32 %v3242, %v3694
        %v3849 = vadd.f32 %v3243, %v3767
        %v3850 = vadd.f32 %v3244, %v3840
        %s3851 = scalar_lea.vmem %s222, 8
        %v3852 = vld [vmem:[%s3851] sm:$0xff]
        %v3853 = vld [vmem:[%s3851 + $0x8] sm:$0xff]
        %v3854 = vld [vmem:[%s3851 + $0x10] sm:$0xff]
        %v3855 = vld [vmem:[%s3851 + $0x18] sm:$0xff]
        %v3856 = vld [vmem:[%s3851 + $0x20] sm:$0xff]
        %v3857 = vld [vmem:[%s3851 + $0x28] sm:$0xff]
        %v3858 = vld [vmem:[%s3851 + $0x30] sm:$0xff]
        %v3859 = vld [vmem:[%s3851 + $0x38] sm:$0xff]
        %s3860 = scalar_lea.vmem %s227, 24
        %v3861 = vld [vmem:[%s3860] sm:$0xf]
        %v3863 = vsel %vm251, %v3852, 0
        %v3866 = vsel %vm255, %v3861, 0
        %3868 = vmatprep.subr.mxu0 0.0
        %3869 = vmatpush1.msra.mxu0 0.0
        %3870 = vmatprep.subr.mxu0 0.0
        %3871 = vmatpush1.msra.mxu0 0.0
        %3872 = vmatprep.subr.mxu0 0.0
        %3873 = vmatpush1.msra.mxu0 0.0
        %3874 = vmatprep.subr.mxu0 0.0
        %3875 = vmatpush1.msra.mxu0 0.0
        %3876 = vmatprep.subr.mxu0 0.0
        %3877 = vmatpush1.msra.mxu0 0.0
        %3878 = vmatprep.subr.mxu0 0.0
        %3879 = vmatpush1.msra.mxu0 0.0
        %3880 = vmatprep.subr.mxu0 0.0
        %3881 = vmatpush1.msra.mxu0 0.0
        %3882 = vmatprep.subr.mxu0 0.0
        %3883 = vmatpush1.msra.mxu0 0.0
        %3884 = vmatprep.subr.mxu0 0.0
        %3885 = vmatpush1.msra.mxu0 0.0
        %3886 = vmatprep.subr.mxu0 0.0
        %3887 = vmatpush1.msra.mxu0 0.0
        %3888 = vmatprep.subr.mxu0 0.0
        %3889 = vmatpush1.msra.mxu0 0.0
        %3890 = vmatprep.subr.mxu0 0.0
        %3891 = vmatpush1.msra.mxu0 0.0
        %3892 = vmatprep.subr.mxu0 0.0
        %3893 = vmatpush1.msra.mxu0 0.0
        %3894 = vmatprep.subr.mxu0 0.0
        %3895 = vmatpush1.msra.mxu0 0.0
        %3896 = vmatprep.subr.mxu0 0.0
        %3897 = vmatpush1.msra.mxu0 0.0
        %3898 = vmatprep.subr.mxu0 0.0
        %3899 = vmatpush1.msra.mxu0 %v3866
        %3900 = vmatprep.subr.mxu0 0.0
        %3901 = vmatpush2.msra.mxu0 0.0
        %3902 = vmatprep.subr.mxu0 0.0
        %3903 = vmatpush2.msra.mxu0 0.0
        %3904 = vmatprep.subr.mxu0 0.0
        %3905 = vmatpush2.msra.mxu0 0.0
        %3906 = vmatprep.subr.mxu0 0.0
        %3907 = vmatpush2.msra.mxu0 0.0
        %3908 = vmatprep.subr.mxu0 0.0
        %3909 = vmatpush2.msra.mxu0 0.0
        %3910 = vmatprep.subr.mxu0 0.0
        %3911 = vmatpush2.msra.mxu0 0.0
        %3912 = vmatprep.subr.mxu0 0.0
        %3913 = vmatpush2.msra.mxu0 0.0
        %3914 = vmatprep.subr.mxu0 0.0
        %3915 = vmatpush2.msra.mxu0 0.0
        %3916 = vmatprep.subr.mxu0 0.0
        %3917 = vmatpush2.msra.mxu0 0.0
        %3918 = vmatprep.subr.mxu0 0.0
        %3919 = vmatpush2.msra.mxu0 0.0
        %3920 = vmatprep.subr.mxu0 0.0
        %3921 = vmatpush2.msra.mxu0 0.0
        %3922 = vmatprep.subr.mxu0 0.0
        %3923 = vmatpush2.msra.mxu0 0.0
        %3924 = vmatprep.subr.mxu0 0.0
        %3925 = vmatpush2.msra.mxu0 0.0
        %3926 = vmatprep.subr.mxu0 0.0
        %3927 = vmatpush2.msra.mxu0 0.0
        %3928 = vmatprep.subr.mxu0 0.0
        %3929 = vmatpush2.msra.mxu0 0.0
        %3930 = vmatprep.subr.mxu0 0.0
        %3931 = vmatpush2.msra.mxu0 0.0
        %3932 = vmatprep.mubr.f32.mxu0 0.0
        %3933 = vmatmul.mubr.f32.gmra.mxu0 %v3863
        %v3934 = vpop.f32.mrf.mxu0
        %v3935 = vadd.f32 0.0, %v3934
        %v3936 = vpop.f32.mrf.mxu0
        %3937 = vdwg.mxu0
        %v3939 = vsel %vm251, %v3853, 0
        %3941 = vmatprep.subr.mxu0 0.0
        %3942 = vmatpush1.msra.mxu0 0.0
        %3943 = vmatprep.subr.mxu0 0.0
        %3944 = vmatpush1.msra.mxu0 0.0
        %3945 = vmatprep.subr.mxu0 0.0
        %3946 = vmatpush1.msra.mxu0 0.0
        %3947 = vmatprep.subr.mxu0 0.0
        %3948 = vmatpush1.msra.mxu0 0.0
        %3949 = vmatprep.subr.mxu0 0.0
        %3950 = vmatpush1.msra.mxu0 0.0
        %3951 = vmatprep.subr.mxu0 0.0
        %3952 = vmatpush1.msra.mxu0 0.0
        %3953 = vmatprep.subr.mxu0 0.0
        %3954 = vmatpush1.msra.mxu0 0.0
        %3955 = vmatprep.subr.mxu0 0.0
        %3956 = vmatpush1.msra.mxu0 0.0
        %3957 = vmatprep.subr.mxu0 0.0
        %3958 = vmatpush1.msra.mxu0 0.0
        %3959 = vmatprep.subr.mxu0 0.0
        %3960 = vmatpush1.msra.mxu0 0.0
        %3961 = vmatprep.subr.mxu0 0.0
        %3962 = vmatpush1.msra.mxu0 0.0
        %3963 = vmatprep.subr.mxu0 0.0
        %3964 = vmatpush1.msra.mxu0 0.0
        %3965 = vmatprep.subr.mxu0 0.0
        %3966 = vmatpush1.msra.mxu0 0.0
        %3967 = vmatprep.subr.mxu0 0.0
        %3968 = vmatpush1.msra.mxu0 0.0
        %3969 = vmatprep.subr.mxu0 0.0
        %3970 = vmatpush1.msra.mxu0 0.0
        %3971 = vmatprep.subr.mxu0 0.0
        %3972 = vmatpush1.msra.mxu0 %v3866
        %3973 = vmatprep.subr.mxu0 0.0
        %3974 = vmatpush2.msra.mxu0 0.0
        %3975 = vmatprep.subr.mxu0 0.0
        %3976 = vmatpush2.msra.mxu0 0.0
        %3977 = vmatprep.subr.mxu0 0.0
        %3978 = vmatpush2.msra.mxu0 0.0
        %3979 = vmatprep.subr.mxu0 0.0
        %3980 = vmatpush2.msra.mxu0 0.0
        %3981 = vmatprep.subr.mxu0 0.0
        %3982 = vmatpush2.msra.mxu0 0.0
        %3983 = vmatprep.subr.mxu0 0.0
        %3984 = vmatpush2.msra.mxu0 0.0
        %3985 = vmatprep.subr.mxu0 0.0
        %3986 = vmatpush2.msra.mxu0 0.0
        %3987 = vmatprep.subr.mxu0 0.0
        %3988 = vmatpush2.msra.mxu0 0.0
        %3989 = vmatprep.subr.mxu0 0.0
        %3990 = vmatpush2.msra.mxu0 0.0
        %3991 = vmatprep.subr.mxu0 0.0
        %3992 = vmatpush2.msra.mxu0 0.0
        %3993 = vmatprep.subr.mxu0 0.0
        %3994 = vmatpush2.msra.mxu0 0.0
        %3995 = vmatprep.subr.mxu0 0.0
        %3996 = vmatpush2.msra.mxu0 0.0
        %3997 = vmatprep.subr.mxu0 0.0
        %3998 = vmatpush2.msra.mxu0 0.0
        %3999 = vmatprep.subr.mxu0 0.0
        %4000 = vmatpush2.msra.mxu0 0.0
        %4001 = vmatprep.subr.mxu0 0.0
        %4002 = vmatpush2.msra.mxu0 0.0
        %4003 = vmatprep.subr.mxu0 0.0
        %4004 = vmatpush2.msra.mxu0 0.0
        %4005 = vmatprep.mubr.f32.mxu0 0.0
        %4006 = vmatmul.mubr.f32.gmra.mxu0 %v3939
        %v4007 = vpop.f32.mrf.mxu0
        %v4008 = vadd.f32 0.0, %v4007
        %v4009 = vpop.f32.mrf.mxu0
        %4010 = vdwg.mxu0
        %v4012 = vsel %vm251, %v3854, 0
        %4014 = vmatprep.subr.mxu0 0.0
        %4015 = vmatpush1.msra.mxu0 0.0
        %4016 = vmatprep.subr.mxu0 0.0
        %4017 = vmatpush1.msra.mxu0 0.0
        %4018 = vmatprep.subr.mxu0 0.0
        %4019 = vmatpush1.msra.mxu0 0.0
        %4020 = vmatprep.subr.mxu0 0.0
        %4021 = vmatpush1.msra.mxu0 0.0
        %4022 = vmatprep.subr.mxu0 0.0
        %4023 = vmatpush1.msra.mxu0 0.0
        %4024 = vmatprep.subr.mxu0 0.0
        %4025 = vmatpush1.msra.mxu0 0.0
        %4026 = vmatprep.subr.mxu0 0.0
        %4027 = vmatpush1.msra.mxu0 0.0
        %4028 = vmatprep.subr.mxu0 0.0
        %4029 = vmatpush1.msra.mxu0 0.0
        %4030 = vmatprep.subr.mxu0 0.0
        %4031 = vmatpush1.msra.mxu0 0.0
        %4032 = vmatprep.subr.mxu0 0.0
        %4033 = vmatpush1.msra.mxu0 0.0
        %4034 = vmatprep.subr.mxu0 0.0
        %4035 = vmatpush1.msra.mxu0 0.0
        %4036 = vmatprep.subr.mxu0 0.0
        %4037 = vmatpush1.msra.mxu0 0.0
        %4038 = vmatprep.subr.mxu0 0.0
        %4039 = vmatpush1.msra.mxu0 0.0
        %4040 = vmatprep.subr.mxu0 0.0
        %4041 = vmatpush1.msra.mxu0 0.0
        %4042 = vmatprep.subr.mxu0 0.0
        %4043 = vmatpush1.msra.mxu0 0.0
        %4044 = vmatprep.subr.mxu0 0.0
        %4045 = vmatpush1.msra.mxu0 %v3866
        %4046 = vmatprep.subr.mxu0 0.0
        %4047 = vmatpush2.msra.mxu0 0.0
        %4048 = vmatprep.subr.mxu0 0.0
        %4049 = vmatpush2.msra.mxu0 0.0
        %4050 = vmatprep.subr.mxu0 0.0
        %4051 = vmatpush2.msra.mxu0 0.0
        %4052 = vmatprep.subr.mxu0 0.0
        %4053 = vmatpush2.msra.mxu0 0.0
        %4054 = vmatprep.subr.mxu0 0.0
        %4055 = vmatpush2.msra.mxu0 0.0
        %4056 = vmatprep.subr.mxu0 0.0
        %4057 = vmatpush2.msra.mxu0 0.0
        %4058 = vmatprep.subr.mxu0 0.0
        %4059 = vmatpush2.msra.mxu0 0.0
        %4060 = vmatprep.subr.mxu0 0.0
        %4061 = vmatpush2.msra.mxu0 0.0
        %4062 = vmatprep.subr.mxu0 0.0
        %4063 = vmatpush2.msra.mxu0 0.0
        %4064 = vmatprep.subr.mxu0 0.0
        %4065 = vmatpush2.msra.mxu0 0.0
        %4066 = vmatprep.subr.mxu0 0.0
        %4067 = vmatpush2.msra.mxu0 0.0
        %4068 = vmatprep.subr.mxu0 0.0
        %4069 = vmatpush2.msra.mxu0 0.0
        %4070 = vmatprep.subr.mxu0 0.0
        %4071 = vmatpush2.msra.mxu0 0.0
        %4072 = vmatprep.subr.mxu0 0.0
        %4073 = vmatpush2.msra.mxu0 0.0
        %4074 = vmatprep.subr.mxu0 0.0
        %4075 = vmatpush2.msra.mxu0 0.0
        %4076 = vmatprep.subr.mxu0 0.0
        %4077 = vmatpush2.msra.mxu0 0.0
        %4078 = vmatprep.mubr.f32.mxu0 0.0
        %4079 = vmatmul.mubr.f32.gmra.mxu0 %v4012
        %v4080 = vpop.f32.mrf.mxu0
        %v4081 = vadd.f32 0.0, %v4080
        %v4082 = vpop.f32.mrf.mxu0
        %4083 = vdwg.mxu0
        %v4085 = vsel %vm251, %v3855, 0
        %4087 = vmatprep.subr.mxu0 0.0
        %4088 = vmatpush1.msra.mxu0 0.0
        %4089 = vmatprep.subr.mxu0 0.0
        %4090 = vmatpush1.msra.mxu0 0.0
        %4091 = vmatprep.subr.mxu0 0.0
        %4092 = vmatpush1.msra.mxu0 0.0
        %4093 = vmatprep.subr.mxu0 0.0
        %4094 = vmatpush1.msra.mxu0 0.0
        %4095 = vmatprep.subr.mxu0 0.0
        %4096 = vmatpush1.msra.mxu0 0.0
        %4097 = vmatprep.subr.mxu0 0.0
        %4098 = vmatpush1.msra.mxu0 0.0
        %4099 = vmatprep.subr.mxu0 0.0
        %4100 = vmatpush1.msra.mxu0 0.0
        %4101 = vmatprep.subr.mxu0 0.0
        %4102 = vmatpush1.msra.mxu0 0.0
        %4103 = vmatprep.subr.mxu0 0.0
        %4104 = vmatpush1.msra.mxu0 0.0
        %4105 = vmatprep.subr.mxu0 0.0
        %4106 = vmatpush1.msra.mxu0 0.0
        %4107 = vmatprep.subr.mxu0 0.0
        %4108 = vmatpush1.msra.mxu0 0.0
        %4109 = vmatprep.subr.mxu0 0.0
        %4110 = vmatpush1.msra.mxu0 0.0
        %4111 = vmatprep.subr.mxu0 0.0
        %4112 = vmatpush1.msra.mxu0 0.0
        %4113 = vmatprep.subr.mxu0 0.0
        %4114 = vmatpush1.msra.mxu0 0.0
        %4115 = vmatprep.subr.mxu0 0.0
        %4116 = vmatpush1.msra.mxu0 0.0
        %4117 = vmatprep.subr.mxu0 0.0
        %4118 = vmatpush1.msra.mxu0 %v3866
        %4119 = vmatprep.subr.mxu0 0.0
        %4120 = vmatpush2.msra.mxu0 0.0
        %4121 = vmatprep.subr.mxu0 0.0
        %4122 = vmatpush2.msra.mxu0 0.0
        %4123 = vmatprep.subr.mxu0 0.0
        %4124 = vmatpush2.msra.mxu0 0.0
        %4125 = vmatprep.subr.mxu0 0.0
        %4126 = vmatpush2.msra.mxu0 0.0
        %4127 = vmatprep.subr.mxu0 0.0
        %4128 = vmatpush2.msra.mxu0 0.0
        %4129 = vmatprep.subr.mxu0 0.0
        %4130 = vmatpush2.msra.mxu0 0.0
        %4131 = vmatprep.subr.mxu0 0.0
        %4132 = vmatpush2.msra.mxu0 0.0
        %4133 = vmatprep.subr.mxu0 0.0
        %4134 = vmatpush2.msra.mxu0 0.0
        %4135 = vmatprep.subr.mxu0 0.0
        %4136 = vmatpush2.msra.mxu0 0.0
        %4137 = vmatprep.subr.mxu0 0.0
        %4138 = vmatpush2.msra.mxu0 0.0
        %4139 = vmatprep.subr.mxu0 0.0
        %4140 = vmatpush2.msra.mxu0 0.0
        %4141 = vmatprep.subr.mxu0 0.0
        %4142 = vmatpush2.msra.mxu0 0.0
        %4143 = vmatprep.subr.mxu0 0.0
        %4144 = vmatpush2.msra.mxu0 0.0
        %4145 = vmatprep.subr.mxu0 0.0
        %4146 = vmatpush2.msra.mxu0 0.0
        %4147 = vmatprep.subr.mxu0 0.0
        %4148 = vmatpush2.msra.mxu0 0.0
        %4149 = vmatprep.subr.mxu0 0.0
        %4150 = vmatpush2.msra.mxu0 0.0
        %4151 = vmatprep.mubr.f32.mxu0 0.0
        %4152 = vmatmul.mubr.f32.gmra.mxu0 %v4085
        %v4153 = vpop.f32.mrf.mxu0
        %v4154 = vadd.f32 0.0, %v4153
        %v4155 = vpop.f32.mrf.mxu0
        %4156 = vdwg.mxu0
        %v4158 = vsel %vm251, %v3856, 0
        %4160 = vmatprep.subr.mxu0 0.0
        %4161 = vmatpush1.msra.mxu0 0.0
        %4162 = vmatprep.subr.mxu0 0.0
        %4163 = vmatpush1.msra.mxu0 0.0
        %4164 = vmatprep.subr.mxu0 0.0
        %4165 = vmatpush1.msra.mxu0 0.0
        %4166 = vmatprep.subr.mxu0 0.0
        %4167 = vmatpush1.msra.mxu0 0.0
        %4168 = vmatprep.subr.mxu0 0.0
        %4169 = vmatpush1.msra.mxu0 0.0
        %4170 = vmatprep.subr.mxu0 0.0
        %4171 = vmatpush1.msra.mxu0 0.0
        %4172 = vmatprep.subr.mxu0 0.0
        %4173 = vmatpush1.msra.mxu0 0.0
        %4174 = vmatprep.subr.mxu0 0.0
        %4175 = vmatpush1.msra.mxu0 0.0
        %4176 = vmatprep.subr.mxu0 0.0
        %4177 = vmatpush1.msra.mxu0 0.0
        %4178 = vmatprep.subr.mxu0 0.0
        %4179 = vmatpush1.msra.mxu0 0.0
        %4180 = vmatprep.subr.mxu0 0.0
        %4181 = vmatpush1.msra.mxu0 0.0
        %4182 = vmatprep.subr.mxu0 0.0
        %4183 = vmatpush1.msra.mxu0 0.0
        %4184 = vmatprep.subr.mxu0 0.0
        %4185 = vmatpush1.msra.mxu0 0.0
        %4186 = vmatprep.subr.mxu0 0.0
        %4187 = vmatpush1.msra.mxu0 0.0
        %4188 = vmatprep.subr.mxu0 0.0
        %4189 = vmatpush1.msra.mxu0 0.0
        %4190 = vmatprep.subr.mxu0 0.0
        %4191 = vmatpush1.msra.mxu0 %v3866
        %4192 = vmatprep.subr.mxu0 0.0
        %4193 = vmatpush2.msra.mxu0 0.0
        %4194 = vmatprep.subr.mxu0 0.0
        %4195 = vmatpush2.msra.mxu0 0.0
        %4196 = vmatprep.subr.mxu0 0.0
        %4197 = vmatpush2.msra.mxu0 0.0
        %4198 = vmatprep.subr.mxu0 0.0
        %4199 = vmatpush2.msra.mxu0 0.0
        %4200 = vmatprep.subr.mxu0 0.0
        %4201 = vmatpush2.msra.mxu0 0.0
        %4202 = vmatprep.subr.mxu0 0.0
        %4203 = vmatpush2.msra.mxu0 0.0
        %4204 = vmatprep.subr.mxu0 0.0
        %4205 = vmatpush2.msra.mxu0 0.0
        %4206 = vmatprep.subr.mxu0 0.0
        %4207 = vmatpush2.msra.mxu0 0.0
        %4208 = vmatprep.subr.mxu0 0.0
        %4209 = vmatpush2.msra.mxu0 0.0
        %4210 = vmatprep.subr.mxu0 0.0
        %4211 = vmatpush2.msra.mxu0 0.0
        %4212 = vmatprep.subr.mxu0 0.0
        %4213 = vmatpush2.msra.mxu0 0.0
        %4214 = vmatprep.subr.mxu0 0.0
        %4215 = vmatpush2.msra.mxu0 0.0
        %4216 = vmatprep.subr.mxu0 0.0
        %4217 = vmatpush2.msra.mxu0 0.0
        %4218 = vmatprep.subr.mxu0 0.0
        %4219 = vmatpush2.msra.mxu0 0.0
        %4220 = vmatprep.subr.mxu0 0.0
        %4221 = vmatpush2.msra.mxu0 0.0
        %4222 = vmatprep.subr.mxu0 0.0
        %4223 = vmatpush2.msra.mxu0 0.0
        %4224 = vmatprep.mubr.f32.mxu0 0.0
        %4225 = vmatmul.mubr.f32.gmra.mxu0 %v4158
        %v4226 = vpop.f32.mrf.mxu0
        %v4227 = vadd.f32 0.0, %v4226
        %v4228 = vpop.f32.mrf.mxu0
        %4229 = vdwg.mxu0
        %v4231 = vsel %vm251, %v3857, 0
        %4233 = vmatprep.subr.mxu0 0.0
        %4234 = vmatpush1.msra.mxu0 0.0
        %4235 = vmatprep.subr.mxu0 0.0
        %4236 = vmatpush1.msra.mxu0 0.0
        %4237 = vmatprep.subr.mxu0 0.0
        %4238 = vmatpush1.msra.mxu0 0.0
        %4239 = vmatprep.subr.mxu0 0.0
        %4240 = vmatpush1.msra.mxu0 0.0
        %4241 = vmatprep.subr.mxu0 0.0
        %4242 = vmatpush1.msra.mxu0 0.0
        %4243 = vmatprep.subr.mxu0 0.0
        %4244 = vmatpush1.msra.mxu0 0.0
        %4245 = vmatprep.subr.mxu0 0.0
        %4246 = vmatpush1.msra.mxu0 0.0
        %4247 = vmatprep.subr.mxu0 0.0
        %4248 = vmatpush1.msra.mxu0 0.0
        %4249 = vmatprep.subr.mxu0 0.0
        %4250 = vmatpush1.msra.mxu0 0.0
        %4251 = vmatprep.subr.mxu0 0.0
        %4252 = vmatpush1.msra.mxu0 0.0
        %4253 = vmatprep.subr.mxu0 0.0
        %4254 = vmatpush1.msra.mxu0 0.0
        %4255 = vmatprep.subr.mxu0 0.0
        %4256 = vmatpush1.msra.mxu0 0.0
        %4257 = vmatprep.subr.mxu0 0.0
        %4258 = vmatpush1.msra.mxu0 0.0
        %4259 = vmatprep.subr.mxu0 0.0
        %4260 = vmatpush1.msra.mxu0 0.0
        %4261 = vmatprep.subr.mxu0 0.0
        %4262 = vmatpush1.msra.mxu0 0.0
        %4263 = vmatprep.subr.mxu0 0.0
        %4264 = vmatpush1.msra.mxu0 %v3866
        %4265 = vmatprep.subr.mxu0 0.0
        %4266 = vmatpush2.msra.mxu0 0.0
        %4267 = vmatprep.subr.mxu0 0.0
        %4268 = vmatpush2.msra.mxu0 0.0
        %4269 = vmatprep.subr.mxu0 0.0
        %4270 = vmatpush2.msra.mxu0 0.0
        %4271 = vmatprep.subr.mxu0 0.0
        %4272 = vmatpush2.msra.mxu0 0.0
        %4273 = vmatprep.subr.mxu0 0.0
        %4274 = vmatpush2.msra.mxu0 0.0
        %4275 = vmatprep.subr.mxu0 0.0
        %4276 = vmatpush2.msra.mxu0 0.0
        %4277 = vmatprep.subr.mxu0 0.0
        %4278 = vmatpush2.msra.mxu0 0.0
        %4279 = vmatprep.subr.mxu0 0.0
        %4280 = vmatpush2.msra.mxu0 0.0
        %4281 = vmatprep.subr.mxu0 0.0
        %4282 = vmatpush2.msra.mxu0 0.0
        %4283 = vmatprep.subr.mxu0 0.0
        %4284 = vmatpush2.msra.mxu0 0.0
        %4285 = vmatprep.subr.mxu0 0.0
        %4286 = vmatpush2.msra.mxu0 0.0
        %4287 = vmatprep.subr.mxu0 0.0
        %4288 = vmatpush2.msra.mxu0 0.0
        %4289 = vmatprep.subr.mxu0 0.0
        %4290 = vmatpush2.msra.mxu0 0.0
        %4291 = vmatprep.subr.mxu0 0.0
        %4292 = vmatpush2.msra.mxu0 0.0
        %4293 = vmatprep.subr.mxu0 0.0
        %4294 = vmatpush2.msra.mxu0 0.0
        %4295 = vmatprep.subr.mxu0 0.0
        %4296 = vmatpush2.msra.mxu0 0.0
        %4297 = vmatprep.mubr.f32.mxu0 0.0
        %4298 = vmatmul.mubr.f32.gmra.mxu0 %v4231
        %v4299 = vpop.f32.mrf.mxu0
        %v4300 = vadd.f32 0.0, %v4299
        %v4301 = vpop.f32.mrf.mxu0
        %4302 = vdwg.mxu0
        %v4304 = vsel %vm251, %v3858, 0
        %4306 = vmatprep.subr.mxu0 0.0
        %4307 = vmatpush1.msra.mxu0 0.0
        %4308 = vmatprep.subr.mxu0 0.0
        %4309 = vmatpush1.msra.mxu0 0.0
        %4310 = vmatprep.subr.mxu0 0.0
        %4311 = vmatpush1.msra.mxu0 0.0
        %4312 = vmatprep.subr.mxu0 0.0
        %4313 = vmatpush1.msra.mxu0 0.0
        %4314 = vmatprep.subr.mxu0 0.0
        %4315 = vmatpush1.msra.mxu0 0.0
        %4316 = vmatprep.subr.mxu0 0.0
        %4317 = vmatpush1.msra.mxu0 0.0
        %4318 = vmatprep.subr.mxu0 0.0
        %4319 = vmatpush1.msra.mxu0 0.0
        %4320 = vmatprep.subr.mxu0 0.0
        %4321 = vmatpush1.msra.mxu0 0.0
        %4322 = vmatprep.subr.mxu0 0.0
        %4323 = vmatpush1.msra.mxu0 0.0
        %4324 = vmatprep.subr.mxu0 0.0
        %4325 = vmatpush1.msra.mxu0 0.0
        %4326 = vmatprep.subr.mxu0 0.0
        %4327 = vmatpush1.msra.mxu0 0.0
        %4328 = vmatprep.subr.mxu0 0.0
        %4329 = vmatpush1.msra.mxu0 0.0
        %4330 = vmatprep.subr.mxu0 0.0
        %4331 = vmatpush1.msra.mxu0 0.0
        %4332 = vmatprep.subr.mxu0 0.0
        %4333 = vmatpush1.msra.mxu0 0.0
        %4334 = vmatprep.subr.mxu0 0.0
        %4335 = vmatpush1.msra.mxu0 0.0
        %4336 = vmatprep.subr.mxu0 0.0
        %4337 = vmatpush1.msra.mxu0 %v3866
        %4338 = vmatprep.subr.mxu0 0.0
        %4339 = vmatpush2.msra.mxu0 0.0
        %4340 = vmatprep.subr.mxu0 0.0
        %4341 = vmatpush2.msra.mxu0 0.0
        %4342 = vmatprep.subr.mxu0 0.0
        %4343 = vmatpush2.msra.mxu0 0.0
        %4344 = vmatprep.subr.mxu0 0.0
        %4345 = vmatpush2.msra.mxu0 0.0
        %4346 = vmatprep.subr.mxu0 0.0
        %4347 = vmatpush2.msra.mxu0 0.0
        %4348 = vmatprep.subr.mxu0 0.0
        %4349 = vmatpush2.msra.mxu0 0.0
        %4350 = vmatprep.subr.mxu0 0.0
        %4351 = vmatpush2.msra.mxu0 0.0
        %4352 = vmatprep.subr.mxu0 0.0
        %4353 = vmatpush2.msra.mxu0 0.0
        %4354 = vmatprep.subr.mxu0 0.0
        %4355 = vmatpush2.msra.mxu0 0.0
        %4356 = vmatprep.subr.mxu0 0.0
        %4357 = vmatpush2.msra.mxu0 0.0
        %4358 = vmatprep.subr.mxu0 0.0
        %4359 = vmatpush2.msra.mxu0 0.0
        %4360 = vmatprep.subr.mxu0 0.0
        %4361 = vmatpush2.msra.mxu0 0.0
        %4362 = vmatprep.subr.mxu0 0.0
        %4363 = vmatpush2.msra.mxu0 0.0
        %4364 = vmatprep.subr.mxu0 0.0
        %4365 = vmatpush2.msra.mxu0 0.0
        %4366 = vmatprep.subr.mxu0 0.0
        %4367 = vmatpush2.msra.mxu0 0.0
        %4368 = vmatprep.subr.mxu0 0.0
        %4369 = vmatpush2.msra.mxu0 0.0
        %4370 = vmatprep.mubr.f32.mxu0 0.0
        %4371 = vmatmul.mubr.f32.gmra.mxu0 %v4304
        %v4372 = vpop.f32.mrf.mxu0
        %v4373 = vadd.f32 0.0, %v4372
        %v4374 = vpop.f32.mrf.mxu0
        %4375 = vdwg.mxu0
        %v4377 = vsel %vm251, %v3859, 0
        %4379 = vmatprep.subr.mxu0 0.0
        %4380 = vmatpush1.msra.mxu0 0.0
        %4381 = vmatprep.subr.mxu0 0.0
        %4382 = vmatpush1.msra.mxu0 0.0
        %4383 = vmatprep.subr.mxu0 0.0
        %4384 = vmatpush1.msra.mxu0 0.0
        %4385 = vmatprep.subr.mxu0 0.0
        %4386 = vmatpush1.msra.mxu0 0.0
        %4387 = vmatprep.subr.mxu0 0.0
        %4388 = vmatpush1.msra.mxu0 0.0
        %4389 = vmatprep.subr.mxu0 0.0
        %4390 = vmatpush1.msra.mxu0 0.0
        %4391 = vmatprep.subr.mxu0 0.0
        %4392 = vmatpush1.msra.mxu0 0.0
        %4393 = vmatprep.subr.mxu0 0.0
        %4394 = vmatpush1.msra.mxu0 0.0
        %4395 = vmatprep.subr.mxu0 0.0
        %4396 = vmatpush1.msra.mxu0 0.0
        %4397 = vmatprep.subr.mxu0 0.0
        %4398 = vmatpush1.msra.mxu0 0.0
        %4399 = vmatprep.subr.mxu0 0.0
        %4400 = vmatpush1.msra.mxu0 0.0
        %4401 = vmatprep.subr.mxu0 0.0
        %4402 = vmatpush1.msra.mxu0 0.0
        %4403 = vmatprep.subr.mxu0 0.0
        %4404 = vmatpush1.msra.mxu0 0.0
        %4405 = vmatprep.subr.mxu0 0.0
        %4406 = vmatpush1.msra.mxu0 0.0
        %4407 = vmatprep.subr.mxu0 0.0
        %4408 = vmatpush1.msra.mxu0 0.0
        %4409 = vmatprep.subr.mxu0 0.0
        %4410 = vmatpush1.msra.mxu0 %v3866
        %4411 = vmatprep.subr.mxu0 0.0
        %4412 = vmatpush2.msra.mxu0 0.0
        %4413 = vmatprep.subr.mxu0 0.0
        %4414 = vmatpush2.msra.mxu0 0.0
        %4415 = vmatprep.subr.mxu0 0.0
        %4416 = vmatpush2.msra.mxu0 0.0
        %4417 = vmatprep.subr.mxu0 0.0
        %4418 = vmatpush2.msra.mxu0 0.0
        %4419 = vmatprep.subr.mxu0 0.0
        %4420 = vmatpush2.msra.mxu0 0.0
        %4421 = vmatprep.subr.mxu0 0.0
        %4422 = vmatpush2.msra.mxu0 0.0
        %4423 = vmatprep.subr.mxu0 0.0
        %4424 = vmatpush2.msra.mxu0 0.0
        %4425 = vmatprep.subr.mxu0 0.0
        %4426 = vmatpush2.msra.mxu0 0.0
        %4427 = vmatprep.subr.mxu0 0.0
        %4428 = vmatpush2.msra.mxu0 0.0
        %4429 = vmatprep.subr.mxu0 0.0
        %4430 = vmatpush2.msra.mxu0 0.0
        %4431 = vmatprep.subr.mxu0 0.0
        %4432 = vmatpush2.msra.mxu0 0.0
        %4433 = vmatprep.subr.mxu0 0.0
        %4434 = vmatpush2.msra.mxu0 0.0
        %4435 = vmatprep.subr.mxu0 0.0
        %4436 = vmatpush2.msra.mxu0 0.0
        %4437 = vmatprep.subr.mxu0 0.0
        %4438 = vmatpush2.msra.mxu0 0.0
        %4439 = vmatprep.subr.mxu0 0.0
        %4440 = vmatpush2.msra.mxu0 0.0
        %4441 = vmatprep.subr.mxu0 0.0
        %4442 = vmatpush2.msra.mxu0 0.0
        %4443 = vmatprep.mubr.f32.mxu0 0.0
        %4444 = vmatmul.mubr.f32.gmra.mxu0 %v4377
        %v4445 = vpop.f32.mrf.mxu0
        %v4446 = vadd.f32 0.0, %v4445
        %v4447 = vpop.f32.mrf.mxu0
        %4448 = vdwg.mxu0
        %v4449 = vadd.f32 %v3843, %v3935
        %v4450 = vadd.f32 %v3844, %v4008
        %v4451 = vadd.f32 %v3845, %v4081
        %v4452 = vadd.f32 %v3846, %v4154
        %v4453 = vadd.f32 %v3847, %v4227
        %v4454 = vadd.f32 %v3848, %v4300
        %v4455 = vadd.f32 %v3849, %v4373
        %v4456 = vadd.f32 %v3850, %v4446
        %s4457 = scalar_lea.vmem %s222, 152
        %v4458 = vld [vmem:[%s4457] sm:$0xff]
        %v4459 = vld [vmem:[%s4457 + $0x8] sm:$0xff]
        %v4460 = vld [vmem:[%s4457 + $0x10] sm:$0xff]
        %v4461 = vld [vmem:[%s4457 + $0x18] sm:$0xff]
        %v4462 = vld [vmem:[%s4457 + $0x20] sm:$0xff]
        %v4463 = vld [vmem:[%s4457 + $0x28] sm:$0xff]
        %v4464 = vld [vmem:[%s4457 + $0x30] sm:$0xff]
        %v4465 = vld [vmem:[%s4457 + $0x38] sm:$0xff]
        %s4466 = scalar_lea.vmem %s227, 28
        %v4467 = vld [vmem:[%s4466] sm:$0xf]
        %v4469 = vsel %vm251, %v4458, 0
        %v4472 = vsel %vm255, %v4467, 0
        %4474 = vmatprep.subr.mxu0 0.0
        %4475 = vmatpush1.msra.mxu0 0.0
        %4476 = vmatprep.subr.mxu0 0.0
        %4477 = vmatpush1.msra.mxu0 0.0
        %4478 = vmatprep.subr.mxu0 0.0
        %4479 = vmatpush1.msra.mxu0 0.0
        %4480 = vmatprep.subr.mxu0 0.0
        %4481 = vmatpush1.msra.mxu0 0.0
        %4482 = vmatprep.subr.mxu0 0.0
        %4483 = vmatpush1.msra.mxu0 0.0
        %4484 = vmatprep.subr.mxu0 0.0
        %4485 = vmatpush1.msra.mxu0 0.0
        %4486 = vmatprep.subr.mxu0 0.0
        %4487 = vmatpush1.msra.mxu0 0.0
        %4488 = vmatprep.subr.mxu0 0.0
        %4489 = vmatpush1.msra.mxu0 0.0
        %4490 = vmatprep.subr.mxu0 0.0
        %4491 = vmatpush1.msra.mxu0 0.0
        %4492 = vmatprep.subr.mxu0 0.0
        %4493 = vmatpush1.msra.mxu0 0.0
        %4494 = vmatprep.subr.mxu0 0.0
        %4495 = vmatpush1.msra.mxu0 0.0
        %4496 = vmatprep.subr.mxu0 0.0
        %4497 = vmatpush1.msra.mxu0 0.0
        %4498 = vmatprep.subr.mxu0 0.0
        %4499 = vmatpush1.msra.mxu0 0.0
        %4500 = vmatprep.subr.mxu0 0.0
        %4501 = vmatpush1.msra.mxu0 0.0
        %4502 = vmatprep.subr.mxu0 0.0
        %4503 = vmatpush1.msra.mxu0 0.0
        %4504 = vmatprep.subr.mxu0 0.0
        %4505 = vmatpush1.msra.mxu0 %v4472
        %4506 = vmatprep.subr.mxu0 0.0
        %4507 = vmatpush2.msra.mxu0 0.0
        %4508 = vmatprep.subr.mxu0 0.0
        %4509 = vmatpush2.msra.mxu0 0.0
        %4510 = vmatprep.subr.mxu0 0.0
        %4511 = vmatpush2.msra.mxu0 0.0
        %4512 = vmatprep.subr.mxu0 0.0
        %4513 = vmatpush2.msra.mxu0 0.0
        %4514 = vmatprep.subr.mxu0 0.0
        %4515 = vmatpush2.msra.mxu0 0.0
        %4516 = vmatprep.subr.mxu0 0.0
        %4517 = vmatpush2.msra.mxu0 0.0
        %4518 = vmatprep.subr.mxu0 0.0
        %4519 = vmatpush2.msra.mxu0 0.0
        %4520 = vmatprep.subr.mxu0 0.0
        %4521 = vmatpush2.msra.mxu0 0.0
        %4522 = vmatprep.subr.mxu0 0.0
        %4523 = vmatpush2.msra.mxu0 0.0
        %4524 = vmatprep.subr.mxu0 0.0
        %4525 = vmatpush2.msra.mxu0 0.0
        %4526 = vmatprep.subr.mxu0 0.0
        %4527 = vmatpush2.msra.mxu0 0.0
        %4528 = vmatprep.subr.mxu0 0.0
        %4529 = vmatpush2.msra.mxu0 0.0
        %4530 = vmatprep.subr.mxu0 0.0
        %4531 = vmatpush2.msra.mxu0 0.0
        %4532 = vmatprep.subr.mxu0 0.0
        %4533 = vmatpush2.msra.mxu0 0.0
        %4534 = vmatprep.subr.mxu0 0.0
        %4535 = vmatpush2.msra.mxu0 0.0
        %4536 = vmatprep.subr.mxu0 0.0
        %4537 = vmatpush2.msra.mxu0 0.0
        %4538 = vmatprep.mubr.f32.mxu0 0.0
        %4539 = vmatmul.mubr.f32.gmra.mxu0 %v4469
        %v4540 = vpop.f32.mrf.mxu0
        %v4541 = vadd.f32 0.0, %v4540
        %v4542 = vpop.f32.mrf.mxu0
        %4543 = vdwg.mxu0
        %v4545 = vsel %vm251, %v4459, 0
        %4547 = vmatprep.subr.mxu0 0.0
        %4548 = vmatpush1.msra.mxu0 0.0
        %4549 = vmatprep.subr.mxu0 0.0
        %4550 = vmatpush1.msra.mxu0 0.0
        %4551 = vmatprep.subr.mxu0 0.0
        %4552 = vmatpush1.msra.mxu0 0.0
        %4553 = vmatprep.subr.mxu0 0.0
        %4554 = vmatpush1.msra.mxu0 0.0
        %4555 = vmatprep.subr.mxu0 0.0
        %4556 = vmatpush1.msra.mxu0 0.0
        %4557 = vmatprep.subr.mxu0 0.0
        %4558 = vmatpush1.msra.mxu0 0.0
        %4559 = vmatprep.subr.mxu0 0.0
        %4560 = vmatpush1.msra.mxu0 0.0
        %4561 = vmatprep.subr.mxu0 0.0
        %4562 = vmatpush1.msra.mxu0 0.0
        %4563 = vmatprep.subr.mxu0 0.0
        %4564 = vmatpush1.msra.mxu0 0.0
        %4565 = vmatprep.subr.mxu0 0.0
        %4566 = vmatpush1.msra.mxu0 0.0
        %4567 = vmatprep.subr.mxu0 0.0
        %4568 = vmatpush1.msra.mxu0 0.0
        %4569 = vmatprep.subr.mxu0 0.0
        %4570 = vmatpush1.msra.mxu0 0.0
        %4571 = vmatprep.subr.mxu0 0.0
        %4572 = vmatpush1.msra.mxu0 0.0
        %4573 = vmatprep.subr.mxu0 0.0
        %4574 = vmatpush1.msra.mxu0 0.0
        %4575 = vmatprep.subr.mxu0 0.0
        %4576 = vmatpush1.msra.mxu0 0.0
        %4577 = vmatprep.subr.mxu0 0.0
        %4578 = vmatpush1.msra.mxu0 %v4472
        %4579 = vmatprep.subr.mxu0 0.0
        %4580 = vmatpush2.msra.mxu0 0.0
        %4581 = vmatprep.subr.mxu0 0.0
        %4582 = vmatpush2.msra.mxu0 0.0
        %4583 = vmatprep.subr.mxu0 0.0
        %4584 = vmatpush2.msra.mxu0 0.0
        %4585 = vmatprep.subr.mxu0 0.0
        %4586 = vmatpush2.msra.mxu0 0.0
        %4587 = vmatprep.subr.mxu0 0.0
        %4588 = vmatpush2.msra.mxu0 0.0
        %4589 = vmatprep.subr.mxu0 0.0
        %4590 = vmatpush2.msra.mxu0 0.0
        %4591 = vmatprep.subr.mxu0 0.0
        %4592 = vmatpush2.msra.mxu0 0.0
        %4593 = vmatprep.subr.mxu0 0.0
        %4594 = vmatpush2.msra.mxu0 0.0
        %4595 = vmatprep.subr.mxu0 0.0
        %4596 = vmatpush2.msra.mxu0 0.0
        %4597 = vmatprep.subr.mxu0 0.0
        %4598 = vmatpush2.msra.mxu0 0.0
        %4599 = vmatprep.subr.mxu0 0.0
        %4600 = vmatpush2.msra.mxu0 0.0
        %4601 = vmatprep.subr.mxu0 0.0
        %4602 = vmatpush2.msra.mxu0 0.0
        %4603 = vmatprep.subr.mxu0 0.0
        %4604 = vmatpush2.msra.mxu0 0.0
        %4605 = vmatprep.subr.mxu0 0.0
        %4606 = vmatpush2.msra.mxu0 0.0
        %4607 = vmatprep.subr.mxu0 0.0
        %4608 = vmatpush2.msra.mxu0 0.0
        %4609 = vmatprep.subr.mxu0 0.0
        %4610 = vmatpush2.msra.mxu0 0.0
        %4611 = vmatprep.mubr.f32.mxu0 0.0
        %4612 = vmatmul.mubr.f32.gmra.mxu0 %v4545
        %v4613 = vpop.f32.mrf.mxu0
        %v4614 = vadd.f32 0.0, %v4613
        %v4615 = vpop.f32.mrf.mxu0
        %4616 = vdwg.mxu0
        %v4618 = vsel %vm251, %v4460, 0
        %4620 = vmatprep.subr.mxu0 0.0
        %4621 = vmatpush1.msra.mxu0 0.0
        %4622 = vmatprep.subr.mxu0 0.0
        %4623 = vmatpush1.msra.mxu0 0.0
        %4624 = vmatprep.subr.mxu0 0.0
        %4625 = vmatpush1.msra.mxu0 0.0
        %4626 = vmatprep.subr.mxu0 0.0
        %4627 = vmatpush1.msra.mxu0 0.0
        %4628 = vmatprep.subr.mxu0 0.0
        %4629 = vmatpush1.msra.mxu0 0.0
        %4630 = vmatprep.subr.mxu0 0.0
        %4631 = vmatpush1.msra.mxu0 0.0
        %4632 = vmatprep.subr.mxu0 0.0
        %4633 = vmatpush1.msra.mxu0 0.0
        %4634 = vmatprep.subr.mxu0 0.0
        %4635 = vmatpush1.msra.mxu0 0.0
        %4636 = vmatprep.subr.mxu0 0.0
        %4637 = vmatpush1.msra.mxu0 0.0
        %4638 = vmatprep.subr.mxu0 0.0
        %4639 = vmatpush1.msra.mxu0 0.0
        %4640 = vmatprep.subr.mxu0 0.0
        %4641 = vmatpush1.msra.mxu0 0.0
        %4642 = vmatprep.subr.mxu0 0.0
        %4643 = vmatpush1.msra.mxu0 0.0
        %4644 = vmatprep.subr.mxu0 0.0
        %4645 = vmatpush1.msra.mxu0 0.0
        %4646 = vmatprep.subr.mxu0 0.0
        %4647 = vmatpush1.msra.mxu0 0.0
        %4648 = vmatprep.subr.mxu0 0.0
        %4649 = vmatpush1.msra.mxu0 0.0
        %4650 = vmatprep.subr.mxu0 0.0
        %4651 = vmatpush1.msra.mxu0 %v4472
        %4652 = vmatprep.subr.mxu0 0.0
        %4653 = vmatpush2.msra.mxu0 0.0
        %4654 = vmatprep.subr.mxu0 0.0
        %4655 = vmatpush2.msra.mxu0 0.0
        %4656 = vmatprep.subr.mxu0 0.0
        %4657 = vmatpush2.msra.mxu0 0.0
        %4658 = vmatprep.subr.mxu0 0.0
        %4659 = vmatpush2.msra.mxu0 0.0
        %4660 = vmatprep.subr.mxu0 0.0
        %4661 = vmatpush2.msra.mxu0 0.0
        %4662 = vmatprep.subr.mxu0 0.0
        %4663 = vmatpush2.msra.mxu0 0.0
        %4664 = vmatprep.subr.mxu0 0.0
        %4665 = vmatpush2.msra.mxu0 0.0
        %4666 = vmatprep.subr.mxu0 0.0
        %4667 = vmatpush2.msra.mxu0 0.0
        %4668 = vmatprep.subr.mxu0 0.0
        %4669 = vmatpush2.msra.mxu0 0.0
        %4670 = vmatprep.subr.mxu0 0.0
        %4671 = vmatpush2.msra.mxu0 0.0
        %4672 = vmatprep.subr.mxu0 0.0
        %4673 = vmatpush2.msra.mxu0 0.0
        %4674 = vmatprep.subr.mxu0 0.0
        %4675 = vmatpush2.msra.mxu0 0.0
        %4676 = vmatprep.subr.mxu0 0.0
        %4677 = vmatpush2.msra.mxu0 0.0
        %4678 = vmatprep.subr.mxu0 0.0
        %4679 = vmatpush2.msra.mxu0 0.0
        %4680 = vmatprep.subr.mxu0 0.0
        %4681 = vmatpush2.msra.mxu0 0.0
        %4682 = vmatprep.subr.mxu0 0.0
        %4683 = vmatpush2.msra.mxu0 0.0
        %4684 = vmatprep.mubr.f32.mxu0 0.0
        %4685 = vmatmul.mubr.f32.gmra.mxu0 %v4618
        %v4686 = vpop.f32.mrf.mxu0
        %v4687 = vadd.f32 0.0, %v4686
        %v4688 = vpop.f32.mrf.mxu0
        %4689 = vdwg.mxu0
        %v4691 = vsel %vm251, %v4461, 0
        %4693 = vmatprep.subr.mxu0 0.0
        %4694 = vmatpush1.msra.mxu0 0.0
        %4695 = vmatprep.subr.mxu0 0.0
        %4696 = vmatpush1.msra.mxu0 0.0
        %4697 = vmatprep.subr.mxu0 0.0
        %4698 = vmatpush1.msra.mxu0 0.0
        %4699 = vmatprep.subr.mxu0 0.0
        %4700 = vmatpush1.msra.mxu0 0.0
        %4701 = vmatprep.subr.mxu0 0.0
        %4702 = vmatpush1.msra.mxu0 0.0
        %4703 = vmatprep.subr.mxu0 0.0
        %4704 = vmatpush1.msra.mxu0 0.0
        %4705 = vmatprep.subr.mxu0 0.0
        %4706 = vmatpush1.msra.mxu0 0.0
        %4707 = vmatprep.subr.mxu0 0.0
        %4708 = vmatpush1.msra.mxu0 0.0
        %4709 = vmatprep.subr.mxu0 0.0
        %4710 = vmatpush1.msra.mxu0 0.0
        %4711 = vmatprep.subr.mxu0 0.0
        %4712 = vmatpush1.msra.mxu0 0.0
        %4713 = vmatprep.subr.mxu0 0.0
        %4714 = vmatpush1.msra.mxu0 0.0
        %4715 = vmatprep.subr.mxu0 0.0
        %4716 = vmatpush1.msra.mxu0 0.0
        %4717 = vmatprep.subr.mxu0 0.0
        %4718 = vmatpush1.msra.mxu0 0.0
        %4719 = vmatprep.subr.mxu0 0.0
        %4720 = vmatpush1.msra.mxu0 0.0
        %4721 = vmatprep.subr.mxu0 0.0
        %4722 = vmatpush1.msra.mxu0 0.0
        %4723 = vmatprep.subr.mxu0 0.0
        %4724 = vmatpush1.msra.mxu0 %v4472
        %4725 = vmatprep.subr.mxu0 0.0
        %4726 = vmatpush2.msra.mxu0 0.0
        %4727 = vmatprep.subr.mxu0 0.0
        %4728 = vmatpush2.msra.mxu0 0.0
        %4729 = vmatprep.subr.mxu0 0.0
        %4730 = vmatpush2.msra.mxu0 0.0
        %4731 = vmatprep.subr.mxu0 0.0
        %4732 = vmatpush2.msra.mxu0 0.0
        %4733 = vmatprep.subr.mxu0 0.0
        %4734 = vmatpush2.msra.mxu0 0.0
        %4735 = vmatprep.subr.mxu0 0.0
        %4736 = vmatpush2.msra.mxu0 0.0
        %4737 = vmatprep.subr.mxu0 0.0
        %4738 = vmatpush2.msra.mxu0 0.0
        %4739 = vmatprep.subr.mxu0 0.0
        %4740 = vmatpush2.msra.mxu0 0.0
        %4741 = vmatprep.subr.mxu0 0.0
        %4742 = vmatpush2.msra.mxu0 0.0
        %4743 = vmatprep.subr.mxu0 0.0
        %4744 = vmatpush2.msra.mxu0 0.0
        %4745 = vmatprep.subr.mxu0 0.0
        %4746 = vmatpush2.msra.mxu0 0.0
        %4747 = vmatprep.subr.mxu0 0.0
        %4748 = vmatpush2.msra.mxu0 0.0
        %4749 = vmatprep.subr.mxu0 0.0
        %4750 = vmatpush2.msra.mxu0 0.0
        %4751 = vmatprep.subr.mxu0 0.0
        %4752 = vmatpush2.msra.mxu0 0.0
        %4753 = vmatprep.subr.mxu0 0.0
        %4754 = vmatpush2.msra.mxu0 0.0
        %4755 = vmatprep.subr.mxu0 0.0
        %4756 = vmatpush2.msra.mxu0 0.0
        %4757 = vmatprep.mubr.f32.mxu0 0.0
        %4758 = vmatmul.mubr.f32.gmra.mxu0 %v4691
        %v4759 = vpop.f32.mrf.mxu0
        %v4760 = vadd.f32 0.0, %v4759
        %v4761 = vpop.f32.mrf.mxu0
        %4762 = vdwg.mxu0
        %v4764 = vsel %vm251, %v4462, 0
        %4766 = vmatprep.subr.mxu0 0.0
        %4767 = vmatpush1.msra.mxu0 0.0
        %4768 = vmatprep.subr.mxu0 0.0
        %4769 = vmatpush1.msra.mxu0 0.0
        %4770 = vmatprep.subr.mxu0 0.0
        %4771 = vmatpush1.msra.mxu0 0.0
        %4772 = vmatprep.subr.mxu0 0.0
        %4773 = vmatpush1.msra.mxu0 0.0
        %4774 = vmatprep.subr.mxu0 0.0
        %4775 = vmatpush1.msra.mxu0 0.0
        %4776 = vmatprep.subr.mxu0 0.0
        %4777 = vmatpush1.msra.mxu0 0.0
        %4778 = vmatprep.subr.mxu0 0.0
        %4779 = vmatpush1.msra.mxu0 0.0
        %4780 = vmatprep.subr.mxu0 0.0
        %4781 = vmatpush1.msra.mxu0 0.0
        %4782 = vmatprep.subr.mxu0 0.0
        %4783 = vmatpush1.msra.mxu0 0.0
        %4784 = vmatprep.subr.mxu0 0.0
        %4785 = vmatpush1.msra.mxu0 0.0
        %4786 = vmatprep.subr.mxu0 0.0
        %4787 = vmatpush1.msra.mxu0 0.0
        %4788 = vmatprep.subr.mxu0 0.0
        %4789 = vmatpush1.msra.mxu0 0.0
        %4790 = vmatprep.subr.mxu0 0.0
        %4791 = vmatpush1.msra.mxu0 0.0
        %4792 = vmatprep.subr.mxu0 0.0
        %4793 = vmatpush1.msra.mxu0 0.0
        %4794 = vmatprep.subr.mxu0 0.0
        %4795 = vmatpush1.msra.mxu0 0.0
        %4796 = vmatprep.subr.mxu0 0.0
        %4797 = vmatpush1.msra.mxu0 %v4472
        %4798 = vmatprep.subr.mxu0 0.0
        %4799 = vmatpush2.msra.mxu0 0.0
        %4800 = vmatprep.subr.mxu0 0.0
        %4801 = vmatpush2.msra.mxu0 0.0
        %4802 = vmatprep.subr.mxu0 0.0
        %4803 = vmatpush2.msra.mxu0 0.0
        %4804 = vmatprep.subr.mxu0 0.0
        %4805 = vmatpush2.msra.mxu0 0.0
        %4806 = vmatprep.subr.mxu0 0.0
        %4807 = vmatpush2.msra.mxu0 0.0
        %4808 = vmatprep.subr.mxu0 0.0
        %4809 = vmatpush2.msra.mxu0 0.0
        %4810 = vmatprep.subr.mxu0 0.0
        %4811 = vmatpush2.msra.mxu0 0.0
        %4812 = vmatprep.subr.mxu0 0.0
        %4813 = vmatpush2.msra.mxu0 0.0
        %4814 = vmatprep.subr.mxu0 0.0
        %4815 = vmatpush2.msra.mxu0 0.0
        %4816 = vmatprep.subr.mxu0 0.0
        %4817 = vmatpush2.msra.mxu0 0.0
        %4818 = vmatprep.subr.mxu0 0.0
        %4819 = vmatpush2.msra.mxu0 0.0
        %4820 = vmatprep.subr.mxu0 0.0
        %4821 = vmatpush2.msra.mxu0 0.0
        %4822 = vmatprep.subr.mxu0 0.0
        %4823 = vmatpush2.msra.mxu0 0.0
        %4824 = vmatprep.subr.mxu0 0.0
        %4825 = vmatpush2.msra.mxu0 0.0
        %4826 = vmatprep.subr.mxu0 0.0
        %4827 = vmatpush2.msra.mxu0 0.0
        %4828 = vmatprep.subr.mxu0 0.0
        %4829 = vmatpush2.msra.mxu0 0.0
        %4830 = vmatprep.mubr.f32.mxu0 0.0
        %4831 = vmatmul.mubr.f32.gmra.mxu0 %v4764
        %v4832 = vpop.f32.mrf.mxu0
        %v4833 = vadd.f32 0.0, %v4832
        %v4834 = vpop.f32.mrf.mxu0
        %4835 = vdwg.mxu0
        %v4837 = vsel %vm251, %v4463, 0
        %4839 = vmatprep.subr.mxu0 0.0
        %4840 = vmatpush1.msra.mxu0 0.0
        %4841 = vmatprep.subr.mxu0 0.0
        %4842 = vmatpush1.msra.mxu0 0.0
        %4843 = vmatprep.subr.mxu0 0.0
        %4844 = vmatpush1.msra.mxu0 0.0
        %4845 = vmatprep.subr.mxu0 0.0
        %4846 = vmatpush1.msra.mxu0 0.0
        %4847 = vmatprep.subr.mxu0 0.0
        %4848 = vmatpush1.msra.mxu0 0.0
        %4849 = vmatprep.subr.mxu0 0.0
        %4850 = vmatpush1.msra.mxu0 0.0
        %4851 = vmatprep.subr.mxu0 0.0
        %4852 = vmatpush1.msra.mxu0 0.0
        %4853 = vmatprep.subr.mxu0 0.0
        %4854 = vmatpush1.msra.mxu0 0.0
        %4855 = vmatprep.subr.mxu0 0.0
        %4856 = vmatpush1.msra.mxu0 0.0
        %4857 = vmatprep.subr.mxu0 0.0
        %4858 = vmatpush1.msra.mxu0 0.0
        %4859 = vmatprep.subr.mxu0 0.0
        %4860 = vmatpush1.msra.mxu0 0.0
        %4861 = vmatprep.subr.mxu0 0.0
        %4862 = vmatpush1.msra.mxu0 0.0
        %4863 = vmatprep.subr.mxu0 0.0
        %4864 = vmatpush1.msra.mxu0 0.0
        %4865 = vmatprep.subr.mxu0 0.0
        %4866 = vmatpush1.msra.mxu0 0.0
        %4867 = vmatprep.subr.mxu0 0.0
        %4868 = vmatpush1.msra.mxu0 0.0
        %4869 = vmatprep.subr.mxu0 0.0
        %4870 = vmatpush1.msra.mxu0 %v4472
        %4871 = vmatprep.subr.mxu0 0.0
        %4872 = vmatpush2.msra.mxu0 0.0
        %4873 = vmatprep.subr.mxu0 0.0
        %4874 = vmatpush2.msra.mxu0 0.0
        %4875 = vmatprep.subr.mxu0 0.0
        %4876 = vmatpush2.msra.mxu0 0.0
        %4877 = vmatprep.subr.mxu0 0.0
        %4878 = vmatpush2.msra.mxu0 0.0
        %4879 = vmatprep.subr.mxu0 0.0
        %4880 = vmatpush2.msra.mxu0 0.0
        %4881 = vmatprep.subr.mxu0 0.0
        %4882 = vmatpush2.msra.mxu0 0.0
        %4883 = vmatprep.subr.mxu0 0.0
        %4884 = vmatpush2.msra.mxu0 0.0
        %4885 = vmatprep.subr.mxu0 0.0
        %4886 = vmatpush2.msra.mxu0 0.0
        %4887 = vmatprep.subr.mxu0 0.0
        %4888 = vmatpush2.msra.mxu0 0.0
        %4889 = vmatprep.subr.mxu0 0.0
        %4890 = vmatpush2.msra.mxu0 0.0
        %4891 = vmatprep.subr.mxu0 0.0
        %4892 = vmatpush2.msra.mxu0 0.0
        %4893 = vmatprep.subr.mxu0 0.0
        %4894 = vmatpush2.msra.mxu0 0.0
        %4895 = vmatprep.subr.mxu0 0.0
        %4896 = vmatpush2.msra.mxu0 0.0
        %4897 = vmatprep.subr.mxu0 0.0
        %4898 = vmatpush2.msra.mxu0 0.0
        %4899 = vmatprep.subr.mxu0 0.0
        %4900 = vmatpush2.msra.mxu0 0.0
        %4901 = vmatprep.subr.mxu0 0.0
        %4902 = vmatpush2.msra.mxu0 0.0
        %4903 = vmatprep.mubr.f32.mxu0 0.0
        %4904 = vmatmul.mubr.f32.gmra.mxu0 %v4837
        %v4905 = vpop.f32.mrf.mxu0
        %v4906 = vadd.f32 0.0, %v4905
        %v4907 = vpop.f32.mrf.mxu0
        %4908 = vdwg.mxu0
        %v4910 = vsel %vm251, %v4464, 0
        %4912 = vmatprep.subr.mxu0 0.0
        %4913 = vmatpush1.msra.mxu0 0.0
        %4914 = vmatprep.subr.mxu0 0.0
        %4915 = vmatpush1.msra.mxu0 0.0
        %4916 = vmatprep.subr.mxu0 0.0
        %4917 = vmatpush1.msra.mxu0 0.0
        %4918 = vmatprep.subr.mxu0 0.0
        %4919 = vmatpush1.msra.mxu0 0.0
        %4920 = vmatprep.subr.mxu0 0.0
        %4921 = vmatpush1.msra.mxu0 0.0
        %4922 = vmatprep.subr.mxu0 0.0
        %4923 = vmatpush1.msra.mxu0 0.0
        %4924 = vmatprep.subr.mxu0 0.0
        %4925 = vmatpush1.msra.mxu0 0.0
        %4926 = vmatprep.subr.mxu0 0.0
        %4927 = vmatpush1.msra.mxu0 0.0
        %4928 = vmatprep.subr.mxu0 0.0
        %4929 = vmatpush1.msra.mxu0 0.0
        %4930 = vmatprep.subr.mxu0 0.0
        %4931 = vmatpush1.msra.mxu0 0.0
        %4932 = vmatprep.subr.mxu0 0.0
        %4933 = vmatpush1.msra.mxu0 0.0
        %4934 = vmatprep.subr.mxu0 0.0
        %4935 = vmatpush1.msra.mxu0 0.0
        %4936 = vmatprep.subr.mxu0 0.0
        %4937 = vmatpush1.msra.mxu0 0.0
        %4938 = vmatprep.subr.mxu0 0.0
        %4939 = vmatpush1.msra.mxu0 0.0
        %4940 = vmatprep.subr.mxu0 0.0
        %4941 = vmatpush1.msra.mxu0 0.0
        %4942 = vmatprep.subr.mxu0 0.0
        %4943 = vmatpush1.msra.mxu0 %v4472
        %4944 = vmatprep.subr.mxu0 0.0
        %4945 = vmatpush2.msra.mxu0 0.0
        %4946 = vmatprep.subr.mxu0 0.0
        %4947 = vmatpush2.msra.mxu0 0.0
        %4948 = vmatprep.subr.mxu0 0.0
        %4949 = vmatpush2.msra.mxu0 0.0
        %4950 = vmatprep.subr.mxu0 0.0
        %4951 = vmatpush2.msra.mxu0 0.0
        %4952 = vmatprep.subr.mxu0 0.0
        %4953 = vmatpush2.msra.mxu0 0.0
        %4954 = vmatprep.subr.mxu0 0.0
        %4955 = vmatpush2.msra.mxu0 0.0
        %4956 = vmatprep.subr.mxu0 0.0
        %4957 = vmatpush2.msra.mxu0 0.0
        %4958 = vmatprep.subr.mxu0 0.0
        %4959 = vmatpush2.msra.mxu0 0.0
        %4960 = vmatprep.subr.mxu0 0.0
        %4961 = vmatpush2.msra.mxu0 0.0
        %4962 = vmatprep.subr.mxu0 0.0
        %4963 = vmatpush2.msra.mxu0 0.0
        %4964 = vmatprep.subr.mxu0 0.0
        %4965 = vmatpush2.msra.mxu0 0.0
        %4966 = vmatprep.subr.mxu0 0.0
        %4967 = vmatpush2.msra.mxu0 0.0
        %4968 = vmatprep.subr.mxu0 0.0
        %4969 = vmatpush2.msra.mxu0 0.0
        %4970 = vmatprep.subr.mxu0 0.0
        %4971 = vmatpush2.msra.mxu0 0.0
        %4972 = vmatprep.subr.mxu0 0.0
        %4973 = vmatpush2.msra.mxu0 0.0
        %4974 = vmatprep.subr.mxu0 0.0
        %4975 = vmatpush2.msra.mxu0 0.0
        %4976 = vmatprep.mubr.f32.mxu0 0.0
        %4977 = vmatmul.mubr.f32.gmra.mxu0 %v4910
        %v4978 = vpop.f32.mrf.mxu0
        %v4979 = vadd.f32 0.0, %v4978
        %v4980 = vpop.f32.mrf.mxu0
        %4981 = vdwg.mxu0
        %v4983 = vsel %vm251, %v4465, 0
        %4985 = vmatprep.subr.mxu0 0.0
        %4986 = vmatpush1.msra.mxu0 0.0
        %4987 = vmatprep.subr.mxu0 0.0
        %4988 = vmatpush1.msra.mxu0 0.0
        %4989 = vmatprep.subr.mxu0 0.0
        %4990 = vmatpush1.msra.mxu0 0.0
        %4991 = vmatprep.subr.mxu0 0.0
        %4992 = vmatpush1.msra.mxu0 0.0
        %4993 = vmatprep.subr.mxu0 0.0
        %4994 = vmatpush1.msra.mxu0 0.0
        %4995 = vmatprep.subr.mxu0 0.0
        %4996 = vmatpush1.msra.mxu0 0.0
        %4997 = vmatprep.subr.mxu0 0.0
        %4998 = vmatpush1.msra.mxu0 0.0
        %4999 = vmatprep.subr.mxu0 0.0
        %5000 = vmatpush1.msra.mxu0 0.0
        %5001 = vmatprep.subr.mxu0 0.0
        %5002 = vmatpush1.msra.mxu0 0.0
        %5003 = vmatprep.subr.mxu0 0.0
        %5004 = vmatpush1.msra.mxu0 0.0
        %5005 = vmatprep.subr.mxu0 0.0
        %5006 = vmatpush1.msra.mxu0 0.0
        %5007 = vmatprep.subr.mxu0 0.0
        %5008 = vmatpush1.msra.mxu0 0.0
        %5009 = vmatprep.subr.mxu0 0.0
        %5010 = vmatpush1.msra.mxu0 0.0
        %5011 = vmatprep.subr.mxu0 0.0
        %5012 = vmatpush1.msra.mxu0 0.0
        %5013 = vmatprep.subr.mxu0 0.0
        %5014 = vmatpush1.msra.mxu0 0.0
        %5015 = vmatprep.subr.mxu0 0.0
        %5016 = vmatpush1.msra.mxu0 %v4472
        %5017 = vmatprep.subr.mxu0 0.0
        %5018 = vmatpush2.msra.mxu0 0.0
        %5019 = vmatprep.subr.mxu0 0.0
        %5020 = vmatpush2.msra.mxu0 0.0
        %5021 = vmatprep.subr.mxu0 0.0
        %5022 = vmatpush2.msra.mxu0 0.0
        %5023 = vmatprep.subr.mxu0 0.0
        %5024 = vmatpush2.msra.mxu0 0.0
        %5025 = vmatprep.subr.mxu0 0.0
        %5026 = vmatpush2.msra.mxu0 0.0
        %5027 = vmatprep.subr.mxu0 0.0
        %5028 = vmatpush2.msra.mxu0 0.0
        %5029 = vmatprep.subr.mxu0 0.0
        %5030 = vmatpush2.msra.mxu0 0.0
        %5031 = vmatprep.subr.mxu0 0.0
        %5032 = vmatpush2.msra.mxu0 0.0
        %5033 = vmatprep.subr.mxu0 0.0
        %5034 = vmatpush2.msra.mxu0 0.0
        %5035 = vmatprep.subr.mxu0 0.0
        %5036 = vmatpush2.msra.mxu0 0.0
        %5037 = vmatprep.subr.mxu0 0.0
        %5038 = vmatpush2.msra.mxu0 0.0
        %5039 = vmatprep.subr.mxu0 0.0
        %5040 = vmatpush2.msra.mxu0 0.0
        %5041 = vmatprep.subr.mxu0 0.0
        %5042 = vmatpush2.msra.mxu0 0.0
        %5043 = vmatprep.subr.mxu0 0.0
        %5044 = vmatpush2.msra.mxu0 0.0
        %5045 = vmatprep.subr.mxu0 0.0
        %5046 = vmatpush2.msra.mxu0 0.0
        %5047 = vmatprep.subr.mxu0 0.0
        %5048 = vmatpush2.msra.mxu0 0.0
        %5049 = vmatprep.mubr.f32.mxu0 0.0
        %5050 = vmatmul.mubr.f32.gmra.mxu0 %v4983
        %v5051 = vpop.f32.mrf.mxu0
        %v5052 = vadd.f32 0.0, %v5051
        %v5053 = vpop.f32.mrf.mxu0
        %5054 = vdwg.mxu0
        %v5055 = vadd.f32 %v4449, %v4541
        %v5056 = vadd.f32 %v4450, %v4614
        %v5057 = vadd.f32 %v4451, %v4687
        %v5058 = vadd.f32 %v4452, %v4760
        %v5059 = vadd.f32 %v4453, %v4833
        %v5060 = vadd.f32 %v4454, %v4906
        %v5061 = vadd.f32 %v4455, %v4979
        %v5062 = vadd.f32 %v4456, %v5052
        %s5063 = scalar_lea.vmem %s222, 296
        %v5064 = vld [vmem:[%s5063] sm:$0xff]
        %v5065 = vld [vmem:[%s5063 + $0x8] sm:$0xff]
        %v5066 = vld [vmem:[%s5063 + $0x10] sm:$0xff]
        %v5067 = vld [vmem:[%s5063 + $0x18] sm:$0xff]
        %v5068 = vld [vmem:[%s5063 + $0x20] sm:$0xff]
        %v5069 = vld [vmem:[%s5063 + $0x28] sm:$0xff]
        %v5070 = vld [vmem:[%s5063 + $0x30] sm:$0xff]
        %v5071 = vld [vmem:[%s5063 + $0x38] sm:$0xff]
        %s5072 = scalar_lea.vmem %s227, 32
        %v5073 = vld [vmem:[%s5072] sm:$0xf]
        %v5075 = vsel %vm251, %v5064, 0
        %v5078 = vsel %vm255, %v5073, 0
        %5080 = vmatprep.subr.mxu0 0.0
        %5081 = vmatpush1.msra.mxu0 0.0
        %5082 = vmatprep.subr.mxu0 0.0
        %5083 = vmatpush1.msra.mxu0 0.0
        %5084 = vmatprep.subr.mxu0 0.0
        %5085 = vmatpush1.msra.mxu0 0.0
        %5086 = vmatprep.subr.mxu0 0.0
        %5087 = vmatpush1.msra.mxu0 0.0
        %5088 = vmatprep.subr.mxu0 0.0
        %5089 = vmatpush1.msra.mxu0 0.0
        %5090 = vmatprep.subr.mxu0 0.0
        %5091 = vmatpush1.msra.mxu0 0.0
        %5092 = vmatprep.subr.mxu0 0.0
        %5093 = vmatpush1.msra.mxu0 0.0
        %5094 = vmatprep.subr.mxu0 0.0
        %5095 = vmatpush1.msra.mxu0 0.0
        %5096 = vmatprep.subr.mxu0 0.0
        %5097 = vmatpush1.msra.mxu0 0.0
        %5098 = vmatprep.subr.mxu0 0.0
        %5099 = vmatpush1.msra.mxu0 0.0
        %5100 = vmatprep.subr.mxu0 0.0
        %5101 = vmatpush1.msra.mxu0 0.0
        %5102 = vmatprep.subr.mxu0 0.0
        %5103 = vmatpush1.msra.mxu0 0.0
        %5104 = vmatprep.subr.mxu0 0.0
        %5105 = vmatpush1.msra.mxu0 0.0
        %5106 = vmatprep.subr.mxu0 0.0
        %5107 = vmatpush1.msra.mxu0 0.0
        %5108 = vmatprep.subr.mxu0 0.0
        %5109 = vmatpush1.msra.mxu0 0.0
        %5110 = vmatprep.subr.mxu0 0.0
        %5111 = vmatpush1.msra.mxu0 %v5078
        %5112 = vmatprep.subr.mxu0 0.0
        %5113 = vmatpush2.msra.mxu0 0.0
        %5114 = vmatprep.subr.mxu0 0.0
        %5115 = vmatpush2.msra.mxu0 0.0
        %5116 = vmatprep.subr.mxu0 0.0
        %5117 = vmatpush2.msra.mxu0 0.0
        %5118 = vmatprep.subr.mxu0 0.0
        %5119 = vmatpush2.msra.mxu0 0.0
        %5120 = vmatprep.subr.mxu0 0.0
        %5121 = vmatpush2.msra.mxu0 0.0
        %5122 = vmatprep.subr.mxu0 0.0
        %5123 = vmatpush2.msra.mxu0 0.0
        %5124 = vmatprep.subr.mxu0 0.0
        %5125 = vmatpush2.msra.mxu0 0.0
        %5126 = vmatprep.subr.mxu0 0.0
        %5127 = vmatpush2.msra.mxu0 0.0
        %5128 = vmatprep.subr.mxu0 0.0
        %5129 = vmatpush2.msra.mxu0 0.0
        %5130 = vmatprep.subr.mxu0 0.0
        %5131 = vmatpush2.msra.mxu0 0.0
        %5132 = vmatprep.subr.mxu0 0.0
        %5133 = vmatpush2.msra.mxu0 0.0
        %5134 = vmatprep.subr.mxu0 0.0
        %5135 = vmatpush2.msra.mxu0 0.0
        %5136 = vmatprep.subr.mxu0 0.0
        %5137 = vmatpush2.msra.mxu0 0.0
        %5138 = vmatprep.subr.mxu0 0.0
        %5139 = vmatpush2.msra.mxu0 0.0
        %5140 = vmatprep.subr.mxu0 0.0
        %5141 = vmatpush2.msra.mxu0 0.0
        %5142 = vmatprep.subr.mxu0 0.0
        %5143 = vmatpush2.msra.mxu0 0.0
        %5144 = vmatprep.mubr.f32.mxu0 0.0
        %5145 = vmatmul.mubr.f32.gmra.mxu0 %v5075
        %v5146 = vpop.f32.mrf.mxu0
        %v5147 = vadd.f32 0.0, %v5146
        %v5148 = vpop.f32.mrf.mxu0
        %5149 = vdwg.mxu0
        %v5151 = vsel %vm251, %v5065, 0
        %5153 = vmatprep.subr.mxu0 0.0
        %5154 = vmatpush1.msra.mxu0 0.0
        %5155 = vmatprep.subr.mxu0 0.0
        %5156 = vmatpush1.msra.mxu0 0.0
        %5157 = vmatprep.subr.mxu0 0.0
        %5158 = vmatpush1.msra.mxu0 0.0
        %5159 = vmatprep.subr.mxu0 0.0
        %5160 = vmatpush1.msra.mxu0 0.0
        %5161 = vmatprep.subr.mxu0 0.0
        %5162 = vmatpush1.msra.mxu0 0.0
        %5163 = vmatprep.subr.mxu0 0.0
        %5164 = vmatpush1.msra.mxu0 0.0
        %5165 = vmatprep.subr.mxu0 0.0
        %5166 = vmatpush1.msra.mxu0 0.0
        %5167 = vmatprep.subr.mxu0 0.0
        %5168 = vmatpush1.msra.mxu0 0.0
        %5169 = vmatprep.subr.mxu0 0.0
        %5170 = vmatpush1.msra.mxu0 0.0
        %5171 = vmatprep.subr.mxu0 0.0
        %5172 = vmatpush1.msra.mxu0 0.0
        %5173 = vmatprep.subr.mxu0 0.0
        %5174 = vmatpush1.msra.mxu0 0.0
        %5175 = vmatprep.subr.mxu0 0.0
        %5176 = vmatpush1.msra.mxu0 0.0
        %5177 = vmatprep.subr.mxu0 0.0
        %5178 = vmatpush1.msra.mxu0 0.0
        %5179 = vmatprep.subr.mxu0 0.0
        %5180 = vmatpush1.msra.mxu0 0.0
        %5181 = vmatprep.subr.mxu0 0.0
        %5182 = vmatpush1.msra.mxu0 0.0
        %5183 = vmatprep.subr.mxu0 0.0
        %5184 = vmatpush1.msra.mxu0 %v5078
        %5185 = vmatprep.subr.mxu0 0.0
        %5186 = vmatpush2.msra.mxu0 0.0
        %5187 = vmatprep.subr.mxu0 0.0
        %5188 = vmatpush2.msra.mxu0 0.0
        %5189 = vmatprep.subr.mxu0 0.0
        %5190 = vmatpush2.msra.mxu0 0.0
        %5191 = vmatprep.subr.mxu0 0.0
        %5192 = vmatpush2.msra.mxu0 0.0
        %5193 = vmatprep.subr.mxu0 0.0
        %5194 = vmatpush2.msra.mxu0 0.0
        %5195 = vmatprep.subr.mxu0 0.0
        %5196 = vmatpush2.msra.mxu0 0.0
        %5197 = vmatprep.subr.mxu0 0.0
        %5198 = vmatpush2.msra.mxu0 0.0
        %5199 = vmatprep.subr.mxu0 0.0
        %5200 = vmatpush2.msra.mxu0 0.0
        %5201 = vmatprep.subr.mxu0 0.0
        %5202 = vmatpush2.msra.mxu0 0.0
        %5203 = vmatprep.subr.mxu0 0.0
        %5204 = vmatpush2.msra.mxu0 0.0
        %5205 = vmatprep.subr.mxu0 0.0
        %5206 = vmatpush2.msra.mxu0 0.0
        %5207 = vmatprep.subr.mxu0 0.0
        %5208 = vmatpush2.msra.mxu0 0.0
        %5209 = vmatprep.subr.mxu0 0.0
        %5210 = vmatpush2.msra.mxu0 0.0
        %5211 = vmatprep.subr.mxu0 0.0
        %5212 = vmatpush2.msra.mxu0 0.0
        %5213 = vmatprep.subr.mxu0 0.0
        %5214 = vmatpush2.msra.mxu0 0.0
        %5215 = vmatprep.subr.mxu0 0.0
        %5216 = vmatpush2.msra.mxu0 0.0
        %5217 = vmatprep.mubr.f32.mxu0 0.0
        %5218 = vmatmul.mubr.f32.gmra.mxu0 %v5151
        %v5219 = vpop.f32.mrf.mxu0
        %v5220 = vadd.f32 0.0, %v5219
        %v5221 = vpop.f32.mrf.mxu0
        %5222 = vdwg.mxu0
        %v5224 = vsel %vm251, %v5066, 0
        %5226 = vmatprep.subr.mxu0 0.0
        %5227 = vmatpush1.msra.mxu0 0.0
        %5228 = vmatprep.subr.mxu0 0.0
        %5229 = vmatpush1.msra.mxu0 0.0
        %5230 = vmatprep.subr.mxu0 0.0
        %5231 = vmatpush1.msra.mxu0 0.0
        %5232 = vmatprep.subr.mxu0 0.0
        %5233 = vmatpush1.msra.mxu0 0.0
        %5234 = vmatprep.subr.mxu0 0.0
        %5235 = vmatpush1.msra.mxu0 0.0
        %5236 = vmatprep.subr.mxu0 0.0
        %5237 = vmatpush1.msra.mxu0 0.0
        %5238 = vmatprep.subr.mxu0 0.0
        %5239 = vmatpush1.msra.mxu0 0.0
        %5240 = vmatprep.subr.mxu0 0.0
        %5241 = vmatpush1.msra.mxu0 0.0
        %5242 = vmatprep.subr.mxu0 0.0
        %5243 = vmatpush1.msra.mxu0 0.0
        %5244 = vmatprep.subr.mxu0 0.0
        %5245 = vmatpush1.msra.mxu0 0.0
        %5246 = vmatprep.subr.mxu0 0.0
        %5247 = vmatpush1.msra.mxu0 0.0
        %5248 = vmatprep.subr.mxu0 0.0
        %5249 = vmatpush1.msra.mxu0 0.0
        %5250 = vmatprep.subr.mxu0 0.0
        %5251 = vmatpush1.msra.mxu0 0.0
        %5252 = vmatprep.subr.mxu0 0.0
        %5253 = vmatpush1.msra.mxu0 0.0
        %5254 = vmatprep.subr.mxu0 0.0
        %5255 = vmatpush1.msra.mxu0 0.0
        %5256 = vmatprep.subr.mxu0 0.0
        %5257 = vmatpush1.msra.mxu0 %v5078
        %5258 = vmatprep.subr.mxu0 0.0
        %5259 = vmatpush2.msra.mxu0 0.0
        %5260 = vmatprep.subr.mxu0 0.0
        %5261 = vmatpush2.msra.mxu0 0.0
        %5262 = vmatprep.subr.mxu0 0.0
        %5263 = vmatpush2.msra.mxu0 0.0
        %5264 = vmatprep.subr.mxu0 0.0
        %5265 = vmatpush2.msra.mxu0 0.0
        %5266 = vmatprep.subr.mxu0 0.0
        %5267 = vmatpush2.msra.mxu0 0.0
        %5268 = vmatprep.subr.mxu0 0.0
        %5269 = vmatpush2.msra.mxu0 0.0
        %5270 = vmatprep.subr.mxu0 0.0
        %5271 = vmatpush2.msra.mxu0 0.0
        %5272 = vmatprep.subr.mxu0 0.0
        %5273 = vmatpush2.msra.mxu0 0.0
        %5274 = vmatprep.subr.mxu0 0.0
        %5275 = vmatpush2.msra.mxu0 0.0
        %5276 = vmatprep.subr.mxu0 0.0
        %5277 = vmatpush2.msra.mxu0 0.0
        %5278 = vmatprep.subr.mxu0 0.0
        %5279 = vmatpush2.msra.mxu0 0.0
        %5280 = vmatprep.subr.mxu0 0.0
        %5281 = vmatpush2.msra.mxu0 0.0
        %5282 = vmatprep.subr.mxu0 0.0
        %5283 = vmatpush2.msra.mxu0 0.0
        %5284 = vmatprep.subr.mxu0 0.0
        %5285 = vmatpush2.msra.mxu0 0.0
        %5286 = vmatprep.subr.mxu0 0.0
        %5287 = vmatpush2.msra.mxu0 0.0
        %5288 = vmatprep.subr.mxu0 0.0
        %5289 = vmatpush2.msra.mxu0 0.0
        %5290 = vmatprep.mubr.f32.mxu0 0.0
        %5291 = vmatmul.mubr.f32.gmra.mxu0 %v5224
        %v5292 = vpop.f32.mrf.mxu0
        %v5293 = vadd.f32 0.0, %v5292
        %v5294 = vpop.f32.mrf.mxu0
        %5295 = vdwg.mxu0
        %v5297 = vsel %vm251, %v5067, 0
        %5299 = vmatprep.subr.mxu0 0.0
        %5300 = vmatpush1.msra.mxu0 0.0
        %5301 = vmatprep.subr.mxu0 0.0
        %5302 = vmatpush1.msra.mxu0 0.0
        %5303 = vmatprep.subr.mxu0 0.0
        %5304 = vmatpush1.msra.mxu0 0.0
        %5305 = vmatprep.subr.mxu0 0.0
        %5306 = vmatpush1.msra.mxu0 0.0
        %5307 = vmatprep.subr.mxu0 0.0
        %5308 = vmatpush1.msra.mxu0 0.0
        %5309 = vmatprep.subr.mxu0 0.0
        %5310 = vmatpush1.msra.mxu0 0.0
        %5311 = vmatprep.subr.mxu0 0.0
        %5312 = vmatpush1.msra.mxu0 0.0
        %5313 = vmatprep.subr.mxu0 0.0
        %5314 = vmatpush1.msra.mxu0 0.0
        %5315 = vmatprep.subr.mxu0 0.0
        %5316 = vmatpush1.msra.mxu0 0.0
        %5317 = vmatprep.subr.mxu0 0.0
        %5318 = vmatpush1.msra.mxu0 0.0
        %5319 = vmatprep.subr.mxu0 0.0
        %5320 = vmatpush1.msra.mxu0 0.0
        %5321 = vmatprep.subr.mxu0 0.0
        %5322 = vmatpush1.msra.mxu0 0.0
        %5323 = vmatprep.subr.mxu0 0.0
        %5324 = vmatpush1.msra.mxu0 0.0
        %5325 = vmatprep.subr.mxu0 0.0
        %5326 = vmatpush1.msra.mxu0 0.0
        %5327 = vmatprep.subr.mxu0 0.0
        %5328 = vmatpush1.msra.mxu0 0.0
        %5329 = vmatprep.subr.mxu0 0.0
        %5330 = vmatpush1.msra.mxu0 %v5078
        %5331 = vmatprep.subr.mxu0 0.0
        %5332 = vmatpush2.msra.mxu0 0.0
        %5333 = vmatprep.subr.mxu0 0.0
        %5334 = vmatpush2.msra.mxu0 0.0
        %5335 = vmatprep.subr.mxu0 0.0
        %5336 = vmatpush2.msra.mxu0 0.0
        %5337 = vmatprep.subr.mxu0 0.0
        %5338 = vmatpush2.msra.mxu0 0.0
        %5339 = vmatprep.subr.mxu0 0.0
        %5340 = vmatpush2.msra.mxu0 0.0
        %5341 = vmatprep.subr.mxu0 0.0
        %5342 = vmatpush2.msra.mxu0 0.0
        %5343 = vmatprep.subr.mxu0 0.0
        %5344 = vmatpush2.msra.mxu0 0.0
        %5345 = vmatprep.subr.mxu0 0.0
        %5346 = vmatpush2.msra.mxu0 0.0
        %5347 = vmatprep.subr.mxu0 0.0
        %5348 = vmatpush2.msra.mxu0 0.0
        %5349 = vmatprep.subr.mxu0 0.0
        %5350 = vmatpush2.msra.mxu0 0.0
        %5351 = vmatprep.subr.mxu0 0.0
        %5352 = vmatpush2.msra.mxu0 0.0
        %5353 = vmatprep.subr.mxu0 0.0
        %5354 = vmatpush2.msra.mxu0 0.0
        %5355 = vmatprep.subr.mxu0 0.0
        %5356 = vmatpush2.msra.mxu0 0.0
        %5357 = vmatprep.subr.mxu0 0.0
        %5358 = vmatpush2.msra.mxu0 0.0
        %5359 = vmatprep.subr.mxu0 0.0
        %5360 = vmatpush2.msra.mxu0 0.0
        %5361 = vmatprep.subr.mxu0 0.0
        %5362 = vmatpush2.msra.mxu0 0.0
        %5363 = vmatprep.mubr.f32.mxu0 0.0
        %5364 = vmatmul.mubr.f32.gmra.mxu0 %v5297
        %v5365 = vpop.f32.mrf.mxu0
        %v5366 = vadd.f32 0.0, %v5365
        %v5367 = vpop.f32.mrf.mxu0
        %5368 = vdwg.mxu0
        %v5370 = vsel %vm251, %v5068, 0
        %5372 = vmatprep.subr.mxu0 0.0
        %5373 = vmatpush1.msra.mxu0 0.0
        %5374 = vmatprep.subr.mxu0 0.0
        %5375 = vmatpush1.msra.mxu0 0.0
        %5376 = vmatprep.subr.mxu0 0.0
        %5377 = vmatpush1.msra.mxu0 0.0
        %5378 = vmatprep.subr.mxu0 0.0
        %5379 = vmatpush1.msra.mxu0 0.0
        %5380 = vmatprep.subr.mxu0 0.0
        %5381 = vmatpush1.msra.mxu0 0.0
        %5382 = vmatprep.subr.mxu0 0.0
        %5383 = vmatpush1.msra.mxu0 0.0
        %5384 = vmatprep.subr.mxu0 0.0
        %5385 = vmatpush1.msra.mxu0 0.0
        %5386 = vmatprep.subr.mxu0 0.0
        %5387 = vmatpush1.msra.mxu0 0.0
        %5388 = vmatprep.subr.mxu0 0.0
        %5389 = vmatpush1.msra.mxu0 0.0
        %5390 = vmatprep.subr.mxu0 0.0
        %5391 = vmatpush1.msra.mxu0 0.0
        %5392 = vmatprep.subr.mxu0 0.0
        %5393 = vmatpush1.msra.mxu0 0.0
        %5394 = vmatprep.subr.mxu0 0.0
        %5395 = vmatpush1.msra.mxu0 0.0
        %5396 = vmatprep.subr.mxu0 0.0
        %5397 = vmatpush1.msra.mxu0 0.0
        %5398 = vmatprep.subr.mxu0 0.0
        %5399 = vmatpush1.msra.mxu0 0.0
        %5400 = vmatprep.subr.mxu0 0.0
        %5401 = vmatpush1.msra.mxu0 0.0
        %5402 = vmatprep.subr.mxu0 0.0
        %5403 = vmatpush1.msra.mxu0 %v5078
        %5404 = vmatprep.subr.mxu0 0.0
        %5405 = vmatpush2.msra.mxu0 0.0
        %5406 = vmatprep.subr.mxu0 0.0
        %5407 = vmatpush2.msra.mxu0 0.0
        %5408 = vmatprep.subr.mxu0 0.0
        %5409 = vmatpush2.msra.mxu0 0.0
        %5410 = vmatprep.subr.mxu0 0.0
        %5411 = vmatpush2.msra.mxu0 0.0
        %5412 = vmatprep.subr.mxu0 0.0
        %5413 = vmatpush2.msra.mxu0 0.0
        %5414 = vmatprep.subr.mxu0 0.0
        %5415 = vmatpush2.msra.mxu0 0.0
        %5416 = vmatprep.subr.mxu0 0.0
        %5417 = vmatpush2.msra.mxu0 0.0
        %5418 = vmatprep.subr.mxu0 0.0
        %5419 = vmatpush2.msra.mxu0 0.0
        %5420 = vmatprep.subr.mxu0 0.0
        %5421 = vmatpush2.msra.mxu0 0.0
        %5422 = vmatprep.subr.mxu0 0.0
        %5423 = vmatpush2.msra.mxu0 0.0
        %5424 = vmatprep.subr.mxu0 0.0
        %5425 = vmatpush2.msra.mxu0 0.0
        %5426 = vmatprep.subr.mxu0 0.0
        %5427 = vmatpush2.msra.mxu0 0.0
        %5428 = vmatprep.subr.mxu0 0.0
        %5429 = vmatpush2.msra.mxu0 0.0
        %5430 = vmatprep.subr.mxu0 0.0
        %5431 = vmatpush2.msra.mxu0 0.0
        %5432 = vmatprep.subr.mxu0 0.0
        %5433 = vmatpush2.msra.mxu0 0.0
        %5434 = vmatprep.subr.mxu0 0.0
        %5435 = vmatpush2.msra.mxu0 0.0
        %5436 = vmatprep.mubr.f32.mxu0 0.0
        %5437 = vmatmul.mubr.f32.gmra.mxu0 %v5370
        %v5438 = vpop.f32.mrf.mxu0
        %v5439 = vadd.f32 0.0, %v5438
        %v5440 = vpop.f32.mrf.mxu0
        %5441 = vdwg.mxu0
        %v5443 = vsel %vm251, %v5069, 0
        %5445 = vmatprep.subr.mxu0 0.0
        %5446 = vmatpush1.msra.mxu0 0.0
        %5447 = vmatprep.subr.mxu0 0.0
        %5448 = vmatpush1.msra.mxu0 0.0
        %5449 = vmatprep.subr.mxu0 0.0
        %5450 = vmatpush1.msra.mxu0 0.0
        %5451 = vmatprep.subr.mxu0 0.0
        %5452 = vmatpush1.msra.mxu0 0.0
        %5453 = vmatprep.subr.mxu0 0.0
        %5454 = vmatpush1.msra.mxu0 0.0
        %5455 = vmatprep.subr.mxu0 0.0
        %5456 = vmatpush1.msra.mxu0 0.0
        %5457 = vmatprep.subr.mxu0 0.0
        %5458 = vmatpush1.msra.mxu0 0.0
        %5459 = vmatprep.subr.mxu0 0.0
        %5460 = vmatpush1.msra.mxu0 0.0
        %5461 = vmatprep.subr.mxu0 0.0
        %5462 = vmatpush1.msra.mxu0 0.0
        %5463 = vmatprep.subr.mxu0 0.0
        %5464 = vmatpush1.msra.mxu0 0.0
        %5465 = vmatprep.subr.mxu0 0.0
        %5466 = vmatpush1.msra.mxu0 0.0
        %5467 = vmatprep.subr.mxu0 0.0
        %5468 = vmatpush1.msra.mxu0 0.0
        %5469 = vmatprep.subr.mxu0 0.0
        %5470 = vmatpush1.msra.mxu0 0.0
        %5471 = vmatprep.subr.mxu0 0.0
        %5472 = vmatpush1.msra.mxu0 0.0
        %5473 = vmatprep.subr.mxu0 0.0
        %5474 = vmatpush1.msra.mxu0 0.0
        %5475 = vmatprep.subr.mxu0 0.0
        %5476 = vmatpush1.msra.mxu0 %v5078
        %5477 = vmatprep.subr.mxu0 0.0
        %5478 = vmatpush2.msra.mxu0 0.0
        %5479 = vmatprep.subr.mxu0 0.0
        %5480 = vmatpush2.msra.mxu0 0.0
        %5481 = vmatprep.subr.mxu0 0.0
        %5482 = vmatpush2.msra.mxu0 0.0
        %5483 = vmatprep.subr.mxu0 0.0
        %5484 = vmatpush2.msra.mxu0 0.0
        %5485 = vmatprep.subr.mxu0 0.0
        %5486 = vmatpush2.msra.mxu0 0.0
        %5487 = vmatprep.subr.mxu0 0.0
        %5488 = vmatpush2.msra.mxu0 0.0
        %5489 = vmatprep.subr.mxu0 0.0
        %5490 = vmatpush2.msra.mxu0 0.0
        %5491 = vmatprep.subr.mxu0 0.0
        %5492 = vmatpush2.msra.mxu0 0.0
        %5493 = vmatprep.subr.mxu0 0.0
        %5494 = vmatpush2.msra.mxu0 0.0
        %5495 = vmatprep.subr.mxu0 0.0
        %5496 = vmatpush2.msra.mxu0 0.0
        %5497 = vmatprep.subr.mxu0 0.0
        %5498 = vmatpush2.msra.mxu0 0.0
        %5499 = vmatprep.subr.mxu0 0.0
        %5500 = vmatpush2.msra.mxu0 0.0
        %5501 = vmatprep.subr.mxu0 0.0
        %5502 = vmatpush2.msra.mxu0 0.0
        %5503 = vmatprep.subr.mxu0 0.0
        %5504 = vmatpush2.msra.mxu0 0.0
        %5505 = vmatprep.subr.mxu0 0.0
        %5506 = vmatpush2.msra.mxu0 0.0
        %5507 = vmatprep.subr.mxu0 0.0
        %5508 = vmatpush2.msra.mxu0 0.0
        %5509 = vmatprep.mubr.f32.mxu0 0.0
        %5510 = vmatmul.mubr.f32.gmra.mxu0 %v5443
        %v5511 = vpop.f32.mrf.mxu0
        %v5512 = vadd.f32 0.0, %v5511
        %v5513 = vpop.f32.mrf.mxu0
        %5514 = vdwg.mxu0
        %v5516 = vsel %vm251, %v5070, 0
        %5518 = vmatprep.subr.mxu0 0.0
        %5519 = vmatpush1.msra.mxu0 0.0
        %5520 = vmatprep.subr.mxu0 0.0
        %5521 = vmatpush1.msra.mxu0 0.0
        %5522 = vmatprep.subr.mxu0 0.0
        %5523 = vmatpush1.msra.mxu0 0.0
        %5524 = vmatprep.subr.mxu0 0.0
        %5525 = vmatpush1.msra.mxu0 0.0
        %5526 = vmatprep.subr.mxu0 0.0
        %5527 = vmatpush1.msra.mxu0 0.0
        %5528 = vmatprep.subr.mxu0 0.0
        %5529 = vmatpush1.msra.mxu0 0.0
        %5530 = vmatprep.subr.mxu0 0.0
        %5531 = vmatpush1.msra.mxu0 0.0
        %5532 = vmatprep.subr.mxu0 0.0
        %5533 = vmatpush1.msra.mxu0 0.0
        %5534 = vmatprep.subr.mxu0 0.0
        %5535 = vmatpush1.msra.mxu0 0.0
        %5536 = vmatprep.subr.mxu0 0.0
        %5537 = vmatpush1.msra.mxu0 0.0
        %5538 = vmatprep.subr.mxu0 0.0
        %5539 = vmatpush1.msra.mxu0 0.0
        %5540 = vmatprep.subr.mxu0 0.0
        %5541 = vmatpush1.msra.mxu0 0.0
        %5542 = vmatprep.subr.mxu0 0.0
        %5543 = vmatpush1.msra.mxu0 0.0
        %5544 = vmatprep.subr.mxu0 0.0
        %5545 = vmatpush1.msra.mxu0 0.0
        %5546 = vmatprep.subr.mxu0 0.0
        %5547 = vmatpush1.msra.mxu0 0.0
        %5548 = vmatprep.subr.mxu0 0.0
        %5549 = vmatpush1.msra.mxu0 %v5078
        %5550 = vmatprep.subr.mxu0 0.0
        %5551 = vmatpush2.msra.mxu0 0.0
        %5552 = vmatprep.subr.mxu0 0.0
        %5553 = vmatpush2.msra.mxu0 0.0
        %5554 = vmatprep.subr.mxu0 0.0
        %5555 = vmatpush2.msra.mxu0 0.0
        %5556 = vmatprep.subr.mxu0 0.0
        %5557 = vmatpush2.msra.mxu0 0.0
        %5558 = vmatprep.subr.mxu0 0.0
        %5559 = vmatpush2.msra.mxu0 0.0
        %5560 = vmatprep.subr.mxu0 0.0
        %5561 = vmatpush2.msra.mxu0 0.0
        %5562 = vmatprep.subr.mxu0 0.0
        %5563 = vmatpush2.msra.mxu0 0.0
        %5564 = vmatprep.subr.mxu0 0.0
        %5565 = vmatpush2.msra.mxu0 0.0
        %5566 = vmatprep.subr.mxu0 0.0
        %5567 = vmatpush2.msra.mxu0 0.0
        %5568 = vmatprep.subr.mxu0 0.0
        %5569 = vmatpush2.msra.mxu0 0.0
        %5570 = vmatprep.subr.mxu0 0.0
        %5571 = vmatpush2.msra.mxu0 0.0
        %5572 = vmatprep.subr.mxu0 0.0
        %5573 = vmatpush2.msra.mxu0 0.0
        %5574 = vmatprep.subr.mxu0 0.0
        %5575 = vmatpush2.msra.mxu0 0.0
        %5576 = vmatprep.subr.mxu0 0.0
        %5577 = vmatpush2.msra.mxu0 0.0
        %5578 = vmatprep.subr.mxu0 0.0
        %5579 = vmatpush2.msra.mxu0 0.0
        %5580 = vmatprep.subr.mxu0 0.0
        %5581 = vmatpush2.msra.mxu0 0.0
        %5582 = vmatprep.mubr.f32.mxu0 0.0
        %5583 = vmatmul.mubr.f32.gmra.mxu0 %v5516
        %v5584 = vpop.f32.mrf.mxu0
        %v5585 = vadd.f32 0.0, %v5584
        %v5586 = vpop.f32.mrf.mxu0
        %5587 = vdwg.mxu0
        %v5589 = vsel %vm251, %v5071, 0
        %5591 = vmatprep.subr.mxu0 0.0
        %5592 = vmatpush1.msra.mxu0 0.0
        %5593 = vmatprep.subr.mxu0 0.0
        %5594 = vmatpush1.msra.mxu0 0.0
        %5595 = vmatprep.subr.mxu0 0.0
        %5596 = vmatpush1.msra.mxu0 0.0
        %5597 = vmatprep.subr.mxu0 0.0
        %5598 = vmatpush1.msra.mxu0 0.0
        %5599 = vmatprep.subr.mxu0 0.0
        %5600 = vmatpush1.msra.mxu0 0.0
        %5601 = vmatprep.subr.mxu0 0.0
        %5602 = vmatpush1.msra.mxu0 0.0
        %5603 = vmatprep.subr.mxu0 0.0
        %5604 = vmatpush1.msra.mxu0 0.0
        %5605 = vmatprep.subr.mxu0 0.0
        %5606 = vmatpush1.msra.mxu0 0.0
        %5607 = vmatprep.subr.mxu0 0.0
        %5608 = vmatpush1.msra.mxu0 0.0
        %5609 = vmatprep.subr.mxu0 0.0
        %5610 = vmatpush1.msra.mxu0 0.0
        %5611 = vmatprep.subr.mxu0 0.0
        %5612 = vmatpush1.msra.mxu0 0.0
        %5613 = vmatprep.subr.mxu0 0.0
        %5614 = vmatpush1.msra.mxu0 0.0
        %5615 = vmatprep.subr.mxu0 0.0
        %5616 = vmatpush1.msra.mxu0 0.0
        %5617 = vmatprep.subr.mxu0 0.0
        %5618 = vmatpush1.msra.mxu0 0.0
        %5619 = vmatprep.subr.mxu0 0.0
        %5620 = vmatpush1.msra.mxu0 0.0
        %5621 = vmatprep.subr.mxu0 0.0
        %5622 = vmatpush1.msra.mxu0 %v5078
        %5623 = vmatprep.subr.mxu0 0.0
        %5624 = vmatpush2.msra.mxu0 0.0
        %5625 = vmatprep.subr.mxu0 0.0
        %5626 = vmatpush2.msra.mxu0 0.0
        %5627 = vmatprep.subr.mxu0 0.0
        %5628 = vmatpush2.msra.mxu0 0.0
        %5629 = vmatprep.subr.mxu0 0.0
        %5630 = vmatpush2.msra.mxu0 0.0
        %5631 = vmatprep.subr.mxu0 0.0
        %5632 = vmatpush2.msra.mxu0 0.0
        %5633 = vmatprep.subr.mxu0 0.0
        %5634 = vmatpush2.msra.mxu0 0.0
        %5635 = vmatprep.subr.mxu0 0.0
        %5636 = vmatpush2.msra.mxu0 0.0
        %5637 = vmatprep.subr.mxu0 0.0
        %5638 = vmatpush2.msra.mxu0 0.0
        %5639 = vmatprep.subr.mxu0 0.0
        %5640 = vmatpush2.msra.mxu0 0.0
        %5641 = vmatprep.subr.mxu0 0.0
        %5642 = vmatpush2.msra.mxu0 0.0
        %5643 = vmatprep.subr.mxu0 0.0
        %5644 = vmatpush2.msra.mxu0 0.0
        %5645 = vmatprep.subr.mxu0 0.0
        %5646 = vmatpush2.msra.mxu0 0.0
        %5647 = vmatprep.subr.mxu0 0.0
        %5648 = vmatpush2.msra.mxu0 0.0
        %5649 = vmatprep.subr.mxu0 0.0
        %5650 = vmatpush2.msra.mxu0 0.0
        %5651 = vmatprep.subr.mxu0 0.0
        %5652 = vmatpush2.msra.mxu0 0.0
        %5653 = vmatprep.subr.mxu0 0.0
        %5654 = vmatpush2.msra.mxu0 0.0
        %5655 = vmatprep.mubr.f32.mxu0 0.0
        %5656 = vmatmul.mubr.f32.gmra.mxu0 %v5589
        %v5657 = vpop.f32.mrf.mxu0
        %v5658 = vadd.f32 0.0, %v5657
        %v5659 = vpop.f32.mrf.mxu0
        %5660 = vdwg.mxu0
        %v5661 = vadd.f32 %v5055, %v5147
        %v5662 = vadd.f32 %v5056, %v5220
        %v5663 = vadd.f32 %v5057, %v5293
        %v5664 = vadd.f32 %v5058, %v5366
        %v5665 = vadd.f32 %v5059, %v5439
        %v5666 = vadd.f32 %v5060, %v5512
        %v5667 = vadd.f32 %v5061, %v5585
        %v5668 = vadd.f32 %v5062, %v5658
        %v5669 = vld [vmem:[%s230] sm:$0x1]
        %v5671 = vlaneseq
        %v5672 = vshrl.u32 %v5671, 7
        %v5673 = vsub.s32 0, %v5672
        %v5674 = vrot.slane %v5669, %v5673
        %v5676 = vadd.f32 %v5661, %v5674
        %v5677 = vadd.f32 %v5662, %v5674
        %v5678 = vadd.f32 %v5663, %v5674
        %v5679 = vadd.f32 %v5664, %v5674
        %v5680 = vadd.f32 %v5665, %v5674
        %v5681 = vadd.f32 %v5666, %v5674
        %v5682 = vadd.f32 %v5667, %v5674
        %v5683 = vadd.f32 %v5668, %v5674
        %vm5684 = vcmask 64512
        %5685 = vst.msk [vmem:[%s213] sm:$0xff] %vm5684, %v5676
        %5686 = vst.msk [vmem:[%s213 + $0x8] sm:$0xff] %vm5684, %v5677
        %5687 = vst.msk [vmem:[%s213 + $0x10] sm:$0xff] %vm5684, %v5678
        %5688 = vst.msk [vmem:[%s213 + $0x18] sm:$0xff] %vm5684, %v5679
        %5689 = vst.msk [vmem:[%s213 + $0x20] sm:$0xff] %vm5684, %v5680
        %5690 = vst.msk [vmem:[%s213 + $0x28] sm:$0xff] %vm5684, %v5681
        %5691 = vst.msk [vmem:[%s213 + $0x30] sm:$0xff] %vm5684, %v5682
        %5692 = vst.msk [vmem:[%s213 + $0x38] sm:$0xff] %vm5684, %v5683
        %s5693 = sand.u32 %s119, 1
        %s5694 = scalar_lea.sflag [#allocation3], %s5693
        %s5695 = sand.u32 %s119, 1
        %s5696 = smul.addr %s5695, 64
        %s5697 = scalar_lea.vmem [#allocation2], %s5696
        // Predicated region
        $region33: #{conv2d_pallas_nhwc.1} parent=31 // pred_check
          %p5698 = pneg %p129
        $region34: #{conv2d_pallas_nhwc.1} parent=31 // pred_check_branch
          %5700 = sbr.rel (%p5698) target = $region36
        $region35: #{conv2d_pallas_nhwc.1} parent=31 // pred_region
          %s5702 = ssub.s32 1024, 1024
          %5703 = vsyncadd %s5694, %s5702
          %s5704 = smul.addr %s22, 8
          %s5705 = smul.addr %s21, 8
          %s5706 = sadd.s32 %s5704, %s5705
          %s5707 = smul.addr %s5706, 128
          %s5708 = scalar_lea.hbm %s3, %s5707
          %s5709 = sshll.u32 %s5697, 4
          %s5710 = int_to_ptr.vmem [resolvable:$true] %s5709
          %5715 = dma.vmem_to_hbm [thread:$0]  %s5710, 1024, %s5708, %s5694, 128, 128, 8
        $region36: #{conv2d_pallas_nhwc.1} parent=31 // pred_fallthru
          _
      $region32: #{conv2d_pallas_nhwc.1} parent=5 // pred_fallthru
        _
      %p5716 = scmp.le.s32.totalorder 2, %s12
      // Predicated region
      $region37: #{conv2d_pallas_nhwc.1} parent=5 // pred_check
        %p5717 = pneg %p5716
      $region38: #{conv2d_pallas_nhwc.1} parent=5 // pred_check_branch
        %5719 = sbr.rel (%p5717) target = $region40
      $region39: #{conv2d_pallas_nhwc.1} parent=5 // pred_region
        %s5720 = ssub.s32 %s12, 2
        // Predicated region
        $region41: #{conv2d_pallas_nhwc.1} parent=39 // pred_check
          %p5721 = pneg %p135
        $region42: #{conv2d_pallas_nhwc.1} parent=39 // pred_check_branch
          %5723 = sbr.rel (%p5721) target = $region44
        $region43: #{conv2d_pallas_nhwc.1} parent=39 // pred_region
          %s5724 = sand.u32 %s120, 1
          %s5725 = scalar_lea.sflag [#allocation3], %s5724
          %s5726 = sand.u32 %s120, 1
          %s5727 = smul.addr %s5726, 64
          %s5728 = scalar_lea.vmem [#allocation2], %s5727
          %5729 = dma.done %s5725, 1024
        $region44: #{conv2d_pallas_nhwc.1} parent=39 // pred_fallthru
          _
      $region40: #{conv2d_pallas_nhwc.1} parent=5 // pred_fallthru
        _
    $region6: #{conv2d_pallas_nhwc.1} parent=1 // loop_footer
      %s16 = sadd.s32 1, %s12
    $region7: #{conv2d_pallas_nhwc.1} parent=1 // loop_footer_branch
      %11 = sbr.rel target = $region3
    $region8: #{conv2d_pallas_nhwc.1} parent=1 // loop_exit
      _
    %5730 = vsyncpa [#allocation3], 1
    %s5731 = scalar_lea.sflag [#allocation3], 1
    %5732 = vsyncpa %s5731, 1

</llo_original>
